<compile_context>
chip_gen: v7x
topology: tpu7x:2x2x1
jax: 0.10.0
libtpu: 0.0.40
codegen_flags: <defaults>
</compile_context>

<pallas_src>
import jax
import jax.numpy as jnp
import numpy as np
from jax.experimental import pallas as pl
from jax.experimental.pallas import tpu as pltpu

NUM_DIFFUSIONS = 16                                    # LEGS: 16 steps -> 17 levels
NUM_LEVELS = NUM_DIFFUSIONS + 1
NUM_WAVELETS = 4
FENG = [(1, 0), (2, 0), (2, 1), (3, 0), (3, 1), (3, 2)]    # feng_filters() = [4,8,9,12,13,14]
NUM_SCATTER_CH = 1 + NUM_WAVELETS + len(FENG)          # 11
NUM_MOMENTS = 4
MXU_TARGET = 128                                       # pack graphs until bb*N ~ 128


def _round_up(x, m):
    return (x + m - 1) // m * m


# --------------------------------------------------------------------------- kernel
def tsnet_kernel(p_ref,        # [1, Nt, Nt]  block-diagonal lazy diffusion operator
                 xt_ref,       # [1, C, Nt]   transposed node features (nodes on lanes)
                 s1_ref,       # [4C, K1]     first-order wavelet selector
                 s2_ref,       # [6C, K2]     second-order (feng-filtered) selector
                 g_ref,        # [bb, Nt]     graph->node indicator
                 gt_ref,       # [Nt, bb]     node->graph pooling (transpose of above)
                 w_ref,        # [O, 44C]     folded head weight (lin3∘lin2∘lin1)^T
                 b_ref,        # [O, 1]       folded head bias^T
                 out_ref,      # [1, O, bb]
                 u1_ref,       # VMEM scratch [K1, Nt] first-order level stack
                 u2_ref):      # VMEM scratch [K2, Nt] second-order level stack
    P = p_ref[0]                               # [Nt, Nt]
    Xt = xt_ref[0]                             # [C, Nt]
    C, Nt = Xt.shape
    C2 = NUM_WAVELETS * C
    K1 = u1_ref.shape[0]
    K2 = u2_ref.shape[0]
    bb = g_ref.shape[0]
    inv_n = 1.0 / float(Nt // bb)

    # zero only the (<=7) sublane-padding tail rows of each level stack so the padded
    # selector matmuls see exact zeros (never stale VMEM).
    if K1 > NUM_LEVELS * C:
        u1_ref[pl.ds(NUM_LEVELS * C, K1 - NUM_LEVELS * C), :] = jnp.zeros(
            (K1 - NUM_LEVELS * C, Nt), jnp.float32)
    if K2 > NUM_LEVELS * C2:
        u2_ref[pl.ds(NUM_LEVELS * C2, K2 - NUM_LEVELS * C2), :] = jnp.zeros(
            (K2 - NUM_LEVELS * C2, Nt), jnp.float32)

    # ---- first order: 16 lazy-diffusion steps (P symmetric -> right-multiply) ----
    u = Xt
    u1_ref[pl.ds(0, C), :] = u
    for t in range(1, NUM_LEVELS):
        u = jnp.dot(u, P, preferred_element_type=jnp.float32)        # K = Nt
        u1_ref[pl.ds(t * C, C), :] = u
    # s1[j*C+c, :] = | sum_t wav[j,t] * (P^t x)[:, c] |   — one MXU matmul
    s1 = jnp.abs(jnp.dot(s1_ref[...], u1_ref[...],
                         preferred_element_type=jnp.float32))         # [4C, Nt]

    # ---- second order on |s1| (already channel-packed along sublanes) ----
    v = s1
    u2_ref[pl.ds(0, C2), :] = v
    for t in range(1, NUM_LEVELS):
        v = jnp.dot(v, P, preferred_element_type=jnp.float32)
        u2_ref[pl.ds(t * C2, C2), :] = v
    # feng-filtered second-order scattering — one MXU matmul
    s2 = jnp.abs(jnp.dot(s2_ref[...], u2_ref[...],
                         preferred_element_type=jnp.float32))         # [6C, Nt]

    # per-node scattering features, scatter-channel slow / node fast
    Ft = jnp.concatenate([Xt, s1, s2], axis=0)                        # [11C, Nt]

    # ---- per-graph moments over nodes via pooling matmuls (MXU) ----
    G = g_ref[...]                             # [bb, Nt]
    Gt = gt_ref[...]                           # [Nt, bb]
    meanT = jnp.dot(Ft, Gt, preferred_element_type=jnp.float32) * inv_n       # [11C, bb]
    devT = Ft - jnp.dot(meanT, G, preferred_element_type=jnp.float32)         # [11C, Nt]
    dev2 = devT * devT
    varT = jnp.dot(dev2, Gt, preferred_element_type=jnp.float32) * inv_n
    m3T = jnp.dot(dev2 * devT, Gt, preferred_element_type=jnp.float32) * inv_n
    m4T = jnp.dot(dev2 * dev2, Gt, preferred_element_type=jnp.float32) * inv_n

    skewT = m3T / (varT * jnp.sqrt(varT))
    skewT = jnp.where(skewT > 1e15, 0.0, skewT)
    skewT = jnp.where(skewT != skewT, 0.0, skewT)          # NaN -> 0
    kurtT = m4T / (varT * varT) - 3.0
    kurtT = jnp.where(kurtT > 1e15, -3.0, kurtT)
    kurtT = jnp.where(kurtT != kurtT, -3.0, kurtT)         # NaN -> -3

    hT = jnp.concatenate([meanT, varT, skewT, kurtT], axis=0)         # [44C, bb]

    # ---- head: LeakyReLU(0.01) -> folded (lin1∘lin2∘lin3), whole block at once ----
    hT = jnp.where(hT >= 0, hT, 0.01 * hT)
    z = jnp.dot(w_ref[...], hT, preferred_element_type=jnp.float32) + b_ref[...]
    out_ref[0] = z.astype(out_ref.dtype)                              # [O, bb]


# --------------------------------------------------------------------- host helpers
def lazy_diffusion_operator(adj):
    """P = 0.5 * (I + D^-1/2 (A + I) D^-1/2), per graph (gcn_norm with self loops)."""
    _, N, _ = adj.shape
    eye = jnp.eye(N, dtype=adj.dtype)
    a_hat = adj + eye
    deg = jnp.sum(a_hat, axis=-1)
    dinv = jnp.where(deg > 0, 1.0 / jnp.sqrt(deg), 0.0)
    a_norm = dinv[:, :, None] * a_hat * dinv[:, None, :]
    return 0.5 * (eye + a_norm)


def _wavelet_selectors(wav, C):
    """Block-structured selectors so the wavelet/feng combination is one matmul each.

    S1[j*C+c, t*C+c]             = wav[j, t]
    S2[p*C+c, t*(4C) + j_p*C+c]  = wav[k_p, t]   for (k_p, j_p) in FENG
    (columns padded with zeros up to the 8-aligned scratch height)."""
    C2 = NUM_WAVELETS * C
    K1 = _round_up(NUM_LEVELS * C, 8)
    K2 = _round_up(NUM_LEVELS * C2, 8)
    eye_c = jnp.eye(C, dtype=jnp.float32)
    S1 = jnp.kron(wav, eye_c)                                 # [4C, 17*C]
    S1 = jnp.pad(S1, ((0, 0), (0, K1 - NUM_LEVELS * C)))
    blocks = []
    for (k, j) in FENG:
        Ej = jnp.zeros((C, C2), jnp.float32).at[:, j * C:(j + 1) * C].set(eye_c)
        blocks.append(jnp.kron(wav[k:k + 1, :], Ej))          # [C, 17*C2]
    S2 = jnp.concatenate(blocks, axis=0)                      # [6C, 17*C2]
    S2 = jnp.pad(S2, ((0, 0), (0, K2 - NUM_LEVELS * C2)))
    return S1, S2


def make_params(key, in_channels, out_channels):
    scat_dim = NUM_SCATTER_CH * NUM_MOMENTS * in_channels    # Scatter.out_shape() = 11*4*C
    ks = jax.random.split(key, 6)

    def linear(kw, kb, fan_in, fan_out):
        bound = 1.0 / np.sqrt(fan_in)
        W = jax.random.uniform(kw, (fan_in, fan_out), jnp.float32, -bound, bound)
        b = jax.random.uniform(kb, (1, fan_out), jnp.float32, -bound, bound)
        return W, b

    w1, b1 = linear(ks[0], ks[1], scat_dim, out_channels)
    w2, b2 = linear(ks[2], ks[3], out_channels, out_channels)
    w3, b3 = linear(ks[4], ks[5], out_channels, out_channels)

    # LEGS dyadic wavelet selector (a learnable parameter; deterministic init here).
    wav = np.zeros((NUM_WAVELETS, NUM_DIFFUSIONS + 1), np.float32)
    for row, (i, j) in enumerate([(0, 1), (1, 3), (3, 7), (7, 15)]):
        wav[row, i], wav[row, j] = 1.0, -1.0
    return dict(wav=jnp.asarray(wav), w1=w1, b1=b1, w2=w2, b2=b2, w3=w3, b3=b3)


@jax.jit
def tsnet_forward(params, x, adj):
    B, N, C = x.shape
    O = params["w1"].shape[1]
    scat_dim = NUM_SCATTER_CH * NUM_MOMENTS * C

    # choose bb = largest divisor of B with bb*N <= MXU_TARGET (K ~ 128 is good on all gens)
    target = max(1, MXU_TARGET // N)
    bb = 1
    for d in range(1, min(B, target) + 1):
        if B % d == 0:
            bb = d
    nb = B // bb
    Nt = bb * N
    K1 = _round_up(NUM_LEVELS * C, 8)
    K2 = _round_up(NUM_LEVELS * NUM_WAVELETS * C, 8)

    x = x.astype(jnp.float32)
    adj = adj.astype(jnp.float32)

    # block-diagonal lazy diffusion operator per block of bb graphs
    P = lazy_diffusion_operator(adj)                                   # [B, N, N]
    Pbd = jnp.einsum("kgij,gh->kgihj",
                     P.reshape(nb, bb, N, N),
                     jnp.eye(bb, dtype=jnp.float32)).reshape(nb, Nt, Nt)

    # transposed, block-packed node features: [nb, C, bb*N]
    xt = jnp.swapaxes(x, 1, 2).reshape(nb, bb, C, N)
    xt = xt.transpose(0, 2, 1, 3).reshape(nb, C, Nt)

    # graph <-> node pooling matrices and wavelet/feng selectors (from learnable wav)
    g_mat = jnp.kron(jnp.eye(bb, dtype=jnp.float32), jnp.ones((1, N), jnp.float32))
    gt_mat = g_mat.T
    S1, S2 = _wavelet_selectors(params["wav"], C)

    # fold the 3 linear layers (no nonlinearity between them) into one affine map:
    #   out = h @ (w1 w2 w3) + (b1 w2 w3 + b2 w3 + b3)
    w_eff = params["w1"] @ params["w2"] @ params["w3"]                 # [44C, O]
    b_eff = (params["b1"] @ params["w2"] + params["b2"]) @ params["w3"] + params["b3"]
    wt = w_eff.T                                                       # [O, 44C]
    bt = b_eff.T                                                       # [O, 1]

    out_t = pl.pallas_call(
        tsnet_kernel,
        out_shape=jax.ShapeDtypeStruct((nb, O, bb), jnp.float32),
        grid_spec=pltpu.PrefetchScalarGridSpec(
            num_scalar_prefetch=0,
            grid=(nb,),
            in_specs=[
                pl.BlockSpec((1, Nt, Nt), lambda b: (b, 0, 0)),              # P block
                pl.BlockSpec((1, C, Nt), lambda b: (b, 0, 0)),               # x^T block
                pl.BlockSpec((NUM_WAVELETS * C, K1), lambda b: (0, 0)),      # S1
                pl.BlockSpec((len(FENG) * C, K2), lambda b: (0, 0)),         # S2
                pl.BlockSpec((bb, Nt), lambda b: (0, 0)),                    # G
                pl.BlockSpec((Nt, bb), lambda b: (0, 0)),                    # G^T
                pl.BlockSpec((O, scat_dim), lambda b: (0, 0)),               # folded W^T
                pl.BlockSpec((O, 1), lambda b: (0, 0)),                      # folded b^T
            ],
            out_specs=pl.BlockSpec((1, O, bb), lambda b: (b, 0, 0)),
            scratch_shapes=[
                pltpu.VMEM((K1, Nt), jnp.float32),
                pltpu.VMEM((K2, Nt), jnp.float32),
            ],
        ),
        compiler_params=pltpu.CompilerParams(dimension_semantics=("parallel",)),
    )(Pbd, xt, S1, S2, g_mat, gt_mat, wt, bt)

    out = out_t.transpose(0, 2, 1).reshape(B, O)        # [B, O], host-side relayout
    return out, params["wav"]                           # (x, sc) like TSNet.forward


# ------------------------------------------------------------------------- reference
def _moments(F):
    """F: [N, K] -> [1, 4*K] = [mean | var | skew | kurt] (torch scatter_moments)."""
    mean = jnp.mean(F, axis=0, keepdims=True)
    dev = F - mean
    var = jnp.mean(dev * dev, axis=0, keepdims=True)
    m3 = jnp.mean(dev * dev * dev, axis=0, keepdims=True)
    m4 = jnp.mean(dev * dev * dev * dev, axis=0, keepdims=True)
    skew = m3 / (var * jnp.sqrt(var))
    skew = jnp.where(skew > 1e15, 0.0, skew)
    skew = jnp.where(skew != skew, 0.0, skew)
    kurt = m4 / (var * var) - 3.0
    kurt = jnp.where(kurt > 1e15, -3.0, kurt)
    kurt = jnp.where(kurt != kurt, -3.0, kurt)
    return jnp.concatenate([mean, var, skew, kurt], axis=1)


def tsnet_reference(params, x, adj):
    """Pure-JAX mirror of the same math (dense-P formulation) for validation."""
    with jax.default_matmul_precision("highest"):
        P = lazy_diffusion_operator(adj.astype(jnp.float32))
        W = params["wav"]
        B, N, C = x.shape
        outs = []
        for b in range(B):
            Pb, Xb = P[b], x[b].astype(jnp.float32)
            levels = [Xb]
            for _ in range(NUM_DIFFUSIONS):
                levels.append(Pb @ levels[-1])
            U = jnp.stack(levels)                                     # [17,N,C]
            s1 = jnp.abs(jnp.einsum("jt,tnc->jnc", W, U))             # [4,N,C]
            v = jnp.concatenate([s1[j] for j in range(NUM_WAVELETS)], axis=1)
            lv2 = [v]
            for _ in range(NUM_DIFFUSIONS):
                lv2.append(Pb @ lv2[-1])
            U2 = jnp.stack(lv2)                                       # [17,N,4C]
            s2f = jnp.abs(jnp.einsum("kt,tnd->knd", W, U2))           # [4,N,4C]
            s2 = [s2f[k][:, j * C:(j + 1) * C] for (k, j) in FENG]
            F = jnp.concatenate([Xb] + [s1[j] for j in range(NUM_WAVELETS)] + s2, axis=1)
            m = _moments(F)
            h = jnp.where(m >= 0, m, 0.01 * m)
            h = h @ params["w1"] + params["b1"]
            h = h @ params["w2"] + params["b2"]
            h = h @ params["w3"] + params["b3"]
            outs.append(h)
        return jnp.concatenate(outs, axis=0)


if __name__ == "__main__":
    # 16 graphs x 16 nodes x 4 channels, 32 output channels
    # (8 graphs pack into one 128x128 block-diagonal operator -> grid of 2)
    B, N, C, O = 16, 16, 4, 32
    key = jax.random.PRNGKey(0)
    kx, ka, kp = jax.random.split(key, 3)

    x = jax.random.normal(kx, (B, N, C), jnp.float32)
    rand = (jax.random.uniform(ka, (B, N, N)) < 0.3).astype(jnp.float32)
    adj = jnp.triu(rand, k=1)
    adj = adj + jnp.transpose(adj, (0, 2, 1))        # symmetric, no self loops

    params = make_params(kp, C, O)

    out, sc = tsnet_forward(params, x, adj)
    out = jax.block_until_ready(out)

    ref = tsnet_reference(params, x, adj)
    np.testing.assert_allclose(np.asarray(out), np.asarray(ref), rtol=5e-2, atol=5e-2)
    assert out.shape == (B, O) and sc.shape == (NUM_WAVELETS, NUM_DIFFUSIONS + 1)

    print("KERNEL_OK")
</pallas_src>

<mosaic_0001>
module attributes {stable_mosaic.version = 11 : i64} {
  func.func @tsnet_kernel(%arg0: i32, %arg1: memref<1x128x128xf32, #tpu.memory_space<vmem>>, %arg2: memref<1x4x128xf32, #tpu.memory_space<vmem>>, %arg3: memref<16x72xf32, #tpu.memory_space<vmem>>, %arg4: memref<24x272xf32, #tpu.memory_space<vmem>>, %arg5: memref<8x128xf32, #tpu.memory_space<vmem>>, %arg6: memref<128x8xf32, #tpu.memory_space<vmem>>, %arg7: memref<32x176xf32, #tpu.memory_space<vmem>>, %arg8: memref<32x1xf32, #tpu.memory_space<vmem>>, %arg9: memref<1x32x8xf32, #tpu.memory_space<vmem>>, %arg10: memref<72x128xf32, #tpu.memory_space<vmem>>, %arg11: memref<272x128xf32, #tpu.memory_space<vmem>>) attributes {dimension_semantics = [#tpu.dimension_semantics<parallel>], iteration_bounds = array<i64: 2>, scalar_prefetch = 0 : i64, scratch_operands = 2 : i64, tpu.core_type = #tpu.core_type<tc>, window_params = [{transform_indices = @transform_0, window_bounds = array<i64: 1, 128, 128>}, {transform_indices = @transform_1, window_bounds = array<i64: 1, 4, 128>}, {pipeline_mode = #tpu.pipeline_mode<synchronous>, transform_indices = @transform_2, window_bounds = array<i64: 16, 72>}, {pipeline_mode = #tpu.pipeline_mode<synchronous>, transform_indices = @transform_3, window_bounds = array<i64: 24, 272>}, {pipeline_mode = #tpu.pipeline_mode<synchronous>, transform_indices = @transform_4, window_bounds = array<i64: 8, 128>}, {pipeline_mode = #tpu.pipeline_mode<synchronous>, transform_indices = @transform_5, window_bounds = array<i64: 128, 8>}, {pipeline_mode = #tpu.pipeline_mode<synchronous>, transform_indices = @transform_6, window_bounds = array<i64: 32, 176>}, {pipeline_mode = #tpu.pipeline_mode<synchronous>, transform_indices = @transform_7, window_bounds = array<i64: 32, 1>}, {transform_indices = @transform_8, window_bounds = array<i64: 1, 32, 8>}]} {
    %c0 = arith.constant 0 : index
    %c0_0 = arith.constant 0 : index
    %c0_1 = arith.constant 0 : index
    %0 = vector.load %arg1[%c0, %c0_0, %c0_1] : memref<1x128x128xf32, #tpu.memory_space<vmem>>, vector<1x128x128xf32>
    %1 = vector.shape_cast %0 : vector<1x128x128xf32> to vector<128x128xf32>
    %c0_2 = arith.constant 0 : index
    %c0_3 = arith.constant 0 : index
    %c0_4 = arith.constant 0 : index
    %2 = vector.load %arg2[%c0_2, %c0_3, %c0_4] : memref<1x4x128xf32, #tpu.memory_space<vmem>>, vector<1x4x128xf32>
    %3 = vector.shape_cast %2 : vector<1x4x128xf32> to vector<4x128xf32>
    %cst = arith.constant 0.000000e+00 : f32
    %4 = vector.broadcast %cst : f32 to vector<4x128xf32>
    %c68 = arith.constant 68 : index
    %c0_5 = arith.constant 0 : index
    %5 = vector.load %arg10[%c68, %c0_5] : memref<72x128xf32, #tpu.memory_space<vmem>>, vector<4x128xf32>
    tpu.vector_store %arg10[%c68, %c0_5], %4 {strides = array<i32>} : memref<72x128xf32, #tpu.memory_space<vmem>>, vector<4x128xf32>,
    %c0_6 = arith.constant 0 : index
    %c0_7 = arith.constant 0 : index
    %6 = vector.load %arg10[%c0_6, %c0_7] : memref<72x128xf32, #tpu.memory_space<vmem>>, vector<4x128xf32>
    tpu.vector_store %arg10[%c0_6, %c0_7], %3 {strides = array<i32>} : memref<72x128xf32, #tpu.memory_space<vmem>>, vector<4x128xf32>,
    %cst_8 = arith.constant dense<0.000000e+00> : vector<4x128xf32>
    %7 = tpu.matmul %3, %1, %cst_8 {dimension_numbers = #tpu.dot_dimension_numbers<[1], [0], [0], [1], [0, 0, 1, 1], [], []>} : vector<4x128xf32>, vector<128x128xf32>, vector<4x128xf32> -> vector<4x128xf32>
    %c4 = arith.constant 4 : index
    %c0_9 = arith.constant 0 : index
    %8 = vector.load %arg10[%c4, %c0_9] : memref<72x128xf32, #tpu.memory_space<vmem>>, vector<4x128xf32>
    tpu.vector_store %arg10[%c4, %c0_9], %7 {strides = array<i32>} : memref<72x128xf32, #tpu.memory_space<vmem>>, vector<4x128xf32>,
    %cst_10 = arith.constant dense<0.000000e+00> : vector<4x128xf32>
    %9 = tpu.matmul %7, %1, %cst_10 {dimension_numbers = #tpu.dot_dimension_numbers<[1], [0], [0], [1], [0, 0, 1, 1], [], []>} : vector<4x128xf32>, vector<128x128xf32>, vector<4x128xf32> -> vector<4x128xf32>
    %c8 = arith.constant 8 : index
    %c0_11 = arith.constant 0 : index
    %10 = vector.load %arg10[%c8, %c0_11] : memref<72x128xf32, #tpu.memory_space<vmem>>, vector<4x128xf32>
    tpu.vector_store %arg10[%c8, %c0_11], %9 {strides = array<i32>} : memref<72x128xf32, #tpu.memory_space<vmem>>, vector<4x128xf32>,
    %cst_12 = arith.constant dense<0.000000e+00> : vector<4x128xf32>
    %11 = tpu.matmul %9, %1, %cst_12 {dimension_numbers = #tpu.dot_dimension_numbers<[1], [0], [0], [1], [0, 0, 1, 1], [], []>} : vector<4x128xf32>, vector<128x128xf32>, vector<4x128xf32> -> vector<4x128xf32>
    %c12 = arith.constant 12 : index
    %c0_13 = arith.constant 0 : index
    %12 = vector.load %arg10[%c12, %c0_13] : memref<72x128xf32, #tpu.memory_space<vmem>>, vector<4x128xf32>
    tpu.vector_store %arg10[%c12, %c0_13], %11 {strides = array<i32>} : memref<72x128xf32, #tpu.memory_space<vmem>>, vector<4x128xf32>,
    %cst_14 = arith.constant dense<0.000000e+00> : vector<4x128xf32>
    %13 = tpu.matmul %11, %1, %cst_14 {dimension_numbers = #tpu.dot_dimension_numbers<[1], [0], [0], [1], [0, 0, 1, 1], [], []>} : vector<4x128xf32>, vector<128x128xf32>, vector<4x128xf32> -> vector<4x128xf32>
    %c16 = arith.constant 16 : index
    %c0_15 = arith.constant 0 : index
    %14 = vector.load %arg10[%c16, %c0_15] : memref<72x128xf32, #tpu.memory_space<vmem>>, vector<4x128xf32>
    tpu.vector_store %arg10[%c16, %c0_15], %13 {strides = array<i32>} : memref<72x128xf32, #tpu.memory_space<vmem>>, vector<4x128xf32>,
    %cst_16 = arith.constant dense<0.000000e+00> : vector<4x128xf32>
    %15 = tpu.matmul %13, %1, %cst_16 {dimension_numbers = #tpu.dot_dimension_numbers<[1], [0], [0], [1], [0, 0, 1, 1], [], []>} : vector<4x128xf32>, vector<128x128xf32>, vector<4x128xf32> -> vector<4x128xf32>
    %c20 = arith.constant 20 : index
    %c0_17 = arith.constant 0 : index
    %16 = vector.load %arg10[%c20, %c0_17] : memref<72x128xf32, #tpu.memory_space<vmem>>, vector<4x128xf32>
    tpu.vector_store %arg10[%c20, %c0_17], %15 {strides = array<i32>} : memref<72x128xf32, #tpu.memory_space<vmem>>, vector<4x128xf32>,
    %cst_18 = arith.constant dense<0.000000e+00> : vector<4x128xf32>
    %17 = tpu.matmul %15, %1, %cst_18 {dimension_numbers = #tpu.dot_dimension_numbers<[1], [0], [0], [1], [0, 0, 1, 1], [], []>} : vector<4x128xf32>, vector<128x128xf32>, vector<4x128xf32> -> vector<4x128xf32>
    %c24 = arith.constant 24 : index
    %c0_19 = arith.constant 0 : index
    %18 = vector.load %arg10[%c24, %c0_19] : memref<72x128xf32, #tpu.memory_space<vmem>>, vector<4x128xf32>
    tpu.vector_store %arg10[%c24, %c0_19], %17 {strides = array<i32>} : memref<72x128xf32, #tpu.memory_space<vmem>>, vector<4x128xf32>,
    %cst_20 = arith.constant dense<0.000000e+00> : vector<4x128xf32>
    %19 = tpu.matmul %17, %1, %cst_20 {dimension_numbers = #tpu.dot_dimension_numbers<[1], [0], [0], [1], [0, 0, 1, 1], [], []>} : vector<4x128xf32>, vector<128x128xf32>, vector<4x128xf32> -> vector<4x128xf32>
    %c28 = arith.constant 28 : index
    %c0_21 = arith.constant 0 : index
    %20 = vector.load %arg10[%c28, %c0_21] : memref<72x128xf32, #tpu.memory_space<vmem>>, vector<4x128xf32>
    tpu.vector_store %arg10[%c28, %c0_21], %19 {strides = array<i32>} : memref<72x128xf32, #tpu.memory_space<vmem>>, vector<4x128xf32>,
    %cst_22 = arith.constant dense<0.000000e+00> : vector<4x128xf32>
    %21 = tpu.matmul %19, %1, %cst_22 {dimension_numbers = #tpu.dot_dimension_numbers<[1], [0], [0], [1], [0, 0, 1, 1], [], []>} : vector<4x128xf32>, vector<128x128xf32>, vector<4x128xf32> -> vector<4x128xf32>
    %c32 = arith.constant 32 : index
    %c0_23 = arith.constant 0 : index
    %22 = vector.load %arg10[%c32, %c0_23] : memref<72x128xf32, #tpu.memory_space<vmem>>, vector<4x128xf32>
    tpu.vector_store %arg10[%c32, %c0_23], %21 {strides = array<i32>} : memref<72x128xf32, #tpu.memory_space<vmem>>, vector<4x128xf32>,
    %cst_24 = arith.constant dense<0.000000e+00> : vector<4x128xf32>
    %23 = tpu.matmul %21, %1, %cst_24 {dimension_numbers = #tpu.dot_dimension_numbers<[1], [0], [0], [1], [0, 0, 1, 1], [], []>} : vector<4x128xf32>, vector<128x128xf32>, vector<4x128xf32> -> vector<4x128xf32>
    %c36 = arith.constant 36 : index
    %c0_25 = arith.constant 0 : index
    %24 = vector.load %arg10[%c36, %c0_25] : memref<72x128xf32, #tpu.memory_space<vmem>>, vector<4x128xf32>
    tpu.vector_store %arg10[%c36, %c0_25], %23 {strides = array<i32>} : memref<72x128xf32, #tpu.memory_space<vmem>>, vector<4x128xf32>,
    %cst_26 = arith.constant dense<0.000000e+00> : vector<4x128xf32>
    %25 = tpu.matmul %23, %1, %cst_26 {dimension_numbers = #tpu.dot_dimension_numbers<[1], [0], [0], [1], [0, 0, 1, 1], [], []>} : vector<4x128xf32>, vector<128x128xf32>, vector<4x128xf32> -> vector<4x128xf32>
    %c40 = arith.constant 40 : index
    %c0_27 = arith.constant 0 : index
    %26 = vector.load %arg10[%c40, %c0_27] : memref<72x128xf32, #tpu.memory_space<vmem>>, vector<4x128xf32>
    tpu.vector_store %arg10[%c40, %c0_27], %25 {strides = array<i32>} : memref<72x128xf32, #tpu.memory_space<vmem>>, vector<4x128xf32>,
    %cst_28 = arith.constant dense<0.000000e+00> : vector<4x128xf32>
    %27 = tpu.matmul %25, %1, %cst_28 {dimension_numbers = #tpu.dot_dimension_numbers<[1], [0], [0], [1], [0, 0, 1, 1], [], []>} : vector<4x128xf32>, vector<128x128xf32>, vector<4x128xf32> -> vector<4x128xf32>
    %c44 = arith.constant 44 : index
    %c0_29 = arith.constant 0 : index
    %28 = vector.load %arg10[%c44, %c0_29] : memref<72x128xf32, #tpu.memory_space<vmem>>, vector<4x128xf32>
    tpu.vector_store %arg10[%c44, %c0_29], %27 {strides = array<i32>} : memref<72x128xf32, #tpu.memory_space<vmem>>, vector<4x128xf32>,
    %cst_30 = arith.constant dense<0.000000e+00> : vector<4x128xf32>
    %29 = tpu.matmul %27, %1, %cst_30 {dimension_numbers = #tpu.dot_dimension_numbers<[1], [0], [0], [1], [0, 0, 1, 1], [], []>} : vector<4x128xf32>, vector<128x128xf32>, vector<4x128xf32> -> vector<4x128xf32>
    %c48 = arith.constant 48 : index
    %c0_31 = arith.constant 0 : index
    %30 = vector.load %arg10[%c48, %c0_31] : memref<72x128xf32, #tpu.memory_space<vmem>>, vector<4x128xf32>
    tpu.vector_store %arg10[%c48, %c0_31], %29 {strides = array<i32>} : memref<72x128xf32, #tpu.memory_space<vmem>>, vector<4x128xf32>,
    %cst_32 = arith.constant dense<0.000000e+00> : vector<4x128xf32>
    %31 = tpu.matmul %29, %1, %cst_32 {dimension_numbers = #tpu.dot_dimension_numbers<[1], [0], [0], [1], [0, 0, 1, 1], [], []>} : vector<4x128xf32>, vector<128x128xf32>, vector<4x128xf32> -> vector<4x128xf32>
    %c52 = arith.constant 52 : index
    %c0_33 = arith.constant 0 : index
    %32 = vector.load %arg10[%c52, %c0_33] : memref<72x128xf32, #tpu.memory_space<vmem>>, vector<4x128xf32>
    tpu.vector_store %arg10[%c52, %c0_33], %31 {strides = array<i32>} : memref<72x128xf32, #tpu.memory_space<vmem>>, vector<4x128xf32>,
    %cst_34 = arith.constant dense<0.000000e+00> : vector<4x128xf32>
    %33 = tpu.matmul %31, %1, %cst_34 {dimension_numbers = #tpu.dot_dimension_numbers<[1], [0], [0], [1], [0, 0, 1, 1], [], []>} : vector<4x128xf32>, vector<128x128xf32>, vector<4x128xf32> -> vector<4x128xf32>
    %c56 = arith.constant 56 : index
    %c0_35 = arith.constant 0 : index
    %34 = vector.load %arg10[%c56, %c0_35] : memref<72x128xf32, #tpu.memory_space<vmem>>, vector<4x128xf32>
    tpu.vector_store %arg10[%c56, %c0_35], %33 {strides = array<i32>} : memref<72x128xf32, #tpu.memory_space<vmem>>, vector<4x128xf32>,
    %cst_36 = arith.constant dense<0.000000e+00> : vector<4x128xf32>
    %35 = tpu.matmul %33, %1, %cst_36 {dimension_numbers = #tpu.dot_dimension_numbers<[1], [0], [0], [1], [0, 0, 1, 1], [], []>} : vector<4x128xf32>, vector<128x128xf32>, vector<4x128xf32> -> vector<4x128xf32>
    %c60 = arith.constant 60 : index
    %c0_37 = arith.constant 0 : index
    %36 = vector.load %arg10[%c60, %c0_37] : memref<72x128xf32, #tpu.memory_space<vmem>>, vector<4x128xf32>
    tpu.vector_store %arg10[%c60, %c0_37], %35 {strides = array<i32>} : memref<72x128xf32, #tpu.memory_space<vmem>>, vector<4x128xf32>,
    %cst_38 = arith.constant dense<0.000000e+00> : vector<4x128xf32>
    %37 = tpu.matmul %35, %1, %cst_38 {dimension_numbers = #tpu.dot_dimension_numbers<[1], [0], [0], [1], [0, 0, 1, 1], [], []>} : vector<4x128xf32>, vector<128x128xf32>, vector<4x128xf32> -> vector<4x128xf32>
    %c64 = arith.constant 64 : index
    %c0_39 = arith.constant 0 : index
    %38 = vector.load %arg10[%c64, %c0_39] : memref<72x128xf32, #tpu.memory_space<vmem>>, vector<4x128xf32>
    tpu.vector_store %arg10[%c64, %c0_39], %37 {strides = array<i32>} : memref<72x128xf32, #tpu.memory_space<vmem>>, vector<4x128xf32>,
    %c0_40 = arith.constant 0 : index
    %c0_41 = arith.constant 0 : index
    %39 = vector.load %arg3[%c0_40, %c0_41] : memref<16x72xf32, #tpu.memory_space<vmem>>, vector<16x72xf32>
    %c0_42 = arith.constant 0 : index
    %c0_43 = arith.constant 0 : index
    %40 = vector.load %arg10[%c0_42, %c0_43] : memref<72x128xf32, #tpu.memory_space<vmem>>, vector<72x128xf32>
    %cst_44 = arith.constant dense<0.000000e+00> : vector<16x128xf32>
    %41 = tpu.matmul %39, %40, %cst_44 {dimension_numbers = #tpu.dot_dimension_numbers<[1], [0], [0], [1], [0, 0, 1, 1], [], []>} : vector<16x72xf32>, vector<72x128xf32>, vector<16x128xf32> -> vector<16x128xf32>
    %42 = math.absf %41 : vector<16x128xf32>
    %c0_45 = arith.constant 0 : index
    %c0_46 = arith.constant 0 : index
    %43 = vector.load %arg11[%c0_45, %c0_46] : memref<272x128xf32, #tpu.memory_space<vmem>>, vector<16x128xf32>
    tpu.vector_store %arg11[%c0_45, %c0_46], %42 {strides = array<i32>} : memref<272x128xf32, #tpu.memory_space<vmem>>, vector<16x128xf32>,
    %cst_47 = arith.constant dense<0.000000e+00> : vector<16x128xf32>
    %44 = tpu.matmul %42, %1, %cst_47 {dimension_numbers = #tpu.dot_dimension_numbers<[1], [0], [0], [1], [0, 0, 1, 1], [], []>} : vector<16x128xf32>, vector<128x128xf32>, vector<16x128xf32> -> vector<16x128xf32>
    %c16_48 = arith.constant 16 : index
    %c0_49 = arith.constant 0 : index
    %45 = vector.load %arg11[%c16_48, %c0_49] : memref<272x128xf32, #tpu.memory_space<vmem>>, vector<16x128xf32>
    tpu.vector_store %arg11[%c16_48, %c0_49], %44 {strides = array<i32>} : memref<272x128xf32, #tpu.memory_space<vmem>>, vector<16x128xf32>,
    %cst_50 = arith.constant dense<0.000000e+00> : vector<16x128xf32>
    %46 = tpu.matmul %44, %1, %cst_50 {dimension_numbers = #tpu.dot_dimension_numbers<[1], [0], [0], [1], [0, 0, 1, 1], [], []>} : vector<16x128xf32>, vector<128x128xf32>, vector<16x128xf32> -> vector<16x128xf32>
    %c32_51 = arith.constant 32 : index
    %c0_52 = arith.constant 0 : index
    %47 = vector.load %arg11[%c32_51, %c0_52] : memref<272x128xf32, #tpu.memory_space<vmem>>, vector<16x128xf32>
    tpu.vector_store %arg11[%c32_51, %c0_52], %46 {strides = array<i32>} : memref<272x128xf32, #tpu.memory_space<vmem>>, vector<16x128xf32>,
    %cst_53 = arith.constant dense<0.000000e+00> : vector<16x128xf32>
    %48 = tpu.matmul %46, %1, %cst_53 {dimension_numbers = #tpu.dot_dimension_numbers<[1], [0], [0], [1], [0, 0, 1, 1], [], []>} : vector<16x128xf32>, vector<128x128xf32>, vector<16x128xf32> -> vector<16x128xf32>
    %c48_54 = arith.constant 48 : index
    %c0_55 = arith.constant 0 : index
    %49 = vector.load %arg11[%c48_54, %c0_55] : memref<272x128xf32, #tpu.memory_space<vmem>>, vector<16x128xf32>
    tpu.vector_store %arg11[%c48_54, %c0_55], %48 {strides = array<i32>} : memref<272x128xf32, #tpu.memory_space<vmem>>, vector<16x128xf32>,
    %cst_56 = arith.constant dense<0.000000e+00> : vector<16x128xf32>
    %50 = tpu.matmul %48, %1, %cst_56 {dimension_numbers = #tpu.dot_dimension_numbers<[1], [0], [0], [1], [0, 0, 1, 1], [], []>} : vector<16x128xf32>, vector<128x128xf32>, vector<16x128xf32> -> vector<16x128xf32>
    %c64_57 = arith.constant 64 : index
    %c0_58 = arith.constant 0 : index
    %51 = vector.load %arg11[%c64_57, %c0_58] : memref<272x128xf32, #tpu.memory_space<vmem>>, vector<16x128xf32>
    tpu.vector_store %arg11[%c64_57, %c0_58], %50 {strides = array<i32>} : memref<272x128xf32, #tpu.memory_space<vmem>>, vector<16x128xf32>,
    %cst_59 = arith.constant dense<0.000000e+00> : vector<16x128xf32>
    %52 = tpu.matmul %50, %1, %cst_59 {dimension_numbers = #tpu.dot_dimension_numbers<[1], [0], [0], [1], [0, 0, 1, 1], [], []>} : vector<16x128xf32>, vector<128x128xf32>, vector<16x128xf32> -> vector<16x128xf32>
    %c80 = arith.constant 80 : index
    %c0_60 = arith.constant 0 : index
    %53 = vector.load %arg11[%c80, %c0_60] : memref<272x128xf32, #tpu.memory_space<vmem>>, vector<16x128xf32>
    tpu.vector_store %arg11[%c80, %c0_60], %52 {strides = array<i32>} : memref<272x128xf32, #tpu.memory_space<vmem>>, vector<16x128xf32>,
    %cst_61 = arith.constant dense<0.000000e+00> : vector<16x128xf32>
    %54 = tpu.matmul %52, %1, %cst_61 {dimension_numbers = #tpu.dot_dimension_numbers<[1], [0], [0], [1], [0, 0, 1, 1], [], []>} : vector<16x128xf32>, vector<128x128xf32>, vector<16x128xf32> -> vector<16x128xf32>
    %c96 = arith.constant 96 : index
    %c0_62 = arith.constant 0 : index
    %55 = vector.load %arg11[%c96, %c0_62] : memref<272x128xf32, #tpu.memory_space<vmem>>, vector<16x128xf32>
    tpu.vector_store %arg11[%c96, %c0_62], %54 {strides = array<i32>} : memref<272x128xf32, #tpu.memory_space<vmem>>, vector<16x128xf32>,
    %cst_63 = arith.constant dense<0.000000e+00> : vector<16x128xf32>
    %56 = tpu.matmul %54, %1, %cst_63 {dimension_numbers = #tpu.dot_dimension_numbers<[1], [0], [0], [1], [0, 0, 1, 1], [], []>} : vector<16x128xf32>, vector<128x128xf32>, vector<16x128xf32> -> vector<16x128xf32>
    %c112 = arith.constant 112 : index
    %c0_64 = arith.constant 0 : index
    %57 = vector.load %arg11[%c112, %c0_64] : memref<272x128xf32, #tpu.memory_space<vmem>>, vector<16x128xf32>
    tpu.vector_store %arg11[%c112, %c0_64], %56 {strides = array<i32>} : memref<272x128xf32, #tpu.memory_space<vmem>>, vector<16x128xf32>,
    %cst_65 = arith.constant dense<0.000000e+00> : vector<16x128xf32>
    %58 = tpu.matmul %56, %1, %cst_65 {dimension_numbers = #tpu.dot_dimension_numbers<[1], [0], [0], [1], [0, 0, 1, 1], [], []>} : vector<16x128xf32>, vector<128x128xf32>, vector<16x128xf32> -> vector<16x128xf32>
    %c128 = arith.constant 128 : index
    %c0_66 = arith.constant 0 : index
    %59 = vector.load %arg11[%c128, %c0_66] : memref<272x128xf32, #tpu.memory_space<vmem>>, vector<16x128xf32>
    tpu.vector_store %arg11[%c128, %c0_66], %58 {strides = array<i32>} : memref<272x128xf32, #tpu.memory_space<vmem>>, vector<16x128xf32>,
    %cst_67 = arith.constant dense<0.000000e+00> : vector<16x128xf32>
    %60 = tpu.matmul %58, %1, %cst_67 {dimension_numbers = #tpu.dot_dimension_numbers<[1], [0], [0], [1], [0, 0, 1, 1], [], []>} : vector<16x128xf32>, vector<128x128xf32>, vector<16x128xf32> -> vector<16x128xf32>
    %c144 = arith.constant 144 : index
    %c0_68 = arith.constant 0 : index
    %61 = vector.load %arg11[%c144, %c0_68] : memref<272x128xf32, #tpu.memory_space<vmem>>, vector<16x128xf32>
    tpu.vector_store %arg11[%c144, %c0_68], %60 {strides = array<i32>} : memref<272x128xf32, #tpu.memory_space<vmem>>, vector<16x128xf32>,
    %cst_69 = arith.constant dense<0.000000e+00> : vector<16x128xf32>
    %62 = tpu.matmul %60, %1, %cst_69 {dimension_numbers = #tpu.dot_dimension_numbers<[1], [0], [0], [1], [0, 0, 1, 1], [], []>} : vector<16x128xf32>, vector<128x128xf32>, vector<16x128xf32> -> vector<16x128xf32>
    %c160 = arith.constant 160 : index
    %c0_70 = arith.constant 0 : index
    %63 = vector.load %arg11[%c160, %c0_70] : memref<272x128xf32, #tpu.memory_space<vmem>>, vector<16x128xf32>
    tpu.vector_store %arg11[%c160, %c0_70], %62 {strides = array<i32>} : memref<272x128xf32, #tpu.memory_space<vmem>>, vector<16x128xf32>,
    %cst_71 = arith.constant dense<0.000000e+00> : vector<16x128xf32>
    %64 = tpu.matmul %62, %1, %cst_71 {dimension_numbers = #tpu.dot_dimension_numbers<[1], [0], [0], [1], [0, 0, 1, 1], [], []>} : vector<16x128xf32>, vector<128x128xf32>, vector<16x128xf32> -> vector<16x128xf32>
    %c176 = arith.constant 176 : index
    %c0_72 = arith.constant 0 : index
    %65 = vector.load %arg11[%c176, %c0_72] : memref<272x128xf32, #tpu.memory_space<vmem>>, vector<16x128xf32>
    tpu.vector_store %arg11[%c176, %c0_72], %64 {strides = array<i32>} : memref<272x128xf32, #tpu.memory_space<vmem>>, vector<16x128xf32>,
    %cst_73 = arith.constant dense<0.000000e+00> : vector<16x128xf32>
    %66 = tpu.matmul %64, %1, %cst_73 {dimension_numbers = #tpu.dot_dimension_numbers<[1], [0], [0], [1], [0, 0, 1, 1], [], []>} : vector<16x128xf32>, vector<128x128xf32>, vector<16x128xf32> -> vector<16x128xf32>
    %c192 = arith.constant 192 : index
    %c0_74 = arith.constant 0 : index
    %67 = vector.load %arg11[%c192, %c0_74] : memref<272x128xf32, #tpu.memory_space<vmem>>, vector<16x128xf32>
    tpu.vector_store %arg11[%c192, %c0_74], %66 {strides = array<i32>} : memref<272x128xf32, #tpu.memory_space<vmem>>, vector<16x128xf32>,
    %cst_75 = arith.constant dense<0.000000e+00> : vector<16x128xf32>
    %68 = tpu.matmul %66, %1, %cst_75 {dimension_numbers = #tpu.dot_dimension_numbers<[1], [0], [0], [1], [0, 0, 1, 1], [], []>} : vector<16x128xf32>, vector<128x128xf32>, vector<16x128xf32> -> vector<16x128xf32>
    %c208 = arith.constant 208 : index
    %c0_76 = arith.constant 0 : index
    %69 = vector.load %arg11[%c208, %c0_76] : memref<272x128xf32, #tpu.memory_space<vmem>>, vector<16x128xf32>
    tpu.vector_store %arg11[%c208, %c0_76], %68 {strides = array<i32>} : memref<272x128xf32, #tpu.memory_space<vmem>>, vector<16x128xf32>,
    %cst_77 = arith.constant dense<0.000000e+00> : vector<16x128xf32>
    %70 = tpu.matmul %68, %1, %cst_77 {dimension_numbers = #tpu.dot_dimension_numbers<[1], [0], [0], [1], [0, 0, 1, 1], [], []>} : vector<16x128xf32>, vector<128x128xf32>, vector<16x128xf32> -> vector<16x128xf32>
    %c224 = arith.constant 224 : index
    %c0_78 = arith.constant 0 : index
    %71 = vector.load %arg11[%c224, %c0_78] : memref<272x128xf32, #tpu.memory_space<vmem>>, vector<16x128xf32>
    tpu.vector_store %arg11[%c224, %c0_78], %70 {strides = array<i32>} : memref<272x128xf32, #tpu.memory_space<vmem>>, vector<16x128xf32>,
    %cst_79 = arith.constant dense<0.000000e+00> : vector<16x128xf32>
    %72 = tpu.matmul %70, %1, %cst_79 {dimension_numbers = #tpu.dot_dimension_numbers<[1], [0], [0], [1], [0, 0, 1, 1], [], []>} : vector<16x128xf32>, vector<128x128xf32>, vector<16x128xf32> -> vector<16x128xf32>
    %c240 = arith.constant 240 : index
    %c0_80 = arith.constant 0 : index
    %73 = vector.load %arg11[%c240, %c0_80] : memref<272x128xf32, #tpu.memory_space<vmem>>, vector<16x128xf32>
    tpu.vector_store %arg11[%c240, %c0_80], %72 {strides = array<i32>} : memref<272x128xf32, #tpu.memory_space<vmem>>, vector<16x128xf32>,
    %cst_81 = arith.constant dense<0.000000e+00> : vector<16x128xf32>
    %74 = tpu.matmul %72, %1, %cst_81 {dimension_numbers = #tpu.dot_dimension_numbers<[1], [0], [0], [1], [0, 0, 1, 1], [], []>} : vector<16x128xf32>, vector<128x128xf32>, vector<16x128xf32> -> vector<16x128xf32>
    %c256 = arith.constant 256 : index
    %c0_82 = arith.constant 0 : index
    %75 = vector.load %arg11[%c256, %c0_82] : memref<272x128xf32, #tpu.memory_space<vmem>>, vector<16x128xf32>
    tpu.vector_store %arg11[%c256, %c0_82], %74 {strides = array<i32>} : memref<272x128xf32, #tpu.memory_space<vmem>>, vector<16x128xf32>,
    %c0_83 = arith.constant 0 : index
    %c0_84 = arith.constant 0 : index
    %76 = vector.load %arg4[%c0_83, %c0_84] : memref<24x272xf32, #tpu.memory_space<vmem>>, vector<24x272xf32>
    %c0_85 = arith.constant 0 : index
    %c0_86 = arith.constant 0 : index
    %77 = vector.load %arg11[%c0_85, %c0_86] : memref<272x128xf32, #tpu.memory_space<vmem>>, vector<272x128xf32>
    %cst_87 = arith.constant dense<0.000000e+00> : vector<24x128xf32>
    %78 = tpu.matmul %76, %77, %cst_87 {dimension_numbers = #tpu.dot_dimension_numbers<[1], [0], [0], [1], [0, 0, 1, 1], [], []>} : vector<24x272xf32>, vector<272x128xf32>, vector<24x128xf32> -> vector<24x128xf32>
    %79 = math.absf %78 : vector<24x128xf32>
    %80 = tpu.concatenate %3, %42, %79 in 0 : vector<4x128xf32>, vector<16x128xf32>, vector<24x128xf32> -> vector<44x128xf32>
    %c0_88 = arith.constant 0 : index
    %c0_89 = arith.constant 0 : index
    %81 = vector.load %arg5[%c0_88, %c0_89] : memref<8x128xf32, #tpu.memory_space<vmem>>, vector<8x128xf32>
    %c0_90 = arith.constant 0 : index
    %c0_91 = arith.constant 0 : index
    %82 = vector.load %arg6[%c0_90, %c0_91] : memref<128x8xf32, #tpu.memory_space<vmem>>, vector<128x8xf32>
    %cst_92 = arith.constant dense<0.000000e+00> : vector<44x8xf32>
    %83 = tpu.matmul %80, %82, %cst_92 {dimension_numbers = #tpu.dot_dimension_numbers<[1], [0], [0], [1], [0, 0, 1, 1], [], []>} : vector<44x128xf32>, vector<128x8xf32>, vector<44x8xf32> -> vector<44x8xf32>
    %cst_93 = arith.constant 6.250000e-02 : f32
    %84 = vector.broadcast %cst_93 : f32 to vector<44x8xf32>
    %85 = arith.mulf %83, %84 : vector<44x8xf32>
    %cst_94 = arith.constant dense<0.000000e+00> : vector<44x128xf32>
    %86 = tpu.matmul %85, %81, %cst_94 {dimension_numbers = #tpu.dot_dimension_numbers<[1], [0], [0], [1], [0, 0, 1, 1], [], []>} : vector<44x8xf32>, vector<8x128xf32>, vector<44x128xf32> -> vector<44x128xf32>
    %87 = arith.subf %80, %86 : vector<44x128xf32>
    %88 = arith.mulf %87, %87 : vector<44x128xf32>
    %cst_95 = arith.constant dense<0.000000e+00> : vector<44x8xf32>
    %89 = tpu.matmul %88, %82, %cst_95 {dimension_numbers = #tpu.dot_dimension_numbers<[1], [0], [0], [1], [0, 0, 1, 1], [], []>} : vector<44x128xf32>, vector<128x8xf32>, vector<44x8xf32> -> vector<44x8xf32>
    %cst_96 = arith.constant 6.250000e-02 : f32
    %90 = vector.broadcast %cst_96 : f32 to vector<44x8xf32>
    %91 = arith.mulf %89, %90 : vector<44x8xf32>
    %92 = arith.mulf %88, %87 : vector<44x128xf32>
    %cst_97 = arith.constant dense<0.000000e+00> : vector<44x8xf32>
    %93 = tpu.matmul %92, %82, %cst_97 {dimension_numbers = #tpu.dot_dimension_numbers<[1], [0], [0], [1], [0, 0, 1, 1], [], []>} : vector<44x128xf32>, vector<128x8xf32>, vector<44x8xf32> -> vector<44x8xf32>
    %cst_98 = arith.constant 6.250000e-02 : f32
    %94 = vector.broadcast %cst_98 : f32 to vector<44x8xf32>
    %95 = arith.mulf %93, %94 : vector<44x8xf32>
    %96 = arith.mulf %88, %88 : vector<44x128xf32>
    %cst_99 = arith.constant dense<0.000000e+00> : vector<44x8xf32>
    %97 = tpu.matmul %96, %82, %cst_99 {dimension_numbers = #tpu.dot_dimension_numbers<[1], [0], [0], [1], [0, 0, 1, 1], [], []>} : vector<44x128xf32>, vector<128x8xf32>, vector<44x8xf32> -> vector<44x8xf32>
    %cst_100 = arith.constant 6.250000e-02 : f32
    %98 = vector.broadcast %cst_100 : f32 to vector<44x8xf32>
    %99 = arith.mulf %97, %98 : vector<44x8xf32>
    %100 = math.sqrt %91 : vector<44x8xf32>
    %101 = arith.mulf %91, %100 : vector<44x8xf32>
    %102 = arith.divf %95, %101 : vector<44x8xf32>
    %cst_101 = arith.constant 9.99999986E+14 : f32
    %103 = vector.broadcast %cst_101 : f32 to vector<44x8xf32>
    %104 = arith.cmpf ogt, %102, %103 : vector<44x8xf32>
    %cst_102 = arith.constant 0.000000e+00 : f32
    %105 = vector.broadcast %cst_102 : f32 to vector<44x8xf32>
    %106 = arith.select %104, %105, %102 : vector<44x8xi1>, vector<44x8xf32>
    %107 = arith.cmpf one, %106, %106 : vector<44x8xf32>
    %cst_103 = arith.constant 0.000000e+00 : f32
    %108 = vector.broadcast %cst_103 : f32 to vector<44x8xf32>
    %109 = arith.select %107, %108, %106 : vector<44x8xi1>, vector<44x8xf32>
    %110 = arith.mulf %91, %91 : vector<44x8xf32>
    %111 = arith.divf %99, %110 : vector<44x8xf32>
    %cst_104 = arith.constant 3.000000e+00 : f32
    %112 = vector.broadcast %cst_104 : f32 to vector<44x8xf32>
    %113 = arith.subf %111, %112 : vector<44x8xf32>
    %cst_105 = arith.constant 9.99999986E+14 : f32
    %114 = vector.broadcast %cst_105 : f32 to vector<44x8xf32>
    %115 = arith.cmpf ogt, %113, %114 : vector<44x8xf32>
    %cst_106 = arith.constant -3.000000e+00 : f32
    %116 = vector.broadcast %cst_106 : f32 to vector<44x8xf32>
    %117 = arith.select %115, %116, %113 : vector<44x8xi1>, vector<44x8xf32>
    %118 = arith.cmpf one, %117, %117 : vector<44x8xf32>
    %cst_107 = arith.constant -3.000000e+00 : f32
    %119 = vector.broadcast %cst_107 : f32 to vector<44x8xf32>
    %120 = arith.select %118, %119, %117 : vector<44x8xi1>, vector<44x8xf32>
    %121 = tpu.concatenate %85, %91, %109, %120 in 0 : vector<44x8xf32>, vector<44x8xf32>, vector<44x8xf32>, vector<44x8xf32> -> vector<176x8xf32>
    %cst_108 = arith.constant 0.000000e+00 : f32
    %122 = vector.broadcast %cst_108 : f32 to vector<176x8xf32>
    %123 = arith.cmpf oge, %121, %122 : vector<176x8xf32>
    %cst_109 = arith.constant 0.00999999977 : f32
    %124 = vector.broadcast %cst_109 : f32 to vector<176x8xf32>
    %125 = arith.mulf %124, %121 : vector<176x8xf32>
    %126 = arith.select %123, %121, %125 : vector<176x8xi1>, vector<176x8xf32>
    %c0_110 = arith.constant 0 : index
    %c0_111 = arith.constant 0 : index
    %127 = vector.load %arg7[%c0_110, %c0_111] : memref<32x176xf32, #tpu.memory_space<vmem>>, vector<32x176xf32>
    %cst_112 = arith.constant dense<0.000000e+00> : vector<32x8xf32>
    %128 = tpu.matmul %127, %126, %cst_112 {dimension_numbers = #tpu.dot_dimension_numbers<[1], [0], [0], [1], [0, 0, 1, 1], [], []>} : vector<32x176xf32>, vector<176x8xf32>, vector<32x8xf32> -> vector<32x8xf32>
    %c0_113 = arith.constant 0 : index
    %c0_114 = arith.constant 0 : index
    %129 = vector.load %arg8[%c0_113, %c0_114] : memref<32x1xf32, #tpu.memory_space<vmem>>, vector<32x1xf32>
    %130 = vector.broadcast %129 : vector<32x1xf32> to vector<32x8xf32>
    %131 = arith.addf %128, %130 : vector<32x8xf32>
    %c0_115 = arith.constant 0 : index
    %c0_116 = arith.constant 0 : index
    %c0_117 = arith.constant 0 : index
    %132 = vector.load %arg9[%c0_115, %c0_116, %c0_117] : memref<1x32x8xf32, #tpu.memory_space<vmem>>, vector<1x32x8xf32>
    %133 = vector.shape_cast %132 : vector<1x32x8xf32> to vector<32x8xf32>
    %134 = vector.shape_cast %131 : vector<32x8xf32> to vector<1x32x8xf32>
    tpu.vector_store %arg9[%c0_115, %c0_116, %c0_117], %134 {strides = array<i32>} : memref<1x32x8xf32, #tpu.memory_space<vmem>>, vector<1x32x8xf32>,
    return
  }
  func.func @transform_0(%arg0: i32) -> (i32, i32, i32) {
    %c0_i32 = arith.constant 0 : i32
    %c0_i32_0 = arith.constant 0 : i32
    %c0_i32_1 = arith.constant 0 : i32
    return %arg0, %c0_i32, %c0_i32_0 : i32, i32, i32
  }
  func.func @transform_1(%arg0: i32) -> (i32, i32, i32) {
    %c0_i32 = arith.constant 0 : i32
    %c0_i32_0 = arith.constant 0 : i32
    %c0_i32_1 = arith.constant 0 : i32
    return %arg0, %c0_i32, %c0_i32_0 : i32, i32, i32
  }
  func.func @transform_2(%arg0: i32) -> (i32, i32) {
    %c0_i32 = arith.constant 0 : i32
    %c0_i32_0 = arith.constant 0 : i32
    %c0_i32_1 = arith.constant 0 : i32
    return %c0_i32, %c0_i32_0 : i32, i32
  }
  func.func @transform_3(%arg0: i32) -> (i32, i32) {
    %c0_i32 = arith.constant 0 : i32
    %c0_i32_0 = arith.constant 0 : i32
    %c0_i32_1 = arith.constant 0 : i32
    return %c0_i32, %c0_i32_0 : i32, i32
  }
  func.func @transform_4(%arg0: i32) -> (i32, i32) {
    %c0_i32 = arith.constant 0 : i32
    %c0_i32_0 = arith.constant 0 : i32
    %c0_i32_1 = arith.constant 0 : i32
    return %c0_i32, %c0_i32_0 : i32, i32
  }
  func.func @transform_5(%arg0: i32) -> (i32, i32) {
    %c0_i32 = arith.constant 0 : i32
    %c0_i32_0 = arith.constant 0 : i32
    %c0_i32_1 = arith.constant 0 : i32
    return %c0_i32, %c0_i32_0 : i32, i32
  }
  func.func @transform_6(%arg0: i32) -> (i32, i32) {
    %c0_i32 = arith.constant 0 : i32
    %c0_i32_0 = arith.constant 0 : i32
    %c0_i32_1 = arith.constant 0 : i32
    return %c0_i32, %c0_i32_0 : i32, i32
  }
  func.func @transform_7(%arg0: i32) -> (i32, i32) {
    %c0_i32 = arith.constant 0 : i32
    %c0_i32_0 = arith.constant 0 : i32
    %c0_i32_1 = arith.constant 0 : i32
    return %c0_i32, %c0_i32_0 : i32, i32
  }
  func.func @transform_8(%arg0: i32) -> (i32, i32, i32) {
    %c0_i32 = arith.constant 0 : i32
    %c0_i32_0 = arith.constant 0 : i32
    %c0_i32_1 = arith.constant 0 : i32
    return %arg0, %c0_i32, %c0_i32_0 : i32, i32, i32
  }
}

</mosaic_0001>

<llo_original>
// kernel: tsnet_forward.1
$region0: #{tsnet_forward.1}
  #allocation0 [shape = 'u32[]', space=smem, size = 0x4, offset = 0x4, fixed_abs, tag = 'smem constant byte address 0x4 - core index']
  #allocation1 [shape = 'u32[144,128]{1,0:T(1,128)}', space=vmem, size = 0x12000, scoped, tag = 'internal scratch']
  #allocation2 [shape = 'f32[72,128]{1,0:T(8,128)}', space=vmem, size = 0x9000, scoped, tag = 'scratch operand']
  #allocation3 [shape = 'f32[272,128]{1,0:T(8,128)}', space=vmem, size = 0x22000, scoped, tag = 'scratch operand']
  %s0 = inlined_call_operand.vmem [shape: f32[2,128,128], index: 0, kind: input, shape index: {}]
  %s1 = inlined_call_operand.vmem [shape: f32[2,4,128], index: 1, kind: input, shape index: {}]
  %s2 = inlined_call_operand.vmem [shape: f32[16,72], index: 2, kind: input, shape index: {}]
  %s3 = inlined_call_operand.vmem [shape: f32[24,272], index: 3, kind: input, shape index: {}]
  %s4 = inlined_call_operand.vmem [shape: f32[8,128], index: 4, kind: input, shape index: {}]
  %s5 = inlined_call_operand.vmem [shape: f32[128,8], index: 5, kind: input, shape index: {}]
  %s6 = inlined_call_operand.vmem [shape: f32[32,176], index: 6, kind: input, shape index: {}]
  %s7 = inlined_call_operand.vmem [shape: f32[32,1], index: 7, kind: input, shape index: {}]
  %s8 = inlined_call_operand.vmem [shape: f32[2,32,8], index: 8, kind: output, shape index: {}]
  %s9 = sld [smem:[#allocation0]]
  $region65: #{tsnet_forward.1} parent=0
    _
  %s11 = ssub.s32 1, %s9
  %s12 = scalar_select 0, %s11, %s9
  loop: start=0, step=1, limit=4
  $region2: #{tsnet_forward.1} parent=0 // loop_pre_header
    _
  $region3: #{tsnet_forward.1} parent=0 // loop_header
    %s14 = sphi 0, %s18
    %p15 = scmp.ge.s32.totalorder %s14, 4
    %s24 = sphi 0, %s26
    %s27 = sphi 0, %s24
    %s28 = sphi 0, %s27
    %s44 = sphi 0, %s28
    %s50 = sphi 0, %s52
    %s53 = sphi 0, %s50
    %s54 = sphi 0, %s53
    %s70 = sphi 0, %s54
    %s74 = sphi 0, %s74
    %s76 = sphi 0, %s74
    %s77 = sphi 0, %s76
    %s91 = sphi 0, %s77
    %s95 = sphi 0, %s95
    %s97 = sphi 0, %s95
    %s98 = sphi 0, %s97
    %s112 = sphi 0, %s98
    %s116 = sphi 0, %s116
    %s118 = sphi 0, %s116
    %s119 = sphi 0, %s118
    %s133 = sphi 0, %s119
    %s137 = sphi 0, %s137
    %s139 = sphi 0, %s137
    %s140 = sphi 0, %s139
    %s154 = sphi 0, %s140
    %s158 = sphi 0, %s158
    %s160 = sphi 0, %s158
    %s161 = sphi 0, %s160
    %s175 = sphi 0, %s161
    %s179 = sphi 0, %s179
    %s181 = sphi 0, %s179
    %s182 = sphi 0, %s181
    %s196 = sphi 0, %s182
    %s202 = sphi 0, %s204
    %s205 = sphi 0, %s202
    %s206 = sphi 0, %s205
    %s222 = sphi 0, %s206
  $region4: #{tsnet_forward.1} parent=0 // loop_header_branch
    %17 = sbr.rel (%p15) target = $region8
  $region5: #{tsnet_forward.1} parent=0 // loop_body
    %s19 = ssub.s32 %s14, 1
    %s20 = ssub.s32 %s14, 2
    %s21 = sadd.s32 %s14, 1
    %s22 = ssub.s32 %s14, %s21
    %p23 = scmp.eq.s32.totalorder %s22, 0
    %s25 = sadd.s32 %s24, 1
    %s26 = scalar_select %p23, %s24, %s25
    %p29 = pneg %p23
    %p30 = scmp.eq.s32.totalorder %s14, 1
    %p31 = por %p29, %p30
    %p32 = scmp.ne.s32.totalorder %s24, %s27
    %p33 = scmp.eq.s32.totalorder %s14, 0
    %p34 = por %p32, %p33
    %p35 = scmp.ne.s32.totalorder %s24, %s27
    %p36 = scmp.eq.s32.totalorder %s19, 1
    %p37 = por %p35, %p36
    %p38 = scmp.ne.s32.totalorder %s27, %s28
    %p39 = scmp.eq.s32.totalorder %s19, 0
    %p40 = por %p38, %p39
    %p41 = scmp.ne.s32.totalorder %s27, %s28
    %p42 = scmp.eq.s32.totalorder %s20, 1
    %p43 = por %p41, %p42
    %p45 = scmp.ne.s32.totalorder %s28, %s44
    %p46 = scmp.eq.s32.totalorder %s20, 0
    %p47 = por %p45, %p46
    %s48 = ssub.s32 %s14, %s21
    %p49 = scmp.eq.s32.totalorder %s48, 0
    %s51 = sadd.s32 %s50, 1
    %s52 = scalar_select %p49, %s50, %s51
    %p55 = pneg %p49
    %p56 = scmp.eq.s32.totalorder %s14, 1
    %p57 = por %p55, %p56
    %p58 = scmp.ne.s32.totalorder %s50, %s53
    %p59 = scmp.eq.s32.totalorder %s14, 0
    %p60 = por %p58, %p59
    %p61 = scmp.ne.s32.totalorder %s50, %s53
    %p62 = scmp.eq.s32.totalorder %s19, 1
    %p63 = por %p61, %p62
    %p64 = scmp.ne.s32.totalorder %s53, %s54
    %p65 = scmp.eq.s32.totalorder %s19, 0
    %p66 = por %p64, %p65
    %p67 = scmp.ne.s32.totalorder %s53, %s54
    %p68 = scmp.eq.s32.totalorder %s20, 1
    %p69 = por %p67, %p68
    %p71 = scmp.ne.s32.totalorder %s54, %s70
    %p72 = scmp.eq.s32.totalorder %s20, 0
    %p73 = por %p71, %p72
    %s75 = sadd.s32 %s74, 1
    %p78 = scmp.eq.s32.totalorder %s14, 1
    %p79 = scmp.ne.s32.totalorder %s74, %s76
    %p80 = scmp.eq.s32.totalorder %s14, 0
    %p81 = por %p79, %p80
    %p82 = scmp.ne.s32.totalorder %s74, %s76
    %p83 = scmp.eq.s32.totalorder %s19, 1
    %p84 = por %p82, %p83
    %p85 = scmp.ne.s32.totalorder %s76, %s77
    %p86 = scmp.eq.s32.totalorder %s19, 0
    %p87 = por %p85, %p86
    %p88 = scmp.ne.s32.totalorder %s76, %s77
    %p89 = scmp.eq.s32.totalorder %s20, 1
    %p90 = por %p88, %p89
    %p92 = scmp.ne.s32.totalorder %s77, %s91
    %p93 = scmp.eq.s32.totalorder %s20, 0
    %p94 = por %p92, %p93
    %s96 = sadd.s32 %s95, 1
    %p99 = scmp.eq.s32.totalorder %s14, 1
    %p100 = scmp.ne.s32.totalorder %s95, %s97
    %p101 = scmp.eq.s32.totalorder %s14, 0
    %p102 = por %p100, %p101
    %p103 = scmp.ne.s32.totalorder %s95, %s97
    %p104 = scmp.eq.s32.totalorder %s19, 1
    %p105 = por %p103, %p104
    %p106 = scmp.ne.s32.totalorder %s97, %s98
    %p107 = scmp.eq.s32.totalorder %s19, 0
    %p108 = por %p106, %p107
    %p109 = scmp.ne.s32.totalorder %s97, %s98
    %p110 = scmp.eq.s32.totalorder %s20, 1
    %p111 = por %p109, %p110
    %p113 = scmp.ne.s32.totalorder %s98, %s112
    %p114 = scmp.eq.s32.totalorder %s20, 0
    %p115 = por %p113, %p114
    %s117 = sadd.s32 %s116, 1
    %p120 = scmp.eq.s32.totalorder %s14, 1
    %p121 = scmp.ne.s32.totalorder %s116, %s118
    %p122 = scmp.eq.s32.totalorder %s14, 0
    %p123 = por %p121, %p122
    %p124 = scmp.ne.s32.totalorder %s116, %s118
    %p125 = scmp.eq.s32.totalorder %s19, 1
    %p126 = por %p124, %p125
    %p127 = scmp.ne.s32.totalorder %s118, %s119
    %p128 = scmp.eq.s32.totalorder %s19, 0
    %p129 = por %p127, %p128
    %p130 = scmp.ne.s32.totalorder %s118, %s119
    %p131 = scmp.eq.s32.totalorder %s20, 1
    %p132 = por %p130, %p131
    %p134 = scmp.ne.s32.totalorder %s119, %s133
    %p135 = scmp.eq.s32.totalorder %s20, 0
    %p136 = por %p134, %p135
    %s138 = sadd.s32 %s137, 1
    %p141 = scmp.eq.s32.totalorder %s14, 1
    %p142 = scmp.ne.s32.totalorder %s137, %s139
    %p143 = scmp.eq.s32.totalorder %s14, 0
    %p144 = por %p142, %p143
    %p145 = scmp.ne.s32.totalorder %s137, %s139
    %p146 = scmp.eq.s32.totalorder %s19, 1
    %p147 = por %p145, %p146
    %p148 = scmp.ne.s32.totalorder %s139, %s140
    %p149 = scmp.eq.s32.totalorder %s19, 0
    %p150 = por %p148, %p149
    %p151 = scmp.ne.s32.totalorder %s139, %s140
    %p152 = scmp.eq.s32.totalorder %s20, 1
    %p153 = por %p151, %p152
    %p155 = scmp.ne.s32.totalorder %s140, %s154
    %p156 = scmp.eq.s32.totalorder %s20, 0
    %p157 = por %p155, %p156
    %s159 = sadd.s32 %s158, 1
    %p162 = scmp.eq.s32.totalorder %s14, 1
    %p163 = scmp.ne.s32.totalorder %s158, %s160
    %p164 = scmp.eq.s32.totalorder %s14, 0
    %p165 = por %p163, %p164
    %p166 = scmp.ne.s32.totalorder %s158, %s160
    %p167 = scmp.eq.s32.totalorder %s19, 1
    %p168 = por %p166, %p167
    %p169 = scmp.ne.s32.totalorder %s160, %s161
    %p170 = scmp.eq.s32.totalorder %s19, 0
    %p171 = por %p169, %p170
    %p172 = scmp.ne.s32.totalorder %s160, %s161
    %p173 = scmp.eq.s32.totalorder %s20, 1
    %p174 = por %p172, %p173
    %p176 = scmp.ne.s32.totalorder %s161, %s175
    %p177 = scmp.eq.s32.totalorder %s20, 0
    %p178 = por %p176, %p177
    %s180 = sadd.s32 %s179, 1
    %p183 = scmp.eq.s32.totalorder %s14, 1
    %p184 = scmp.ne.s32.totalorder %s179, %s181
    %p185 = scmp.eq.s32.totalorder %s14, 0
    %p186 = por %p184, %p185
    %p187 = scmp.ne.s32.totalorder %s179, %s181
    %p188 = scmp.eq.s32.totalorder %s19, 1
    %p189 = por %p187, %p188
    %p190 = scmp.ne.s32.totalorder %s181, %s182
    %p191 = scmp.eq.s32.totalorder %s19, 0
    %p192 = por %p190, %p191
    %p193 = scmp.ne.s32.totalorder %s181, %s182
    %p194 = scmp.eq.s32.totalorder %s20, 1
    %p195 = por %p193, %p194
    %p197 = scmp.ne.s32.totalorder %s182, %s196
    %p198 = scmp.eq.s32.totalorder %s20, 0
    %p199 = por %p197, %p198
    %s200 = ssub.s32 %s14, %s21
    %p201 = scmp.eq.s32.totalorder %s200, 0
    %s203 = sadd.s32 %s202, 1
    %s204 = scalar_select %p201, %s202, %s203
    %p207 = pneg %p201
    %p208 = scmp.eq.s32.totalorder %s14, 1
    %p209 = por %p207, %p208
    %p210 = scmp.ne.s32.totalorder %s202, %s205
    %p211 = scmp.eq.s32.totalorder %s14, 0
    %p212 = por %p210, %p211
    %p213 = scmp.ne.s32.totalorder %s202, %s205
    %p214 = scmp.eq.s32.totalorder %s19, 1
    %p215 = por %p213, %p214
    %p216 = scmp.ne.s32.totalorder %s205, %s206
    %p217 = scmp.eq.s32.totalorder %s19, 0
    %p218 = por %p216, %p217
    %p219 = scmp.ne.s32.totalorder %s205, %s206
    %p220 = scmp.eq.s32.totalorder %s20, 1
    %p221 = por %p219, %p220
    %p223 = scmp.ne.s32.totalorder %s206, %s222
    %p224 = scmp.eq.s32.totalorder %s20, 0
    %p225 = por %p223, %p224
    %p226 = scmp.le.s32.totalorder 1, %s14
    %p227 = scmp.lt.s32.totalorder %s14, 3
    %p228 = pnand %p226, %p227
    %p229 = pneg %p228
    // Predicated region
    $region9: #{tsnet_forward.1} parent=5 // pred_check
      _
    $region10: #{tsnet_forward.1} parent=5 // pred_check_branch
      %231 = sbr.rel (%p228) target = $region12
    $region11: #{tsnet_forward.1} parent=5 // pred_region
      %s232 = ssub.s32 %s14, 1
      // Predicated region
      $region13: #{tsnet_forward.1} parent=11 // pred_check
        %p233 = pneg %p87
      $region14: #{tsnet_forward.1} parent=11 // pred_check_branch
        %235 = sbr.rel (%p233) target = $region16
      $region15: #{tsnet_forward.1} parent=11 // pred_region
        _
      $region16: #{tsnet_forward.1} parent=11 // pred_fallthru
        _
      // Predicated region
      $region17: #{tsnet_forward.1} parent=11 // pred_check
        %p236 = pneg %p108
      $region18: #{tsnet_forward.1} parent=11 // pred_check_branch
        %238 = sbr.rel (%p236) target = $region20
      $region19: #{tsnet_forward.1} parent=11 // pred_region
        _
      $region20: #{tsnet_forward.1} parent=11 // pred_fallthru
        _
      // Predicated region
      $region21: #{tsnet_forward.1} parent=11 // pred_check
        %p239 = pneg %p129
      $region22: #{tsnet_forward.1} parent=11 // pred_check_branch
        %241 = sbr.rel (%p239) target = $region24
      $region23: #{tsnet_forward.1} parent=11 // pred_region
        _
      $region24: #{tsnet_forward.1} parent=11 // pred_fallthru
        _
      // Predicated region
      $region25: #{tsnet_forward.1} parent=11 // pred_check
        %p242 = pneg %p150
      $region26: #{tsnet_forward.1} parent=11 // pred_check_branch
        %244 = sbr.rel (%p242) target = $region28
      $region27: #{tsnet_forward.1} parent=11 // pred_region
        _
      $region28: #{tsnet_forward.1} parent=11 // pred_fallthru
        _
      // Predicated region
      $region29: #{tsnet_forward.1} parent=11 // pred_check
        %p245 = pneg %p171
      $region30: #{tsnet_forward.1} parent=11 // pred_check_branch
        %247 = sbr.rel (%p245) target = $region32
      $region31: #{tsnet_forward.1} parent=11 // pred_region
        _
      $region32: #{tsnet_forward.1} parent=11 // pred_fallthru
        _
      // Predicated region
      $region33: #{tsnet_forward.1} parent=11 // pred_check
        %p248 = pneg %p192
      $region34: #{tsnet_forward.1} parent=11 // pred_check_branch
        %250 = sbr.rel (%p248) target = $region36
      $region35: #{tsnet_forward.1} parent=11 // pred_region
        _
      $region36: #{tsnet_forward.1} parent=11 // pred_fallthru
        _
    $region12: #{tsnet_forward.1} parent=5 // pred_fallthru
      _
    %p251 = scmp.lt.s32.totalorder %s14, 2
    // Predicated region
    $region37: #{tsnet_forward.1} parent=5 // pred_check
      %p252 = pneg %p251
    $region38: #{tsnet_forward.1} parent=5 // pred_check_branch
      %254 = sbr.rel (%p252) target = $region40
    $region39: #{tsnet_forward.1} parent=5 // pred_region
      // Predicated region
      $region41: #{tsnet_forward.1} parent=39 // pred_check
        %p255 = pneg %p34
      $region42: #{tsnet_forward.1} parent=39 // pred_check_branch
        %257 = sbr.rel (%p255) target = $region44
      $region43: #{tsnet_forward.1} parent=39 // pred_region
        %p258 = scmp.lt.s32.totalorder %s14, 1
        %s259 = scalar_select %p258, %s14, 1
        %s260 = smul.addr %s259, 16
        %s261 = smul.addr %s260, 8
        %s262 = scalar_lea.vmem %s0, %s261
      $region44: #{tsnet_forward.1} parent=39 // pred_fallthru
        _
      // Predicated region
      $region45: #{tsnet_forward.1} parent=39 // pred_check
        %p263 = pneg %p60
      $region46: #{tsnet_forward.1} parent=39 // pred_check_branch
        %265 = sbr.rel (%p263) target = $region48
      $region47: #{tsnet_forward.1} parent=39 // pred_region
        %p266 = scmp.lt.s32.totalorder %s14, 1
        %s267 = scalar_select %p266, %s14, 1
        %s268 = smul.addr %s267, 4
        %s269 = scalar_lea.vmem %s1, %s268
      $region48: #{tsnet_forward.1} parent=39 // pred_fallthru
        _
    $region40: #{tsnet_forward.1} parent=5 // pred_fallthru
      _
    %p270 = scmp.le.s32.totalorder 1, %s14
    %p271 = scmp.lt.s32.totalorder %s14, 3
    %p272 = pnand %p270, %p271
    %p273 = pneg %p272
    // Predicated region
    $region49: #{tsnet_forward.1} parent=5 // pred_check
      _
    $region50: #{tsnet_forward.1} parent=5 // pred_check_branch
      %275 = sbr.rel (%p272) target = $region52
    $region51: #{tsnet_forward.1} parent=5 // pred_region
      %s276 = ssub.s32 %s14, 1
      %p277 = scmp.lt.s32.totalorder %s19, 1
      %s278 = scalar_select %p277, %s19, 1
      %s279 = smul.addr %s278, 16
      %s280 = smul.addr %s279, 8
      %s281 = scalar_lea.vmem %s0, %s280
      %p282 = pneg %p40
      %p283 = pneg %p37
      %p284 = scmp.lt.s32.totalorder %s19, 1
      %s285 = scalar_select %p284, %s19, 1
      %s286 = smul.addr %s285, 4
      %s287 = scalar_lea.vmem %s1, %s286
      %p288 = pneg %p66
      %p289 = pneg %p63
      %p290 = pneg %p87
      %p291 = pneg %p84
      %p292 = pneg %p108
      %p293 = pneg %p105
      %p294 = pneg %p129
      %p295 = pneg %p126
      %p296 = pneg %p150
      %p297 = pneg %p147
      %p298 = pneg %p171
      %p299 = pneg %p168
      %p300 = pneg %p192
      %p301 = pneg %p189
      %p302 = pneg %p218
      %p303 = pneg %p215
      %p304 = scmp.lt.s32.totalorder %s19, 1
      %s305 = scalar_select %p304, %s19, 1
      %s306 = smul.addr %s305, 4
      %s307 = smul.addr %s306, 8
      %s308 = scalar_lea.vmem %s8, %s307
      %p309 = scmp.lt.s32.totalorder %s19, 1
      %s310 = scalar_select %p309, %s19, 1
      %s311 = smul.addr %s310, 16
      %s312 = smul.addr %s311, 8
      %s313 = scalar_lea.vmem %s0, %s312
      %p314 = scmp.lt.s32.totalorder %s19, 1
      %s315 = scalar_select %p314, %s19, 1
      %s316 = smul.addr %s315, 4
      %s317 = scalar_lea.vmem %s1, %s316
      %p318 = scmp.lt.s32.totalorder %s19, 1
      %s319 = scalar_select %p318, %s19, 1
      %s320 = smul.addr %s319, 4
      %s321 = smul.addr %s320, 8
      %s322 = scalar_lea.vmem %s8, %s321
      %v323 = vld [vmem:[%s313] sm:$0xff]
      %v324 = vld [vmem:[%s313 + $0x8] sm:$0xff]
      %v325 = vld [vmem:[%s313 + $0x10] sm:$0xff]
      %v326 = vld [vmem:[%s313 + $0x18] sm:$0xff]
      %v327 = vld [vmem:[%s313 + $0x20] sm:$0xff]
      %v328 = vld [vmem:[%s313 + $0x28] sm:$0xff]
      %v329 = vld [vmem:[%s313 + $0x30] sm:$0xff]
      %v330 = vld [vmem:[%s313 + $0x38] sm:$0xff]
      %v331 = vld [vmem:[%s313 + $0x40] sm:$0xff]
      %v332 = vld [vmem:[%s313 + $0x48] sm:$0xff]
      %v333 = vld [vmem:[%s313 + $0x50] sm:$0xff]
      %v334 = vld [vmem:[%s313 + $0x58] sm:$0xff]
      %v335 = vld [vmem:[%s313 + $0x60] sm:$0xff]
      %v336 = vld [vmem:[%s313 + $0x68] sm:$0xff]
      %v337 = vld [vmem:[%s313 + $0x70] sm:$0xff]
      %v338 = vld [vmem:[%s313 + $0x78] sm:$0xff]
      %v339 = vld [vmem:[%s317] sm:$0xf]
      %340 = vst [vmem:[#allocation2 + $0x44] sm:$0xf] 0.0
      %341 = vst [vmem:[#allocation2] sm:$0xf] %v339
      %342 = vmatprep.subr.mxu0 0.0
      %343 = vmatpush1.msra.mxu0 %v323
      %344 = vmatprep.subr.mxu0 0.0
      %345 = vmatpush1.msra.mxu0 %v324
      %346 = vmatprep.subr.mxu0 0.0
      %347 = vmatpush1.msra.mxu0 %v325
      %348 = vmatprep.subr.mxu0 0.0
      %349 = vmatpush1.msra.mxu0 %v326
      %350 = vmatprep.subr.mxu0 0.0
      %351 = vmatpush1.msra.mxu0 %v327
      %352 = vmatprep.subr.mxu0 0.0
      %353 = vmatpush1.msra.mxu0 %v328
      %354 = vmatprep.subr.mxu0 0.0
      %355 = vmatpush1.msra.mxu0 %v329
      %356 = vmatprep.subr.mxu0 0.0
      %357 = vmatpush1.msra.mxu0 %v330
      %358 = vmatprep.subr.mxu0 0.0
      %359 = vmatpush1.msra.mxu0 %v331
      %360 = vmatprep.subr.mxu0 0.0
      %361 = vmatpush1.msra.mxu0 %v332
      %362 = vmatprep.subr.mxu0 0.0
      %363 = vmatpush1.msra.mxu0 %v333
      %364 = vmatprep.subr.mxu0 0.0
      %365 = vmatpush1.msra.mxu0 %v334
      %366 = vmatprep.subr.mxu0 0.0
      %367 = vmatpush1.msra.mxu0 %v335
      %368 = vmatprep.subr.mxu0 0.0
      %369 = vmatpush1.msra.mxu0 %v336
      %370 = vmatprep.subr.mxu0 0.0
      %371 = vmatpush1.msra.mxu0 %v337
      %372 = vmatprep.subr.mxu0 0.0
      %373 = vmatpush1.msra.mxu0 %v338
      %374 = vmatprep.subr.mxu0 0.0
      %375 = vmatpush1.msra.mxu0 0.0
      %376 = vmatprep.subr.mxu0 0.0
      %377 = vmatpush1.msra.mxu0 0.0
      %378 = vmatprep.subr.mxu0 0.0
      %379 = vmatpush1.msra.mxu0 0.0
      %380 = vmatprep.subr.mxu0 0.0
      %381 = vmatpush1.msra.mxu0 0.0
      %382 = vmatprep.subr.mxu0 0.0
      %383 = vmatpush1.msra.mxu0 0.0
      %384 = vmatprep.subr.mxu0 0.0
      %385 = vmatpush1.msra.mxu0 0.0
      %386 = vmatprep.subr.mxu0 0.0
      %387 = vmatpush1.msra.mxu0 0.0
      %388 = vmatprep.subr.mxu0 0.0
      %389 = vmatpush1.msra.mxu0 0.0
      %390 = vmatprep.subr.mxu0 0.0
      %391 = vmatpush1.msra.mxu0 0.0
      %392 = vmatprep.subr.mxu0 0.0
      %393 = vmatpush1.msra.mxu0 0.0
      %394 = vmatprep.subr.mxu0 0.0
      %395 = vmatpush1.msra.mxu0 0.0
      %396 = vmatprep.subr.mxu0 0.0
      %397 = vmatpush1.msra.mxu0 0.0
      %398 = vmatprep.subr.mxu0 0.0
      %399 = vmatpush1.msra.mxu0 0.0
      %400 = vmatprep.subr.mxu0 0.0
      %401 = vmatpush1.msra.mxu0 0.0
      %402 = vmatprep.subr.mxu0 0.0
      %403 = vmatpush1.msra.mxu0 0.0
      %404 = vmatprep.subr.mxu0 0.0
      %405 = vmatpush1.msra.mxu0 0.0
      %406 = vmatprep.mubr.f32.mxu0 0.0
      %407 = vmatmul.mubr.f32.gmra.mrb[0].mxu0 %v339
      %v408 = vpop.f32.mrb[0].mxu0
      %v409 = vadd.f32 0.0, %v408
      %v410 = vpop.f32.mrb[0].mxu0
      %411 = vdwg.mxu0
      %412 = vst [vmem:[#allocation2 + $0x4] sm:$0xf] %v409
      %413 = vmatprep.subr.mxu0 0.0
      %414 = vmatpush1.msra.mxu0 %v323
      %415 = vmatprep.subr.mxu0 0.0
      %416 = vmatpush1.msra.mxu0 %v324
      %417 = vmatprep.subr.mxu0 0.0
      %418 = vmatpush1.msra.mxu0 %v325
      %419 = vmatprep.subr.mxu0 0.0
      %420 = vmatpush1.msra.mxu0 %v326
      %421 = vmatprep.subr.mxu0 0.0
      %422 = vmatpush1.msra.mxu0 %v327
      %423 = vmatprep.subr.mxu0 0.0
      %424 = vmatpush1.msra.mxu0 %v328
      %425 = vmatprep.subr.mxu0 0.0
      %426 = vmatpush1.msra.mxu0 %v329
      %427 = vmatprep.subr.mxu0 0.0
      %428 = vmatpush1.msra.mxu0 %v330
      %429 = vmatprep.subr.mxu0 0.0
      %430 = vmatpush1.msra.mxu0 %v331
      %431 = vmatprep.subr.mxu0 0.0
      %432 = vmatpush1.msra.mxu0 %v332
      %433 = vmatprep.subr.mxu0 0.0
      %434 = vmatpush1.msra.mxu0 %v333
      %435 = vmatprep.subr.mxu0 0.0
      %436 = vmatpush1.msra.mxu0 %v334
      %437 = vmatprep.subr.mxu0 0.0
      %438 = vmatpush1.msra.mxu0 %v335
      %439 = vmatprep.subr.mxu0 0.0
      %440 = vmatpush1.msra.mxu0 %v336
      %441 = vmatprep.subr.mxu0 0.0
      %442 = vmatpush1.msra.mxu0 %v337
      %443 = vmatprep.subr.mxu0 0.0
      %444 = vmatpush1.msra.mxu0 %v338
      %445 = vmatprep.subr.mxu0 0.0
      %446 = vmatpush1.msra.mxu0 0.0
      %447 = vmatprep.subr.mxu0 0.0
      %448 = vmatpush1.msra.mxu0 0.0
      %449 = vmatprep.subr.mxu0 0.0
      %450 = vmatpush1.msra.mxu0 0.0
      %451 = vmatprep.subr.mxu0 0.0
      %452 = vmatpush1.msra.mxu0 0.0
      %453 = vmatprep.subr.mxu0 0.0
      %454 = vmatpush1.msra.mxu0 0.0
      %455 = vmatprep.subr.mxu0 0.0
      %456 = vmatpush1.msra.mxu0 0.0
      %457 = vmatprep.subr.mxu0 0.0
      %458 = vmatpush1.msra.mxu0 0.0
      %459 = vmatprep.subr.mxu0 0.0
      %460 = vmatpush1.msra.mxu0 0.0
      %461 = vmatprep.subr.mxu0 0.0
      %462 = vmatpush1.msra.mxu0 0.0
      %463 = vmatprep.subr.mxu0 0.0
      %464 = vmatpush1.msra.mxu0 0.0
      %465 = vmatprep.subr.mxu0 0.0
      %466 = vmatpush1.msra.mxu0 0.0
      %467 = vmatprep.subr.mxu0 0.0
      %468 = vmatpush1.msra.mxu0 0.0
      %469 = vmatprep.subr.mxu0 0.0
      %470 = vmatpush1.msra.mxu0 0.0
      %471 = vmatprep.subr.mxu0 0.0
      %472 = vmatpush1.msra.mxu0 0.0
      %473 = vmatprep.subr.mxu0 0.0
      %474 = vmatpush1.msra.mxu0 0.0
      %475 = vmatprep.subr.mxu0 0.0
      %476 = vmatpush1.msra.mxu0 0.0
      %477 = vmatprep.mubr.f32.mxu0 0.0
      %478 = vmatmul.mubr.f32.gmra.mrb[0].mxu0 %v409
      %v479 = vpop.f32.mrb[0].mxu0
      %v480 = vadd.f32 0.0, %v479
      %v481 = vpop.f32.mrb[0].mxu0
      %482 = vdwg.mxu0
      %483 = vst [vmem:[#allocation2 + $0x8] sm:$0xf] %v480
      %484 = vmatprep.subr.mxu0 0.0
      %485 = vmatpush1.msra.mxu0 %v323
      %486 = vmatprep.subr.mxu0 0.0
      %487 = vmatpush1.msra.mxu0 %v324
      %488 = vmatprep.subr.mxu0 0.0
      %489 = vmatpush1.msra.mxu0 %v325
      %490 = vmatprep.subr.mxu0 0.0
      %491 = vmatpush1.msra.mxu0 %v326
      %492 = vmatprep.subr.mxu0 0.0
      %493 = vmatpush1.msra.mxu0 %v327
      %494 = vmatprep.subr.mxu0 0.0
      %495 = vmatpush1.msra.mxu0 %v328
      %496 = vmatprep.subr.mxu0 0.0
      %497 = vmatpush1.msra.mxu0 %v329
      %498 = vmatprep.subr.mxu0 0.0
      %499 = vmatpush1.msra.mxu0 %v330
      %500 = vmatprep.subr.mxu0 0.0
      %501 = vmatpush1.msra.mxu0 %v331
      %502 = vmatprep.subr.mxu0 0.0
      %503 = vmatpush1.msra.mxu0 %v332
      %504 = vmatprep.subr.mxu0 0.0
      %505 = vmatpush1.msra.mxu0 %v333
      %506 = vmatprep.subr.mxu0 0.0
      %507 = vmatpush1.msra.mxu0 %v334
      %508 = vmatprep.subr.mxu0 0.0
      %509 = vmatpush1.msra.mxu0 %v335
      %510 = vmatprep.subr.mxu0 0.0
      %511 = vmatpush1.msra.mxu0 %v336
      %512 = vmatprep.subr.mxu0 0.0
      %513 = vmatpush1.msra.mxu0 %v337
      %514 = vmatprep.subr.mxu0 0.0
      %515 = vmatpush1.msra.mxu0 %v338
      %516 = vmatprep.subr.mxu0 0.0
      %517 = vmatpush1.msra.mxu0 0.0
      %518 = vmatprep.subr.mxu0 0.0
      %519 = vmatpush1.msra.mxu0 0.0
      %520 = vmatprep.subr.mxu0 0.0
      %521 = vmatpush1.msra.mxu0 0.0
      %522 = vmatprep.subr.mxu0 0.0
      %523 = vmatpush1.msra.mxu0 0.0
      %524 = vmatprep.subr.mxu0 0.0
      %525 = vmatpush1.msra.mxu0 0.0
      %526 = vmatprep.subr.mxu0 0.0
      %527 = vmatpush1.msra.mxu0 0.0
      %528 = vmatprep.subr.mxu0 0.0
      %529 = vmatpush1.msra.mxu0 0.0
      %530 = vmatprep.subr.mxu0 0.0
      %531 = vmatpush1.msra.mxu0 0.0
      %532 = vmatprep.subr.mxu0 0.0
      %533 = vmatpush1.msra.mxu0 0.0
      %534 = vmatprep.subr.mxu0 0.0
      %535 = vmatpush1.msra.mxu0 0.0
      %536 = vmatprep.subr.mxu0 0.0
      %537 = vmatpush1.msra.mxu0 0.0
      %538 = vmatprep.subr.mxu0 0.0
      %539 = vmatpush1.msra.mxu0 0.0
      %540 = vmatprep.subr.mxu0 0.0
      %541 = vmatpush1.msra.mxu0 0.0
      %542 = vmatprep.subr.mxu0 0.0
      %543 = vmatpush1.msra.mxu0 0.0
      %544 = vmatprep.subr.mxu0 0.0
      %545 = vmatpush1.msra.mxu0 0.0
      %546 = vmatprep.subr.mxu0 0.0
      %547 = vmatpush1.msra.mxu0 0.0
      %548 = vmatprep.mubr.f32.mxu0 0.0
      %549 = vmatmul.mubr.f32.gmra.mrb[0].mxu0 %v480
      %v550 = vpop.f32.mrb[0].mxu0
      %v551 = vadd.f32 0.0, %v550
      %v552 = vpop.f32.mrb[0].mxu0
      %553 = vdwg.mxu0
      %554 = vst [vmem:[#allocation2 + $0xc] sm:$0xf] %v551
      %555 = vmatprep.subr.mxu0 0.0
      %556 = vmatpush1.msra.mxu0 %v323
      %557 = vmatprep.subr.mxu0 0.0
      %558 = vmatpush1.msra.mxu0 %v324
      %559 = vmatprep.subr.mxu0 0.0
      %560 = vmatpush1.msra.mxu0 %v325
      %561 = vmatprep.subr.mxu0 0.0
      %562 = vmatpush1.msra.mxu0 %v326
      %563 = vmatprep.subr.mxu0 0.0
      %564 = vmatpush1.msra.mxu0 %v327
      %565 = vmatprep.subr.mxu0 0.0
      %566 = vmatpush1.msra.mxu0 %v328
      %567 = vmatprep.subr.mxu0 0.0
      %568 = vmatpush1.msra.mxu0 %v329
      %569 = vmatprep.subr.mxu0 0.0
      %570 = vmatpush1.msra.mxu0 %v330
      %571 = vmatprep.subr.mxu0 0.0
      %572 = vmatpush1.msra.mxu0 %v331
      %573 = vmatprep.subr.mxu0 0.0
      %574 = vmatpush1.msra.mxu0 %v332
      %575 = vmatprep.subr.mxu0 0.0
      %576 = vmatpush1.msra.mxu0 %v333
      %577 = vmatprep.subr.mxu0 0.0
      %578 = vmatpush1.msra.mxu0 %v334
      %579 = vmatprep.subr.mxu0 0.0
      %580 = vmatpush1.msra.mxu0 %v335
      %581 = vmatprep.subr.mxu0 0.0
      %582 = vmatpush1.msra.mxu0 %v336
      %583 = vmatprep.subr.mxu0 0.0
      %584 = vmatpush1.msra.mxu0 %v337
      %585 = vmatprep.subr.mxu0 0.0
      %586 = vmatpush1.msra.mxu0 %v338
      %587 = vmatprep.subr.mxu0 0.0
      %588 = vmatpush1.msra.mxu0 0.0
      %589 = vmatprep.subr.mxu0 0.0
      %590 = vmatpush1.msra.mxu0 0.0
      %591 = vmatprep.subr.mxu0 0.0
      %592 = vmatpush1.msra.mxu0 0.0
      %593 = vmatprep.subr.mxu0 0.0
      %594 = vmatpush1.msra.mxu0 0.0
      %595 = vmatprep.subr.mxu0 0.0
      %596 = vmatpush1.msra.mxu0 0.0
      %597 = vmatprep.subr.mxu0 0.0
      %598 = vmatpush1.msra.mxu0 0.0
      %599 = vmatprep.subr.mxu0 0.0
      %600 = vmatpush1.msra.mxu0 0.0
      %601 = vmatprep.subr.mxu0 0.0
      %602 = vmatpush1.msra.mxu0 0.0
      %603 = vmatprep.subr.mxu0 0.0
      %604 = vmatpush1.msra.mxu0 0.0
      %605 = vmatprep.subr.mxu0 0.0
      %606 = vmatpush1.msra.mxu0 0.0
      %607 = vmatprep.subr.mxu0 0.0
      %608 = vmatpush1.msra.mxu0 0.0
      %609 = vmatprep.subr.mxu0 0.0
      %610 = vmatpush1.msra.mxu0 0.0
      %611 = vmatprep.subr.mxu0 0.0
      %612 = vmatpush1.msra.mxu0 0.0
      %613 = vmatprep.subr.mxu0 0.0
      %614 = vmatpush1.msra.mxu0 0.0
      %615 = vmatprep.subr.mxu0 0.0
      %616 = vmatpush1.msra.mxu0 0.0
      %617 = vmatprep.subr.mxu0 0.0
      %618 = vmatpush1.msra.mxu0 0.0
      %619 = vmatprep.mubr.f32.mxu0 0.0
      %620 = vmatmul.mubr.f32.gmra.mrb[0].mxu0 %v551
      %v621 = vpop.f32.mrb[0].mxu0
      %v622 = vadd.f32 0.0, %v621
      %v623 = vpop.f32.mrb[0].mxu0
      %624 = vdwg.mxu0
      %625 = vst [vmem:[#allocation2 + $0x10] sm:$0xf] %v622
      %626 = vmatprep.subr.mxu0 0.0
      %627 = vmatpush1.msra.mxu0 %v323
      %628 = vmatprep.subr.mxu0 0.0
      %629 = vmatpush1.msra.mxu0 %v324
      %630 = vmatprep.subr.mxu0 0.0
      %631 = vmatpush1.msra.mxu0 %v325
      %632 = vmatprep.subr.mxu0 0.0
      %633 = vmatpush1.msra.mxu0 %v326
      %634 = vmatprep.subr.mxu0 0.0
      %635 = vmatpush1.msra.mxu0 %v327
      %636 = vmatprep.subr.mxu0 0.0
      %637 = vmatpush1.msra.mxu0 %v328
      %638 = vmatprep.subr.mxu0 0.0
      %639 = vmatpush1.msra.mxu0 %v329
      %640 = vmatprep.subr.mxu0 0.0
      %641 = vmatpush1.msra.mxu0 %v330
      %642 = vmatprep.subr.mxu0 0.0
      %643 = vmatpush1.msra.mxu0 %v331
      %644 = vmatprep.subr.mxu0 0.0
      %645 = vmatpush1.msra.mxu0 %v332
      %646 = vmatprep.subr.mxu0 0.0
      %647 = vmatpush1.msra.mxu0 %v333
      %648 = vmatprep.subr.mxu0 0.0
      %649 = vmatpush1.msra.mxu0 %v334
      %650 = vmatprep.subr.mxu0 0.0
      %651 = vmatpush1.msra.mxu0 %v335
      %652 = vmatprep.subr.mxu0 0.0
      %653 = vmatpush1.msra.mxu0 %v336
      %654 = vmatprep.subr.mxu0 0.0
      %655 = vmatpush1.msra.mxu0 %v337
      %656 = vmatprep.subr.mxu0 0.0
      %657 = vmatpush1.msra.mxu0 %v338
      %658 = vmatprep.subr.mxu0 0.0
      %659 = vmatpush1.msra.mxu0 0.0
      %660 = vmatprep.subr.mxu0 0.0
      %661 = vmatpush1.msra.mxu0 0.0
      %662 = vmatprep.subr.mxu0 0.0
      %663 = vmatpush1.msra.mxu0 0.0
      %664 = vmatprep.subr.mxu0 0.0
      %665 = vmatpush1.msra.mxu0 0.0
      %666 = vmatprep.subr.mxu0 0.0
      %667 = vmatpush1.msra.mxu0 0.0
      %668 = vmatprep.subr.mxu0 0.0
      %669 = vmatpush1.msra.mxu0 0.0
      %670 = vmatprep.subr.mxu0 0.0
      %671 = vmatpush1.msra.mxu0 0.0
      %672 = vmatprep.subr.mxu0 0.0
      %673 = vmatpush1.msra.mxu0 0.0
      %674 = vmatprep.subr.mxu0 0.0
      %675 = vmatpush1.msra.mxu0 0.0
      %676 = vmatprep.subr.mxu0 0.0
      %677 = vmatpush1.msra.mxu0 0.0
      %678 = vmatprep.subr.mxu0 0.0
      %679 = vmatpush1.msra.mxu0 0.0
      %680 = vmatprep.subr.mxu0 0.0
      %681 = vmatpush1.msra.mxu0 0.0
      %682 = vmatprep.subr.mxu0 0.0
      %683 = vmatpush1.msra.mxu0 0.0
      %684 = vmatprep.subr.mxu0 0.0
      %685 = vmatpush1.msra.mxu0 0.0
      %686 = vmatprep.subr.mxu0 0.0
      %687 = vmatpush1.msra.mxu0 0.0
      %688 = vmatprep.subr.mxu0 0.0
      %689 = vmatpush1.msra.mxu0 0.0
      %690 = vmatprep.mubr.f32.mxu0 0.0
      %691 = vmatmul.mubr.f32.gmra.mrb[0].mxu0 %v622
      %v692 = vpop.f32.mrb[0].mxu0
      %v693 = vadd.f32 0.0, %v692
      %v694 = vpop.f32.mrb[0].mxu0
      %695 = vdwg.mxu0
      %696 = vst [vmem:[#allocation2 + $0x14] sm:$0xf] %v693
      %697 = vmatprep.subr.mxu0 0.0
      %698 = vmatpush1.msra.mxu0 %v323
      %699 = vmatprep.subr.mxu0 0.0
      %700 = vmatpush1.msra.mxu0 %v324
      %701 = vmatprep.subr.mxu0 0.0
      %702 = vmatpush1.msra.mxu0 %v325
      %703 = vmatprep.subr.mxu0 0.0
      %704 = vmatpush1.msra.mxu0 %v326
      %705 = vmatprep.subr.mxu0 0.0
      %706 = vmatpush1.msra.mxu0 %v327
      %707 = vmatprep.subr.mxu0 0.0
      %708 = vmatpush1.msra.mxu0 %v328
      %709 = vmatprep.subr.mxu0 0.0
      %710 = vmatpush1.msra.mxu0 %v329
      %711 = vmatprep.subr.mxu0 0.0
      %712 = vmatpush1.msra.mxu0 %v330
      %713 = vmatprep.subr.mxu0 0.0
      %714 = vmatpush1.msra.mxu0 %v331
      %715 = vmatprep.subr.mxu0 0.0
      %716 = vmatpush1.msra.mxu0 %v332
      %717 = vmatprep.subr.mxu0 0.0
      %718 = vmatpush1.msra.mxu0 %v333
      %719 = vmatprep.subr.mxu0 0.0
      %720 = vmatpush1.msra.mxu0 %v334
      %721 = vmatprep.subr.mxu0 0.0
      %722 = vmatpush1.msra.mxu0 %v335
      %723 = vmatprep.subr.mxu0 0.0
      %724 = vmatpush1.msra.mxu0 %v336
      %725 = vmatprep.subr.mxu0 0.0
      %726 = vmatpush1.msra.mxu0 %v337
      %727 = vmatprep.subr.mxu0 0.0
      %728 = vmatpush1.msra.mxu0 %v338
      %729 = vmatprep.subr.mxu0 0.0
      %730 = vmatpush1.msra.mxu0 0.0
      %731 = vmatprep.subr.mxu0 0.0
      %732 = vmatpush1.msra.mxu0 0.0
      %733 = vmatprep.subr.mxu0 0.0
      %734 = vmatpush1.msra.mxu0 0.0
      %735 = vmatprep.subr.mxu0 0.0
      %736 = vmatpush1.msra.mxu0 0.0
      %737 = vmatprep.subr.mxu0 0.0
      %738 = vmatpush1.msra.mxu0 0.0
      %739 = vmatprep.subr.mxu0 0.0
      %740 = vmatpush1.msra.mxu0 0.0
      %741 = vmatprep.subr.mxu0 0.0
      %742 = vmatpush1.msra.mxu0 0.0
      %743 = vmatprep.subr.mxu0 0.0
      %744 = vmatpush1.msra.mxu0 0.0
      %745 = vmatprep.subr.mxu0 0.0
      %746 = vmatpush1.msra.mxu0 0.0
      %747 = vmatprep.subr.mxu0 0.0
      %748 = vmatpush1.msra.mxu0 0.0
      %749 = vmatprep.subr.mxu0 0.0
      %750 = vmatpush1.msra.mxu0 0.0
      %751 = vmatprep.subr.mxu0 0.0
      %752 = vmatpush1.msra.mxu0 0.0
      %753 = vmatprep.subr.mxu0 0.0
      %754 = vmatpush1.msra.mxu0 0.0
      %755 = vmatprep.subr.mxu0 0.0
      %756 = vmatpush1.msra.mxu0 0.0
      %757 = vmatprep.subr.mxu0 0.0
      %758 = vmatpush1.msra.mxu0 0.0
      %759 = vmatprep.subr.mxu0 0.0
      %760 = vmatpush1.msra.mxu0 0.0
      %761 = vmatprep.mubr.f32.mxu0 0.0
      %762 = vmatmul.mubr.f32.gmra.mrb[0].mxu0 %v693
      %v763 = vpop.f32.mrb[0].mxu0
      %v764 = vadd.f32 0.0, %v763
      %v765 = vpop.f32.mrb[0].mxu0
      %766 = vdwg.mxu0
      %767 = vst [vmem:[#allocation2 + $0x18] sm:$0xf] %v764
      %768 = vmatprep.subr.mxu0 0.0
      %769 = vmatpush1.msra.mxu0 %v323
      %770 = vmatprep.subr.mxu0 0.0
      %771 = vmatpush1.msra.mxu0 %v324
      %772 = vmatprep.subr.mxu0 0.0
      %773 = vmatpush1.msra.mxu0 %v325
      %774 = vmatprep.subr.mxu0 0.0
      %775 = vmatpush1.msra.mxu0 %v326
      %776 = vmatprep.subr.mxu0 0.0
      %777 = vmatpush1.msra.mxu0 %v327
      %778 = vmatprep.subr.mxu0 0.0
      %779 = vmatpush1.msra.mxu0 %v328
      %780 = vmatprep.subr.mxu0 0.0
      %781 = vmatpush1.msra.mxu0 %v329
      %782 = vmatprep.subr.mxu0 0.0
      %783 = vmatpush1.msra.mxu0 %v330
      %784 = vmatprep.subr.mxu0 0.0
      %785 = vmatpush1.msra.mxu0 %v331
      %786 = vmatprep.subr.mxu0 0.0
      %787 = vmatpush1.msra.mxu0 %v332
      %788 = vmatprep.subr.mxu0 0.0
      %789 = vmatpush1.msra.mxu0 %v333
      %790 = vmatprep.subr.mxu0 0.0
      %791 = vmatpush1.msra.mxu0 %v334
      %792 = vmatprep.subr.mxu0 0.0
      %793 = vmatpush1.msra.mxu0 %v335
      %794 = vmatprep.subr.mxu0 0.0
      %795 = vmatpush1.msra.mxu0 %v336
      %796 = vmatprep.subr.mxu0 0.0
      %797 = vmatpush1.msra.mxu0 %v337
      %798 = vmatprep.subr.mxu0 0.0
      %799 = vmatpush1.msra.mxu0 %v338
      %800 = vmatprep.subr.mxu0 0.0
      %801 = vmatpush1.msra.mxu0 0.0
      %802 = vmatprep.subr.mxu0 0.0
      %803 = vmatpush1.msra.mxu0 0.0
      %804 = vmatprep.subr.mxu0 0.0
      %805 = vmatpush1.msra.mxu0 0.0
      %806 = vmatprep.subr.mxu0 0.0
      %807 = vmatpush1.msra.mxu0 0.0
      %808 = vmatprep.subr.mxu0 0.0
      %809 = vmatpush1.msra.mxu0 0.0
      %810 = vmatprep.subr.mxu0 0.0
      %811 = vmatpush1.msra.mxu0 0.0
      %812 = vmatprep.subr.mxu0 0.0
      %813 = vmatpush1.msra.mxu0 0.0
      %814 = vmatprep.subr.mxu0 0.0
      %815 = vmatpush1.msra.mxu0 0.0
      %816 = vmatprep.subr.mxu0 0.0
      %817 = vmatpush1.msra.mxu0 0.0
      %818 = vmatprep.subr.mxu0 0.0
      %819 = vmatpush1.msra.mxu0 0.0
      %820 = vmatprep.subr.mxu0 0.0
      %821 = vmatpush1.msra.mxu0 0.0
      %822 = vmatprep.subr.mxu0 0.0
      %823 = vmatpush1.msra.mxu0 0.0
      %824 = vmatprep.subr.mxu0 0.0
      %825 = vmatpush1.msra.mxu0 0.0
      %826 = vmatprep.subr.mxu0 0.0
      %827 = vmatpush1.msra.mxu0 0.0
      %828 = vmatprep.subr.mxu0 0.0
      %829 = vmatpush1.msra.mxu0 0.0
      %830 = vmatprep.subr.mxu0 0.0
      %831 = vmatpush1.msra.mxu0 0.0
      %832 = vmatprep.mubr.f32.mxu0 0.0
      %833 = vmatmul.mubr.f32.gmra.mrb[0].mxu0 %v764
      %v834 = vpop.f32.mrb[0].mxu0
      %v835 = vadd.f32 0.0, %v834
      %v836 = vpop.f32.mrb[0].mxu0
      %837 = vdwg.mxu0
      %838 = vst [vmem:[#allocation2 + $0x1c] sm:$0xf] %v835
      %839 = vmatprep.subr.mxu0 0.0
      %840 = vmatpush1.msra.mxu0 %v323
      %841 = vmatprep.subr.mxu0 0.0
      %842 = vmatpush1.msra.mxu0 %v324
      %843 = vmatprep.subr.mxu0 0.0
      %844 = vmatpush1.msra.mxu0 %v325
      %845 = vmatprep.subr.mxu0 0.0
      %846 = vmatpush1.msra.mxu0 %v326
      %847 = vmatprep.subr.mxu0 0.0
      %848 = vmatpush1.msra.mxu0 %v327
      %849 = vmatprep.subr.mxu0 0.0
      %850 = vmatpush1.msra.mxu0 %v328
      %851 = vmatprep.subr.mxu0 0.0
      %852 = vmatpush1.msra.mxu0 %v329
      %853 = vmatprep.subr.mxu0 0.0
      %854 = vmatpush1.msra.mxu0 %v330
      %855 = vmatprep.subr.mxu0 0.0
      %856 = vmatpush1.msra.mxu0 %v331
      %857 = vmatprep.subr.mxu0 0.0
      %858 = vmatpush1.msra.mxu0 %v332
      %859 = vmatprep.subr.mxu0 0.0
      %860 = vmatpush1.msra.mxu0 %v333
      %861 = vmatprep.subr.mxu0 0.0
      %862 = vmatpush1.msra.mxu0 %v334
      %863 = vmatprep.subr.mxu0 0.0
      %864 = vmatpush1.msra.mxu0 %v335
      %865 = vmatprep.subr.mxu0 0.0
      %866 = vmatpush1.msra.mxu0 %v336
      %867 = vmatprep.subr.mxu0 0.0
      %868 = vmatpush1.msra.mxu0 %v337
      %869 = vmatprep.subr.mxu0 0.0
      %870 = vmatpush1.msra.mxu0 %v338
      %871 = vmatprep.subr.mxu0 0.0
      %872 = vmatpush1.msra.mxu0 0.0
      %873 = vmatprep.subr.mxu0 0.0
      %874 = vmatpush1.msra.mxu0 0.0
      %875 = vmatprep.subr.mxu0 0.0
      %876 = vmatpush1.msra.mxu0 0.0
      %877 = vmatprep.subr.mxu0 0.0
      %878 = vmatpush1.msra.mxu0 0.0
      %879 = vmatprep.subr.mxu0 0.0
      %880 = vmatpush1.msra.mxu0 0.0
      %881 = vmatprep.subr.mxu0 0.0
      %882 = vmatpush1.msra.mxu0 0.0
      %883 = vmatprep.subr.mxu0 0.0
      %884 = vmatpush1.msra.mxu0 0.0
      %885 = vmatprep.subr.mxu0 0.0
      %886 = vmatpush1.msra.mxu0 0.0
      %887 = vmatprep.subr.mxu0 0.0
      %888 = vmatpush1.msra.mxu0 0.0
      %889 = vmatprep.subr.mxu0 0.0
      %890 = vmatpush1.msra.mxu0 0.0
      %891 = vmatprep.subr.mxu0 0.0
      %892 = vmatpush1.msra.mxu0 0.0
      %893 = vmatprep.subr.mxu0 0.0
      %894 = vmatpush1.msra.mxu0 0.0
      %895 = vmatprep.subr.mxu0 0.0
      %896 = vmatpush1.msra.mxu0 0.0
      %897 = vmatprep.subr.mxu0 0.0
      %898 = vmatpush1.msra.mxu0 0.0
      %899 = vmatprep.subr.mxu0 0.0
      %900 = vmatpush1.msra.mxu0 0.0
      %901 = vmatprep.subr.mxu0 0.0
      %902 = vmatpush1.msra.mxu0 0.0
      %903 = vmatprep.mubr.f32.mxu0 0.0
      %904 = vmatmul.mubr.f32.gmra.mrb[0].mxu0 %v835
      %v905 = vpop.f32.mrb[0].mxu0
      %v906 = vadd.f32 0.0, %v905
      %v907 = vpop.f32.mrb[0].mxu0
      %908 = vdwg.mxu0
      %909 = vst [vmem:[#allocation2 + $0x20] sm:$0xf] %v906
      %910 = vmatprep.subr.mxu0 0.0
      %911 = vmatpush1.msra.mxu0 %v323
      %912 = vmatprep.subr.mxu0 0.0
      %913 = vmatpush1.msra.mxu0 %v324
      %914 = vmatprep.subr.mxu0 0.0
      %915 = vmatpush1.msra.mxu0 %v325
      %916 = vmatprep.subr.mxu0 0.0
      %917 = vmatpush1.msra.mxu0 %v326
      %918 = vmatprep.subr.mxu0 0.0
      %919 = vmatpush1.msra.mxu0 %v327
      %920 = vmatprep.subr.mxu0 0.0
      %921 = vmatpush1.msra.mxu0 %v328
      %922 = vmatprep.subr.mxu0 0.0
      %923 = vmatpush1.msra.mxu0 %v329
      %924 = vmatprep.subr.mxu0 0.0
      %925 = vmatpush1.msra.mxu0 %v330
      %926 = vmatprep.subr.mxu0 0.0
      %927 = vmatpush1.msra.mxu0 %v331
      %928 = vmatprep.subr.mxu0 0.0
      %929 = vmatpush1.msra.mxu0 %v332
      %930 = vmatprep.subr.mxu0 0.0
      %931 = vmatpush1.msra.mxu0 %v333
      %932 = vmatprep.subr.mxu0 0.0
      %933 = vmatpush1.msra.mxu0 %v334
      %934 = vmatprep.subr.mxu0 0.0
      %935 = vmatpush1.msra.mxu0 %v335
      %936 = vmatprep.subr.mxu0 0.0
      %937 = vmatpush1.msra.mxu0 %v336
      %938 = vmatprep.subr.mxu0 0.0
      %939 = vmatpush1.msra.mxu0 %v337
      %940 = vmatprep.subr.mxu0 0.0
      %941 = vmatpush1.msra.mxu0 %v338
      %942 = vmatprep.subr.mxu0 0.0
      %943 = vmatpush1.msra.mxu0 0.0
      %944 = vmatprep.subr.mxu0 0.0
      %945 = vmatpush1.msra.mxu0 0.0
      %946 = vmatprep.subr.mxu0 0.0
      %947 = vmatpush1.msra.mxu0 0.0
      %948 = vmatprep.subr.mxu0 0.0
      %949 = vmatpush1.msra.mxu0 0.0
      %950 = vmatprep.subr.mxu0 0.0
      %951 = vmatpush1.msra.mxu0 0.0
      %952 = vmatprep.subr.mxu0 0.0
      %953 = vmatpush1.msra.mxu0 0.0
      %954 = vmatprep.subr.mxu0 0.0
      %955 = vmatpush1.msra.mxu0 0.0
      %956 = vmatprep.subr.mxu0 0.0
      %957 = vmatpush1.msra.mxu0 0.0
      %958 = vmatprep.subr.mxu0 0.0
      %959 = vmatpush1.msra.mxu0 0.0
      %960 = vmatprep.subr.mxu0 0.0
      %961 = vmatpush1.msra.mxu0 0.0
      %962 = vmatprep.subr.mxu0 0.0
      %963 = vmatpush1.msra.mxu0 0.0
      %964 = vmatprep.subr.mxu0 0.0
      %965 = vmatpush1.msra.mxu0 0.0
      %966 = vmatprep.subr.mxu0 0.0
      %967 = vmatpush1.msra.mxu0 0.0
      %968 = vmatprep.subr.mxu0 0.0
      %969 = vmatpush1.msra.mxu0 0.0
      %970 = vmatprep.subr.mxu0 0.0
      %971 = vmatpush1.msra.mxu0 0.0
      %972 = vmatprep.subr.mxu0 0.0
      %973 = vmatpush1.msra.mxu0 0.0
      %974 = vmatprep.mubr.f32.mxu0 0.0
      %975 = vmatmul.mubr.f32.gmra.mrb[0].mxu0 %v906
      %v976 = vpop.f32.mrb[0].mxu0
      %v977 = vadd.f32 0.0, %v976
      %v978 = vpop.f32.mrb[0].mxu0
      %979 = vdwg.mxu0
      %980 = vst [vmem:[#allocation2 + $0x24] sm:$0xf] %v977
      %981 = vmatprep.subr.mxu0 0.0
      %982 = vmatpush1.msra.mxu0 %v323
      %983 = vmatprep.subr.mxu0 0.0
      %984 = vmatpush1.msra.mxu0 %v324
      %985 = vmatprep.subr.mxu0 0.0
      %986 = vmatpush1.msra.mxu0 %v325
      %987 = vmatprep.subr.mxu0 0.0
      %988 = vmatpush1.msra.mxu0 %v326
      %989 = vmatprep.subr.mxu0 0.0
      %990 = vmatpush1.msra.mxu0 %v327
      %991 = vmatprep.subr.mxu0 0.0
      %992 = vmatpush1.msra.mxu0 %v328
      %993 = vmatprep.subr.mxu0 0.0
      %994 = vmatpush1.msra.mxu0 %v329
      %995 = vmatprep.subr.mxu0 0.0
      %996 = vmatpush1.msra.mxu0 %v330
      %997 = vmatprep.subr.mxu0 0.0
      %998 = vmatpush1.msra.mxu0 %v331
      %999 = vmatprep.subr.mxu0 0.0
      %1000 = vmatpush1.msra.mxu0 %v332
      %1001 = vmatprep.subr.mxu0 0.0
      %1002 = vmatpush1.msra.mxu0 %v333
      %1003 = vmatprep.subr.mxu0 0.0
      %1004 = vmatpush1.msra.mxu0 %v334
      %1005 = vmatprep.subr.mxu0 0.0
      %1006 = vmatpush1.msra.mxu0 %v335
      %1007 = vmatprep.subr.mxu0 0.0
      %1008 = vmatpush1.msra.mxu0 %v336
      %1009 = vmatprep.subr.mxu0 0.0
      %1010 = vmatpush1.msra.mxu0 %v337
      %1011 = vmatprep.subr.mxu0 0.0
      %1012 = vmatpush1.msra.mxu0 %v338
      %1013 = vmatprep.subr.mxu0 0.0
      %1014 = vmatpush1.msra.mxu0 0.0
      %1015 = vmatprep.subr.mxu0 0.0
      %1016 = vmatpush1.msra.mxu0 0.0
      %1017 = vmatprep.subr.mxu0 0.0
      %1018 = vmatpush1.msra.mxu0 0.0
      %1019 = vmatprep.subr.mxu0 0.0
      %1020 = vmatpush1.msra.mxu0 0.0
      %1021 = vmatprep.subr.mxu0 0.0
      %1022 = vmatpush1.msra.mxu0 0.0
      %1023 = vmatprep.subr.mxu0 0.0
      %1024 = vmatpush1.msra.mxu0 0.0
      %1025 = vmatprep.subr.mxu0 0.0
      %1026 = vmatpush1.msra.mxu0 0.0
      %1027 = vmatprep.subr.mxu0 0.0
      %1028 = vmatpush1.msra.mxu0 0.0
      %1029 = vmatprep.subr.mxu0 0.0
      %1030 = vmatpush1.msra.mxu0 0.0
      %1031 = vmatprep.subr.mxu0 0.0
      %1032 = vmatpush1.msra.mxu0 0.0
      %1033 = vmatprep.subr.mxu0 0.0
      %1034 = vmatpush1.msra.mxu0 0.0
      %1035 = vmatprep.subr.mxu0 0.0
      %1036 = vmatpush1.msra.mxu0 0.0
      %1037 = vmatprep.subr.mxu0 0.0
      %1038 = vmatpush1.msra.mxu0 0.0
      %1039 = vmatprep.subr.mxu0 0.0
      %1040 = vmatpush1.msra.mxu0 0.0
      %1041 = vmatprep.subr.mxu0 0.0
      %1042 = vmatpush1.msra.mxu0 0.0
      %1043 = vmatprep.subr.mxu0 0.0
      %1044 = vmatpush1.msra.mxu0 0.0
      %1045 = vmatprep.mubr.f32.mxu0 0.0
      %1046 = vmatmul.mubr.f32.gmra.mrb[0].mxu0 %v977
      %v1047 = vpop.f32.mrb[0].mxu0
      %v1048 = vadd.f32 0.0, %v1047
      %v1049 = vpop.f32.mrb[0].mxu0
      %1050 = vdwg.mxu0
      %1051 = vst [vmem:[#allocation2 + $0x28] sm:$0xf] %v1048
      %1052 = vmatprep.subr.mxu0 0.0
      %1053 = vmatpush1.msra.mxu0 %v323
      %1054 = vmatprep.subr.mxu0 0.0
      %1055 = vmatpush1.msra.mxu0 %v324
      %1056 = vmatprep.subr.mxu0 0.0
      %1057 = vmatpush1.msra.mxu0 %v325
      %1058 = vmatprep.subr.mxu0 0.0
      %1059 = vmatpush1.msra.mxu0 %v326
      %1060 = vmatprep.subr.mxu0 0.0
      %1061 = vmatpush1.msra.mxu0 %v327
      %1062 = vmatprep.subr.mxu0 0.0
      %1063 = vmatpush1.msra.mxu0 %v328
      %1064 = vmatprep.subr.mxu0 0.0
      %1065 = vmatpush1.msra.mxu0 %v329
      %1066 = vmatprep.subr.mxu0 0.0
      %1067 = vmatpush1.msra.mxu0 %v330
      %1068 = vmatprep.subr.mxu0 0.0
      %1069 = vmatpush1.msra.mxu0 %v331
      %1070 = vmatprep.subr.mxu0 0.0
      %1071 = vmatpush1.msra.mxu0 %v332
      %1072 = vmatprep.subr.mxu0 0.0
      %1073 = vmatpush1.msra.mxu0 %v333
      %1074 = vmatprep.subr.mxu0 0.0
      %1075 = vmatpush1.msra.mxu0 %v334
      %1076 = vmatprep.subr.mxu0 0.0
      %1077 = vmatpush1.msra.mxu0 %v335
      %1078 = vmatprep.subr.mxu0 0.0
      %1079 = vmatpush1.msra.mxu0 %v336
      %1080 = vmatprep.subr.mxu0 0.0
      %1081 = vmatpush1.msra.mxu0 %v337
      %1082 = vmatprep.subr.mxu0 0.0
      %1083 = vmatpush1.msra.mxu0 %v338
      %1084 = vmatprep.subr.mxu0 0.0
      %1085 = vmatpush1.msra.mxu0 0.0
      %1086 = vmatprep.subr.mxu0 0.0
      %1087 = vmatpush1.msra.mxu0 0.0
      %1088 = vmatprep.subr.mxu0 0.0
      %1089 = vmatpush1.msra.mxu0 0.0
      %1090 = vmatprep.subr.mxu0 0.0
      %1091 = vmatpush1.msra.mxu0 0.0
      %1092 = vmatprep.subr.mxu0 0.0
      %1093 = vmatpush1.msra.mxu0 0.0
      %1094 = vmatprep.subr.mxu0 0.0
      %1095 = vmatpush1.msra.mxu0 0.0
      %1096 = vmatprep.subr.mxu0 0.0
      %1097 = vmatpush1.msra.mxu0 0.0
      %1098 = vmatprep.subr.mxu0 0.0
      %1099 = vmatpush1.msra.mxu0 0.0
      %1100 = vmatprep.subr.mxu0 0.0
      %1101 = vmatpush1.msra.mxu0 0.0
      %1102 = vmatprep.subr.mxu0 0.0
      %1103 = vmatpush1.msra.mxu0 0.0
      %1104 = vmatprep.subr.mxu0 0.0
      %1105 = vmatpush1.msra.mxu0 0.0
      %1106 = vmatprep.subr.mxu0 0.0
      %1107 = vmatpush1.msra.mxu0 0.0
      %1108 = vmatprep.subr.mxu0 0.0
      %1109 = vmatpush1.msra.mxu0 0.0
      %1110 = vmatprep.subr.mxu0 0.0
      %1111 = vmatpush1.msra.mxu0 0.0
      %1112 = vmatprep.subr.mxu0 0.0
      %1113 = vmatpush1.msra.mxu0 0.0
      %1114 = vmatprep.subr.mxu0 0.0
      %1115 = vmatpush1.msra.mxu0 0.0
      %1116 = vmatprep.mubr.f32.mxu0 0.0
      %1117 = vmatmul.mubr.f32.gmra.mrb[0].mxu0 %v1048
      %v1118 = vpop.f32.mrb[0].mxu0
      %v1119 = vadd.f32 0.0, %v1118
      %v1120 = vpop.f32.mrb[0].mxu0
      %1121 = vdwg.mxu0
      %1122 = vst [vmem:[#allocation2 + $0x2c] sm:$0xf] %v1119
      %1123 = vmatprep.subr.mxu0 0.0
      %1124 = vmatpush1.msra.mxu0 %v323
      %1125 = vmatprep.subr.mxu0 0.0
      %1126 = vmatpush1.msra.mxu0 %v324
      %1127 = vmatprep.subr.mxu0 0.0
      %1128 = vmatpush1.msra.mxu0 %v325
      %1129 = vmatprep.subr.mxu0 0.0
      %1130 = vmatpush1.msra.mxu0 %v326
      %1131 = vmatprep.subr.mxu0 0.0
      %1132 = vmatpush1.msra.mxu0 %v327
      %1133 = vmatprep.subr.mxu0 0.0
      %1134 = vmatpush1.msra.mxu0 %v328
      %1135 = vmatprep.subr.mxu0 0.0
      %1136 = vmatpush1.msra.mxu0 %v329
      %1137 = vmatprep.subr.mxu0 0.0
      %1138 = vmatpush1.msra.mxu0 %v330
      %1139 = vmatprep.subr.mxu0 0.0
      %1140 = vmatpush1.msra.mxu0 %v331
      %1141 = vmatprep.subr.mxu0 0.0
      %1142 = vmatpush1.msra.mxu0 %v332
      %1143 = vmatprep.subr.mxu0 0.0
      %1144 = vmatpush1.msra.mxu0 %v333
      %1145 = vmatprep.subr.mxu0 0.0
      %1146 = vmatpush1.msra.mxu0 %v334
      %1147 = vmatprep.subr.mxu0 0.0
      %1148 = vmatpush1.msra.mxu0 %v335
      %1149 = vmatprep.subr.mxu0 0.0
      %1150 = vmatpush1.msra.mxu0 %v336
      %1151 = vmatprep.subr.mxu0 0.0
      %1152 = vmatpush1.msra.mxu0 %v337
      %1153 = vmatprep.subr.mxu0 0.0
      %1154 = vmatpush1.msra.mxu0 %v338
      %1155 = vmatprep.subr.mxu0 0.0
      %1156 = vmatpush1.msra.mxu0 0.0
      %1157 = vmatprep.subr.mxu0 0.0
      %1158 = vmatpush1.msra.mxu0 0.0
      %1159 = vmatprep.subr.mxu0 0.0
      %1160 = vmatpush1.msra.mxu0 0.0
      %1161 = vmatprep.subr.mxu0 0.0
      %1162 = vmatpush1.msra.mxu0 0.0
      %1163 = vmatprep.subr.mxu0 0.0
      %1164 = vmatpush1.msra.mxu0 0.0
      %1165 = vmatprep.subr.mxu0 0.0
      %1166 = vmatpush1.msra.mxu0 0.0
      %1167 = vmatprep.subr.mxu0 0.0
      %1168 = vmatpush1.msra.mxu0 0.0
      %1169 = vmatprep.subr.mxu0 0.0
      %1170 = vmatpush1.msra.mxu0 0.0
      %1171 = vmatprep.subr.mxu0 0.0
      %1172 = vmatpush1.msra.mxu0 0.0
      %1173 = vmatprep.subr.mxu0 0.0
      %1174 = vmatpush1.msra.mxu0 0.0
      %1175 = vmatprep.subr.mxu0 0.0
      %1176 = vmatpush1.msra.mxu0 0.0
      %1177 = vmatprep.subr.mxu0 0.0
      %1178 = vmatpush1.msra.mxu0 0.0
      %1179 = vmatprep.subr.mxu0 0.0
      %1180 = vmatpush1.msra.mxu0 0.0
      %1181 = vmatprep.subr.mxu0 0.0
      %1182 = vmatpush1.msra.mxu0 0.0
      %1183 = vmatprep.subr.mxu0 0.0
      %1184 = vmatpush1.msra.mxu0 0.0
      %1185 = vmatprep.subr.mxu0 0.0
      %1186 = vmatpush1.msra.mxu0 0.0
      %1187 = vmatprep.mubr.f32.mxu0 0.0
      %1188 = vmatmul.mubr.f32.gmra.mrb[0].mxu0 %v1119
      %v1189 = vpop.f32.mrb[0].mxu0
      %v1190 = vadd.f32 0.0, %v1189
      %v1191 = vpop.f32.mrb[0].mxu0
      %1192 = vdwg.mxu0
      %1193 = vst [vmem:[#allocation2 + $0x30] sm:$0xf] %v1190
      %1194 = vmatprep.subr.mxu0 0.0
      %1195 = vmatpush1.msra.mxu0 %v323
      %1196 = vmatprep.subr.mxu0 0.0
      %1197 = vmatpush1.msra.mxu0 %v324
      %1198 = vmatprep.subr.mxu0 0.0
      %1199 = vmatpush1.msra.mxu0 %v325
      %1200 = vmatprep.subr.mxu0 0.0
      %1201 = vmatpush1.msra.mxu0 %v326
      %1202 = vmatprep.subr.mxu0 0.0
      %1203 = vmatpush1.msra.mxu0 %v327
      %1204 = vmatprep.subr.mxu0 0.0
      %1205 = vmatpush1.msra.mxu0 %v328
      %1206 = vmatprep.subr.mxu0 0.0
      %1207 = vmatpush1.msra.mxu0 %v329
      %1208 = vmatprep.subr.mxu0 0.0
      %1209 = vmatpush1.msra.mxu0 %v330
      %1210 = vmatprep.subr.mxu0 0.0
      %1211 = vmatpush1.msra.mxu0 %v331
      %1212 = vmatprep.subr.mxu0 0.0
      %1213 = vmatpush1.msra.mxu0 %v332
      %1214 = vmatprep.subr.mxu0 0.0
      %1215 = vmatpush1.msra.mxu0 %v333
      %1216 = vmatprep.subr.mxu0 0.0
      %1217 = vmatpush1.msra.mxu0 %v334
      %1218 = vmatprep.subr.mxu0 0.0
      %1219 = vmatpush1.msra.mxu0 %v335
      %1220 = vmatprep.subr.mxu0 0.0
      %1221 = vmatpush1.msra.mxu0 %v336
      %1222 = vmatprep.subr.mxu0 0.0
      %1223 = vmatpush1.msra.mxu0 %v337
      %1224 = vmatprep.subr.mxu0 0.0
      %1225 = vmatpush1.msra.mxu0 %v338
      %1226 = vmatprep.subr.mxu0 0.0
      %1227 = vmatpush1.msra.mxu0 0.0
      %1228 = vmatprep.subr.mxu0 0.0
      %1229 = vmatpush1.msra.mxu0 0.0
      %1230 = vmatprep.subr.mxu0 0.0
      %1231 = vmatpush1.msra.mxu0 0.0
      %1232 = vmatprep.subr.mxu0 0.0
      %1233 = vmatpush1.msra.mxu0 0.0
      %1234 = vmatprep.subr.mxu0 0.0
      %1235 = vmatpush1.msra.mxu0 0.0
      %1236 = vmatprep.subr.mxu0 0.0
      %1237 = vmatpush1.msra.mxu0 0.0
      %1238 = vmatprep.subr.mxu0 0.0
      %1239 = vmatpush1.msra.mxu0 0.0
      %1240 = vmatprep.subr.mxu0 0.0
      %1241 = vmatpush1.msra.mxu0 0.0
      %1242 = vmatprep.subr.mxu0 0.0
      %1243 = vmatpush1.msra.mxu0 0.0
      %1244 = vmatprep.subr.mxu0 0.0
      %1245 = vmatpush1.msra.mxu0 0.0
      %1246 = vmatprep.subr.mxu0 0.0
      %1247 = vmatpush1.msra.mxu0 0.0
      %1248 = vmatprep.subr.mxu0 0.0
      %1249 = vmatpush1.msra.mxu0 0.0
      %1250 = vmatprep.subr.mxu0 0.0
      %1251 = vmatpush1.msra.mxu0 0.0
      %1252 = vmatprep.subr.mxu0 0.0
      %1253 = vmatpush1.msra.mxu0 0.0
      %1254 = vmatprep.subr.mxu0 0.0
      %1255 = vmatpush1.msra.mxu0 0.0
      %1256 = vmatprep.subr.mxu0 0.0
      %1257 = vmatpush1.msra.mxu0 0.0
      %1258 = vmatprep.mubr.f32.mxu0 0.0
      %1259 = vmatmul.mubr.f32.gmra.mrb[0].mxu0 %v1190
      %v1260 = vpop.f32.mrb[0].mxu0
      %v1261 = vadd.f32 0.0, %v1260
      %v1262 = vpop.f32.mrb[0].mxu0
      %1263 = vdwg.mxu0
      %1264 = vst [vmem:[#allocation2 + $0x34] sm:$0xf] %v1261
      %1265 = vmatprep.subr.mxu0 0.0
      %1266 = vmatpush1.msra.mxu0 %v323
      %1267 = vmatprep.subr.mxu0 0.0
      %1268 = vmatpush1.msra.mxu0 %v324
      %1269 = vmatprep.subr.mxu0 0.0
      %1270 = vmatpush1.msra.mxu0 %v325
      %1271 = vmatprep.subr.mxu0 0.0
      %1272 = vmatpush1.msra.mxu0 %v326
      %1273 = vmatprep.subr.mxu0 0.0
      %1274 = vmatpush1.msra.mxu0 %v327
      %1275 = vmatprep.subr.mxu0 0.0
      %1276 = vmatpush1.msra.mxu0 %v328
      %1277 = vmatprep.subr.mxu0 0.0
      %1278 = vmatpush1.msra.mxu0 %v329
      %1279 = vmatprep.subr.mxu0 0.0
      %1280 = vmatpush1.msra.mxu0 %v330
      %1281 = vmatprep.subr.mxu0 0.0
      %1282 = vmatpush1.msra.mxu0 %v331
      %1283 = vmatprep.subr.mxu0 0.0
      %1284 = vmatpush1.msra.mxu0 %v332
      %1285 = vmatprep.subr.mxu0 0.0
      %1286 = vmatpush1.msra.mxu0 %v333
      %1287 = vmatprep.subr.mxu0 0.0
      %1288 = vmatpush1.msra.mxu0 %v334
      %1289 = vmatprep.subr.mxu0 0.0
      %1290 = vmatpush1.msra.mxu0 %v335
      %1291 = vmatprep.subr.mxu0 0.0
      %1292 = vmatpush1.msra.mxu0 %v336
      %1293 = vmatprep.subr.mxu0 0.0
      %1294 = vmatpush1.msra.mxu0 %v337
      %1295 = vmatprep.subr.mxu0 0.0
      %1296 = vmatpush1.msra.mxu0 %v338
      %1297 = vmatprep.subr.mxu0 0.0
      %1298 = vmatpush1.msra.mxu0 0.0
      %1299 = vmatprep.subr.mxu0 0.0
      %1300 = vmatpush1.msra.mxu0 0.0
      %1301 = vmatprep.subr.mxu0 0.0
      %1302 = vmatpush1.msra.mxu0 0.0
      %1303 = vmatprep.subr.mxu0 0.0
      %1304 = vmatpush1.msra.mxu0 0.0
      %1305 = vmatprep.subr.mxu0 0.0
      %1306 = vmatpush1.msra.mxu0 0.0
      %1307 = vmatprep.subr.mxu0 0.0
      %1308 = vmatpush1.msra.mxu0 0.0
      %1309 = vmatprep.subr.mxu0 0.0
      %1310 = vmatpush1.msra.mxu0 0.0
      %1311 = vmatprep.subr.mxu0 0.0
      %1312 = vmatpush1.msra.mxu0 0.0
      %1313 = vmatprep.subr.mxu0 0.0
      %1314 = vmatpush1.msra.mxu0 0.0
      %1315 = vmatprep.subr.mxu0 0.0
      %1316 = vmatpush1.msra.mxu0 0.0
      %1317 = vmatprep.subr.mxu0 0.0
      %1318 = vmatpush1.msra.mxu0 0.0
      %1319 = vmatprep.subr.mxu0 0.0
      %1320 = vmatpush1.msra.mxu0 0.0
      %1321 = vmatprep.subr.mxu0 0.0
      %1322 = vmatpush1.msra.mxu0 0.0
      %1323 = vmatprep.subr.mxu0 0.0
      %1324 = vmatpush1.msra.mxu0 0.0
      %1325 = vmatprep.subr.mxu0 0.0
      %1326 = vmatpush1.msra.mxu0 0.0
      %1327 = vmatprep.subr.mxu0 0.0
      %1328 = vmatpush1.msra.mxu0 0.0
      %1329 = vmatprep.mubr.f32.mxu0 0.0
      %1330 = vmatmul.mubr.f32.gmra.mrb[0].mxu0 %v1261
      %v1331 = vpop.f32.mrb[0].mxu0
      %v1332 = vadd.f32 0.0, %v1331
      %v1333 = vpop.f32.mrb[0].mxu0
      %1334 = vdwg.mxu0
      %1335 = vst [vmem:[#allocation2 + $0x38] sm:$0xf] %v1332
      %1336 = vmatprep.subr.mxu0 0.0
      %1337 = vmatpush1.msra.mxu0 %v323
      %1338 = vmatprep.subr.mxu0 0.0
      %1339 = vmatpush1.msra.mxu0 %v324
      %1340 = vmatprep.subr.mxu0 0.0
      %1341 = vmatpush1.msra.mxu0 %v325
      %1342 = vmatprep.subr.mxu0 0.0
      %1343 = vmatpush1.msra.mxu0 %v326
      %1344 = vmatprep.subr.mxu0 0.0
      %1345 = vmatpush1.msra.mxu0 %v327
      %1346 = vmatprep.subr.mxu0 0.0
      %1347 = vmatpush1.msra.mxu0 %v328
      %1348 = vmatprep.subr.mxu0 0.0
      %1349 = vmatpush1.msra.mxu0 %v329
      %1350 = vmatprep.subr.mxu0 0.0
      %1351 = vmatpush1.msra.mxu0 %v330
      %1352 = vmatprep.subr.mxu0 0.0
      %1353 = vmatpush1.msra.mxu0 %v331
      %1354 = vmatprep.subr.mxu0 0.0
      %1355 = vmatpush1.msra.mxu0 %v332
      %1356 = vmatprep.subr.mxu0 0.0
      %1357 = vmatpush1.msra.mxu0 %v333
      %1358 = vmatprep.subr.mxu0 0.0
      %1359 = vmatpush1.msra.mxu0 %v334
      %1360 = vmatprep.subr.mxu0 0.0
      %1361 = vmatpush1.msra.mxu0 %v335
      %1362 = vmatprep.subr.mxu0 0.0
      %1363 = vmatpush1.msra.mxu0 %v336
      %1364 = vmatprep.subr.mxu0 0.0
      %1365 = vmatpush1.msra.mxu0 %v337
      %1366 = vmatprep.subr.mxu0 0.0
      %1367 = vmatpush1.msra.mxu0 %v338
      %1368 = vmatprep.subr.mxu0 0.0
      %1369 = vmatpush1.msra.mxu0 0.0
      %1370 = vmatprep.subr.mxu0 0.0
      %1371 = vmatpush1.msra.mxu0 0.0
      %1372 = vmatprep.subr.mxu0 0.0
      %1373 = vmatpush1.msra.mxu0 0.0
      %1374 = vmatprep.subr.mxu0 0.0
      %1375 = vmatpush1.msra.mxu0 0.0
      %1376 = vmatprep.subr.mxu0 0.0
      %1377 = vmatpush1.msra.mxu0 0.0
      %1378 = vmatprep.subr.mxu0 0.0
      %1379 = vmatpush1.msra.mxu0 0.0
      %1380 = vmatprep.subr.mxu0 0.0
      %1381 = vmatpush1.msra.mxu0 0.0
      %1382 = vmatprep.subr.mxu0 0.0
      %1383 = vmatpush1.msra.mxu0 0.0
      %1384 = vmatprep.subr.mxu0 0.0
      %1385 = vmatpush1.msra.mxu0 0.0
      %1386 = vmatprep.subr.mxu0 0.0
      %1387 = vmatpush1.msra.mxu0 0.0
      %1388 = vmatprep.subr.mxu0 0.0
      %1389 = vmatpush1.msra.mxu0 0.0
      %1390 = vmatprep.subr.mxu0 0.0
      %1391 = vmatpush1.msra.mxu0 0.0
      %1392 = vmatprep.subr.mxu0 0.0
      %1393 = vmatpush1.msra.mxu0 0.0
      %1394 = vmatprep.subr.mxu0 0.0
      %1395 = vmatpush1.msra.mxu0 0.0
      %1396 = vmatprep.subr.mxu0 0.0
      %1397 = vmatpush1.msra.mxu0 0.0
      %1398 = vmatprep.subr.mxu0 0.0
      %1399 = vmatpush1.msra.mxu0 0.0
      %1400 = vmatprep.mubr.f32.mxu0 0.0
      %1401 = vmatmul.mubr.f32.gmra.mrb[0].mxu0 %v1332
      %v1402 = vpop.f32.mrb[0].mxu0
      %v1403 = vadd.f32 0.0, %v1402
      %v1404 = vpop.f32.mrb[0].mxu0
      %1405 = vdwg.mxu0
      %1406 = vst [vmem:[#allocation2 + $0x3c] sm:$0xf] %v1403
      %1407 = vmatprep.subr.mxu0 0.0
      %1408 = vmatpush1.msra.mxu0 %v323
      %1409 = vmatprep.subr.mxu0 0.0
      %1410 = vmatpush1.msra.mxu0 %v324
      %1411 = vmatprep.subr.mxu0 0.0
      %1412 = vmatpush1.msra.mxu0 %v325
      %1413 = vmatprep.subr.mxu0 0.0
      %1414 = vmatpush1.msra.mxu0 %v326
      %1415 = vmatprep.subr.mxu0 0.0
      %1416 = vmatpush1.msra.mxu0 %v327
      %1417 = vmatprep.subr.mxu0 0.0
      %1418 = vmatpush1.msra.mxu0 %v328
      %1419 = vmatprep.subr.mxu0 0.0
      %1420 = vmatpush1.msra.mxu0 %v329
      %1421 = vmatprep.subr.mxu0 0.0
      %1422 = vmatpush1.msra.mxu0 %v330
      %1423 = vmatprep.subr.mxu0 0.0
      %1424 = vmatpush1.msra.mxu0 %v331
      %1425 = vmatprep.subr.mxu0 0.0
      %1426 = vmatpush1.msra.mxu0 %v332
      %1427 = vmatprep.subr.mxu0 0.0
      %1428 = vmatpush1.msra.mxu0 %v333
      %1429 = vmatprep.subr.mxu0 0.0
      %1430 = vmatpush1.msra.mxu0 %v334
      %1431 = vmatprep.subr.mxu0 0.0
      %1432 = vmatpush1.msra.mxu0 %v335
      %1433 = vmatprep.subr.mxu0 0.0
      %1434 = vmatpush1.msra.mxu0 %v336
      %1435 = vmatprep.subr.mxu0 0.0
      %1436 = vmatpush1.msra.mxu0 %v337
      %1437 = vmatprep.subr.mxu0 0.0
      %1438 = vmatpush1.msra.mxu0 %v338
      %1439 = vmatprep.subr.mxu0 0.0
      %1440 = vmatpush1.msra.mxu0 0.0
      %1441 = vmatprep.subr.mxu0 0.0
      %1442 = vmatpush1.msra.mxu0 0.0
      %1443 = vmatprep.subr.mxu0 0.0
      %1444 = vmatpush1.msra.mxu0 0.0
      %1445 = vmatprep.subr.mxu0 0.0
      %1446 = vmatpush1.msra.mxu0 0.0
      %1447 = vmatprep.subr.mxu0 0.0
      %1448 = vmatpush1.msra.mxu0 0.0
      %1449 = vmatprep.subr.mxu0 0.0
      %1450 = vmatpush1.msra.mxu0 0.0
      %1451 = vmatprep.subr.mxu0 0.0
      %1452 = vmatpush1.msra.mxu0 0.0
      %1453 = vmatprep.subr.mxu0 0.0
      %1454 = vmatpush1.msra.mxu0 0.0
      %1455 = vmatprep.subr.mxu0 0.0
      %1456 = vmatpush1.msra.mxu0 0.0
      %1457 = vmatprep.subr.mxu0 0.0
      %1458 = vmatpush1.msra.mxu0 0.0
      %1459 = vmatprep.subr.mxu0 0.0
      %1460 = vmatpush1.msra.mxu0 0.0
      %1461 = vmatprep.subr.mxu0 0.0
      %1462 = vmatpush1.msra.mxu0 0.0
      %1463 = vmatprep.subr.mxu0 0.0
      %1464 = vmatpush1.msra.mxu0 0.0
      %1465 = vmatprep.subr.mxu0 0.0
      %1466 = vmatpush1.msra.mxu0 0.0
      %1467 = vmatprep.subr.mxu0 0.0
      %1468 = vmatpush1.msra.mxu0 0.0
      %1469 = vmatprep.subr.mxu0 0.0
      %1470 = vmatpush1.msra.mxu0 0.0
      %1471 = vmatprep.mubr.f32.mxu0 0.0
      %1472 = vmatmul.mubr.f32.gmra.mrb[0].mxu0 %v1403
      %v1473 = vpop.f32.mrb[0].mxu0
      %v1474 = vadd.f32 0.0, %v1473
      %v1475 = vpop.f32.mrb[0].mxu0
      %1476 = vdwg.mxu0
      %1477 = vst [vmem:[#allocation2 + $0x40] sm:$0xf] %v1474
      %v1478 = vld [vmem:[%s2] sm:$0xff]
      %v1479 = vld [vmem:[%s2 + $0x8] sm:$0xff]
      %v1480 = vld [vmem:[#allocation2] sm:$0xff]
      %v1481 = vld [vmem:[#allocation2 + $0x8] sm:$0xff]
      %v1482 = vld [vmem:[#allocation2 + $0x10] sm:$0xff]
      %v1483 = vld [vmem:[#allocation2 + $0x18] sm:$0xff]
      %v1484 = vld [vmem:[#allocation2 + $0x20] sm:$0xff]
      %v1485 = vld [vmem:[#allocation2 + $0x28] sm:$0xff]
      %v1486 = vld [vmem:[#allocation2 + $0x30] sm:$0xff]
      %v1487 = vld [vmem:[#allocation2 + $0x38] sm:$0xff]
      %v1488 = vld [vmem:[#allocation2 + $0x40] sm:$0xff]
      %vm1489 = vcmask 588800
      %v1491 = vsel %vm1489, %v1478, 0
      %v1494 = vsel %vm1489, %v1479, 0
      %1496 = vmatprep.subr.mxu0 0.0
      %1497 = vmatpush1.msra.mxu0 %v1480
      %1498 = vmatprep.subr.mxu0 0.0
      %1499 = vmatpush1.msra.mxu0 %v1481
      %1500 = vmatprep.subr.mxu0 0.0
      %1501 = vmatpush1.msra.mxu0 %v1482
      %1502 = vmatprep.subr.mxu0 0.0
      %1503 = vmatpush1.msra.mxu0 %v1483
      %1504 = vmatprep.subr.mxu0 0.0
      %1505 = vmatpush1.msra.mxu0 %v1484
      %1506 = vmatprep.subr.mxu0 0.0
      %1507 = vmatpush1.msra.mxu0 %v1485
      %1508 = vmatprep.subr.mxu0 0.0
      %1509 = vmatpush1.msra.mxu0 %v1486
      %1510 = vmatprep.subr.mxu0 0.0
      %1511 = vmatpush1.msra.mxu0 %v1487
      %1512 = vmatprep.subr.mxu0 0.0
      %1513 = vmatpush1.msra.mxu0 %v1488
      %1514 = vmatprep.subr.mxu0 0.0
      %1515 = vmatpush1.msra.mxu0 0.0
      %1516 = vmatprep.subr.mxu0 0.0
      %1517 = vmatpush1.msra.mxu0 0.0
      %1518 = vmatprep.subr.mxu0 0.0
      %1519 = vmatpush1.msra.mxu0 0.0
      %1520 = vmatprep.subr.mxu0 0.0
      %1521 = vmatpush1.msra.mxu0 0.0
      %1522 = vmatprep.subr.mxu0 0.0
      %1523 = vmatpush1.msra.mxu0 0.0
      %1524 = vmatprep.subr.mxu0 0.0
      %1525 = vmatpush1.msra.mxu0 0.0
      %1526 = vmatprep.subr.mxu0 0.0
      %1527 = vmatpush1.msra.mxu0 0.0
      %1528 = vmatprep.subr.mxu0 0.0
      %1529 = vmatpush1.msra.mxu0 0.0
      %1530 = vmatprep.subr.mxu0 0.0
      %1531 = vmatpush1.msra.mxu0 0.0
      %1532 = vmatprep.subr.mxu0 0.0
      %1533 = vmatpush1.msra.mxu0 0.0
      %1534 = vmatprep.subr.mxu0 0.0
      %1535 = vmatpush1.msra.mxu0 0.0
      %1536 = vmatprep.subr.mxu0 0.0
      %1537 = vmatpush1.msra.mxu0 0.0
      %1538 = vmatprep.subr.mxu0 0.0
      %1539 = vmatpush1.msra.mxu0 0.0
      %1540 = vmatprep.subr.mxu0 0.0
      %1541 = vmatpush1.msra.mxu0 0.0
      %1542 = vmatprep.subr.mxu0 0.0
      %1543 = vmatpush1.msra.mxu0 0.0
      %1544 = vmatprep.subr.mxu0 0.0
      %1545 = vmatpush1.msra.mxu0 0.0
      %1546 = vmatprep.subr.mxu0 0.0
      %1547 = vmatpush1.msra.mxu0 0.0
      %1548 = vmatprep.subr.mxu0 0.0
      %1549 = vmatpush1.msra.mxu0 0.0
      %1550 = vmatprep.subr.mxu0 0.0
      %1551 = vmatpush1.msra.mxu0 0.0
      %1552 = vmatprep.subr.mxu0 0.0
      %1553 = vmatpush1.msra.mxu0 0.0
      %1554 = vmatprep.subr.mxu0 0.0
      %1555 = vmatpush1.msra.mxu0 0.0
      %1556 = vmatprep.subr.mxu0 0.0
      %1557 = vmatpush1.msra.mxu0 0.0
      %1558 = vmatprep.subr.mxu0 0.0
      %1559 = vmatpush1.msra.mxu0 0.0
      %1560 = vmatprep.mubr.f32.mxu0 0.0
      %1561 = vmatmul.mubr.f32.gmra.mrb[0].mxu0 %v1491
      %v1562 = vpop.f32.mrb[0].mxu0
      %v1563 = vadd.f32 0.0, %v1562
      %v1564 = vpop.f32.mrb[0].mxu0
      %1565 = vmatprep.mubr.f32.mxu0 0.0
      %1566 = vmatmul.mubr.f32.gmra.mrb[0].mxu0 %v1494
      %v1567 = vpop.f32.mrb[0].mxu0
      %v1568 = vadd.f32 0.0, %v1567
      %v1569 = vpop.f32.mrb[0].mxu0
      %1570 = vdwg.mxu0
      %v1571 = vand.u32 2147483647, %v1563
      %v1572 = vand.u32 2147483647, %v1568
      %1573 = vst [vmem:[#allocation3] sm:$0xff] %v1571
      %1574 = vst [vmem:[#allocation3 + $0x8] sm:$0xff] %v1572
      %1575 = vmatprep.subr.mxu0 0.0
      %1576 = vmatpush1.msra.mxu0 %v323
      %1577 = vmatprep.subr.mxu0 0.0
      %1578 = vmatpush1.msra.mxu0 %v324
      %1579 = vmatprep.subr.mxu0 0.0
      %1580 = vmatpush1.msra.mxu0 %v325
      %1581 = vmatprep.subr.mxu0 0.0
      %1582 = vmatpush1.msra.mxu0 %v326
      %1583 = vmatprep.subr.mxu0 0.0
      %1584 = vmatpush1.msra.mxu0 %v327
      %1585 = vmatprep.subr.mxu0 0.0
      %1586 = vmatpush1.msra.mxu0 %v328
      %1587 = vmatprep.subr.mxu0 0.0
      %1588 = vmatpush1.msra.mxu0 %v329
      %1589 = vmatprep.subr.mxu0 0.0
      %1590 = vmatpush1.msra.mxu0 %v330
      %1591 = vmatprep.subr.mxu0 0.0
      %1592 = vmatpush1.msra.mxu0 %v331
      %1593 = vmatprep.subr.mxu0 0.0
      %1594 = vmatpush1.msra.mxu0 %v332
      %1595 = vmatprep.subr.mxu0 0.0
      %1596 = vmatpush1.msra.mxu0 %v333
      %1597 = vmatprep.subr.mxu0 0.0
      %1598 = vmatpush1.msra.mxu0 %v334
      %1599 = vmatprep.subr.mxu0 0.0
      %1600 = vmatpush1.msra.mxu0 %v335
      %1601 = vmatprep.subr.mxu0 0.0
      %1602 = vmatpush1.msra.mxu0 %v336
      %1603 = vmatprep.subr.mxu0 0.0
      %1604 = vmatpush1.msra.mxu0 %v337
      %1605 = vmatprep.subr.mxu0 0.0
      %1606 = vmatpush1.msra.mxu0 %v338
      %1607 = vmatprep.subr.mxu0 0.0
      %1608 = vmatpush1.msra.mxu0 0.0
      %1609 = vmatprep.subr.mxu0 0.0
      %1610 = vmatpush1.msra.mxu0 0.0
      %1611 = vmatprep.subr.mxu0 0.0
      %1612 = vmatpush1.msra.mxu0 0.0
      %1613 = vmatprep.subr.mxu0 0.0
      %1614 = vmatpush1.msra.mxu0 0.0
      %1615 = vmatprep.subr.mxu0 0.0
      %1616 = vmatpush1.msra.mxu0 0.0
      %1617 = vmatprep.subr.mxu0 0.0
      %1618 = vmatpush1.msra.mxu0 0.0
      %1619 = vmatprep.subr.mxu0 0.0
      %1620 = vmatpush1.msra.mxu0 0.0
      %1621 = vmatprep.subr.mxu0 0.0
      %1622 = vmatpush1.msra.mxu0 0.0
      %1623 = vmatprep.subr.mxu0 0.0
      %1624 = vmatpush1.msra.mxu0 0.0
      %1625 = vmatprep.subr.mxu0 0.0
      %1626 = vmatpush1.msra.mxu0 0.0
      %1627 = vmatprep.subr.mxu0 0.0
      %1628 = vmatpush1.msra.mxu0 0.0
      %1629 = vmatprep.subr.mxu0 0.0
      %1630 = vmatpush1.msra.mxu0 0.0
      %1631 = vmatprep.subr.mxu0 0.0
      %1632 = vmatpush1.msra.mxu0 0.0
      %1633 = vmatprep.subr.mxu0 0.0
      %1634 = vmatpush1.msra.mxu0 0.0
      %1635 = vmatprep.subr.mxu0 0.0
      %1636 = vmatpush1.msra.mxu0 0.0
      %1637 = vmatprep.subr.mxu0 0.0
      %1638 = vmatpush1.msra.mxu0 0.0
      %1639 = vmatprep.mubr.f32.mxu0 0.0
      %1640 = vmatmul.mubr.f32.gmra.mrb[0].mxu0 %v1571
      %v1641 = vpop.f32.mrb[0].mxu0
      %v1642 = vadd.f32 0.0, %v1641
      %v1643 = vpop.f32.mrb[0].mxu0
      %1644 = vmatprep.mubr.f32.mxu0 0.0
      %1645 = vmatmul.mubr.f32.gmra.mrb[0].mxu0 %v1572
      %v1646 = vpop.f32.mrb[0].mxu0
      %v1647 = vadd.f32 0.0, %v1646
      %v1648 = vpop.f32.mrb[0].mxu0
      %1649 = vdwg.mxu0
      %1650 = vst [vmem:[#allocation3 + $0x10] sm:$0xff] %v1642
      %1651 = vst [vmem:[#allocation3 + $0x18] sm:$0xff] %v1647
      %1652 = vmatprep.subr.mxu0 0.0
      %1653 = vmatpush1.msra.mxu0 %v323
      %1654 = vmatprep.subr.mxu0 0.0
      %1655 = vmatpush1.msra.mxu0 %v324
      %1656 = vmatprep.subr.mxu0 0.0
      %1657 = vmatpush1.msra.mxu0 %v325
      %1658 = vmatprep.subr.mxu0 0.0
      %1659 = vmatpush1.msra.mxu0 %v326
      %1660 = vmatprep.subr.mxu0 0.0
      %1661 = vmatpush1.msra.mxu0 %v327
      %1662 = vmatprep.subr.mxu0 0.0
      %1663 = vmatpush1.msra.mxu0 %v328
      %1664 = vmatprep.subr.mxu0 0.0
      %1665 = vmatpush1.msra.mxu0 %v329
      %1666 = vmatprep.subr.mxu0 0.0
      %1667 = vmatpush1.msra.mxu0 %v330
      %1668 = vmatprep.subr.mxu0 0.0
      %1669 = vmatpush1.msra.mxu0 %v331
      %1670 = vmatprep.subr.mxu0 0.0
      %1671 = vmatpush1.msra.mxu0 %v332
      %1672 = vmatprep.subr.mxu0 0.0
      %1673 = vmatpush1.msra.mxu0 %v333
      %1674 = vmatprep.subr.mxu0 0.0
      %1675 = vmatpush1.msra.mxu0 %v334
      %1676 = vmatprep.subr.mxu0 0.0
      %1677 = vmatpush1.msra.mxu0 %v335
      %1678 = vmatprep.subr.mxu0 0.0
      %1679 = vmatpush1.msra.mxu0 %v336
      %1680 = vmatprep.subr.mxu0 0.0
      %1681 = vmatpush1.msra.mxu0 %v337
      %1682 = vmatprep.subr.mxu0 0.0
      %1683 = vmatpush1.msra.mxu0 %v338
      %1684 = vmatprep.subr.mxu0 0.0
      %1685 = vmatpush1.msra.mxu0 0.0
      %1686 = vmatprep.subr.mxu0 0.0
      %1687 = vmatpush1.msra.mxu0 0.0
      %1688 = vmatprep.subr.mxu0 0.0
      %1689 = vmatpush1.msra.mxu0 0.0
      %1690 = vmatprep.subr.mxu0 0.0
      %1691 = vmatpush1.msra.mxu0 0.0
      %1692 = vmatprep.subr.mxu0 0.0
      %1693 = vmatpush1.msra.mxu0 0.0
      %1694 = vmatprep.subr.mxu0 0.0
      %1695 = vmatpush1.msra.mxu0 0.0
      %1696 = vmatprep.subr.mxu0 0.0
      %1697 = vmatpush1.msra.mxu0 0.0
      %1698 = vmatprep.subr.mxu0 0.0
      %1699 = vmatpush1.msra.mxu0 0.0
      %1700 = vmatprep.subr.mxu0 0.0
      %1701 = vmatpush1.msra.mxu0 0.0
      %1702 = vmatprep.subr.mxu0 0.0
      %1703 = vmatpush1.msra.mxu0 0.0
      %1704 = vmatprep.subr.mxu0 0.0
      %1705 = vmatpush1.msra.mxu0 0.0
      %1706 = vmatprep.subr.mxu0 0.0
      %1707 = vmatpush1.msra.mxu0 0.0
      %1708 = vmatprep.subr.mxu0 0.0
      %1709 = vmatpush1.msra.mxu0 0.0
      %1710 = vmatprep.subr.mxu0 0.0
      %1711 = vmatpush1.msra.mxu0 0.0
      %1712 = vmatprep.subr.mxu0 0.0
      %1713 = vmatpush1.msra.mxu0 0.0
      %1714 = vmatprep.subr.mxu0 0.0
      %1715 = vmatpush1.msra.mxu0 0.0
      %1716 = vmatprep.mubr.f32.mxu0 0.0
      %1717 = vmatmul.mubr.f32.gmra.mrb[0].mxu0 %v1642
      %v1718 = vpop.f32.mrb[0].mxu0
      %v1719 = vadd.f32 0.0, %v1718
      %v1720 = vpop.f32.mrb[0].mxu0
      %1721 = vmatprep.mubr.f32.mxu0 0.0
      %1722 = vmatmul.mubr.f32.gmra.mrb[0].mxu0 %v1647
      %v1723 = vpop.f32.mrb[0].mxu0
      %v1724 = vadd.f32 0.0, %v1723
      %v1725 = vpop.f32.mrb[0].mxu0
      %1726 = vdwg.mxu0
      %1727 = vst [vmem:[#allocation3 + $0x20] sm:$0xff] %v1719
      %1728 = vst [vmem:[#allocation3 + $0x28] sm:$0xff] %v1724
      %1729 = vmatprep.subr.mxu0 0.0
      %1730 = vmatpush1.msra.mxu0 %v323
      %1731 = vmatprep.subr.mxu0 0.0
      %1732 = vmatpush1.msra.mxu0 %v324
      %1733 = vmatprep.subr.mxu0 0.0
      %1734 = vmatpush1.msra.mxu0 %v325
      %1735 = vmatprep.subr.mxu0 0.0
      %1736 = vmatpush1.msra.mxu0 %v326
      %1737 = vmatprep.subr.mxu0 0.0
      %1738 = vmatpush1.msra.mxu0 %v327
      %1739 = vmatprep.subr.mxu0 0.0
      %1740 = vmatpush1.msra.mxu0 %v328
      %1741 = vmatprep.subr.mxu0 0.0
      %1742 = vmatpush1.msra.mxu0 %v329
      %1743 = vmatprep.subr.mxu0 0.0
      %1744 = vmatpush1.msra.mxu0 %v330
      %1745 = vmatprep.subr.mxu0 0.0
      %1746 = vmatpush1.msra.mxu0 %v331
      %1747 = vmatprep.subr.mxu0 0.0
      %1748 = vmatpush1.msra.mxu0 %v332
      %1749 = vmatprep.subr.mxu0 0.0
      %1750 = vmatpush1.msra.mxu0 %v333
      %1751 = vmatprep.subr.mxu0 0.0
      %1752 = vmatpush1.msra.mxu0 %v334
      %1753 = vmatprep.subr.mxu0 0.0
      %1754 = vmatpush1.msra.mxu0 %v335
      %1755 = vmatprep.subr.mxu0 0.0
      %1756 = vmatpush1.msra.mxu0 %v336
      %1757 = vmatprep.subr.mxu0 0.0
      %1758 = vmatpush1.msra.mxu0 %v337
      %1759 = vmatprep.subr.mxu0 0.0
      %1760 = vmatpush1.msra.mxu0 %v338
      %1761 = vmatprep.subr.mxu0 0.0
      %1762 = vmatpush1.msra.mxu0 0.0
      %1763 = vmatprep.subr.mxu0 0.0
      %1764 = vmatpush1.msra.mxu0 0.0
      %1765 = vmatprep.subr.mxu0 0.0
      %1766 = vmatpush1.msra.mxu0 0.0
      %1767 = vmatprep.subr.mxu0 0.0
      %1768 = vmatpush1.msra.mxu0 0.0
      %1769 = vmatprep.subr.mxu0 0.0
      %1770 = vmatpush1.msra.mxu0 0.0
      %1771 = vmatprep.subr.mxu0 0.0
      %1772 = vmatpush1.msra.mxu0 0.0
      %1773 = vmatprep.subr.mxu0 0.0
      %1774 = vmatpush1.msra.mxu0 0.0
      %1775 = vmatprep.subr.mxu0 0.0
      %1776 = vmatpush1.msra.mxu0 0.0
      %1777 = vmatprep.subr.mxu0 0.0
      %1778 = vmatpush1.msra.mxu0 0.0
      %1779 = vmatprep.subr.mxu0 0.0
      %1780 = vmatpush1.msra.mxu0 0.0
      %1781 = vmatprep.subr.mxu0 0.0
      %1782 = vmatpush1.msra.mxu0 0.0
      %1783 = vmatprep.subr.mxu0 0.0
      %1784 = vmatpush1.msra.mxu0 0.0
      %1785 = vmatprep.subr.mxu0 0.0
      %1786 = vmatpush1.msra.mxu0 0.0
      %1787 = vmatprep.subr.mxu0 0.0
      %1788 = vmatpush1.msra.mxu0 0.0
      %1789 = vmatprep.subr.mxu0 0.0
      %1790 = vmatpush1.msra.mxu0 0.0
      %1791 = vmatprep.subr.mxu0 0.0
      %1792 = vmatpush1.msra.mxu0 0.0
      %1793 = vmatprep.mubr.f32.mxu0 0.0
      %1794 = vmatmul.mubr.f32.gmra.mrb[0].mxu0 %v1719
      %v1795 = vpop.f32.mrb[0].mxu0
      %v1796 = vadd.f32 0.0, %v1795
      %v1797 = vpop.f32.mrb[0].mxu0
      %1798 = vmatprep.mubr.f32.mxu0 0.0
      %1799 = vmatmul.mubr.f32.gmra.mrb[0].mxu0 %v1724
      %v1800 = vpop.f32.mrb[0].mxu0
      %v1801 = vadd.f32 0.0, %v1800
      %v1802 = vpop.f32.mrb[0].mxu0
      %1803 = vdwg.mxu0
      %1804 = vst [vmem:[#allocation3 + $0x30] sm:$0xff] %v1796
      %1805 = vst [vmem:[#allocation3 + $0x38] sm:$0xff] %v1801
      %1806 = vmatprep.subr.mxu0 0.0
      %1807 = vmatpush1.msra.mxu0 %v323
      %1808 = vmatprep.subr.mxu0 0.0
      %1809 = vmatpush1.msra.mxu0 %v324
      %1810 = vmatprep.subr.mxu0 0.0
      %1811 = vmatpush1.msra.mxu0 %v325
      %1812 = vmatprep.subr.mxu0 0.0
      %1813 = vmatpush1.msra.mxu0 %v326
      %1814 = vmatprep.subr.mxu0 0.0
      %1815 = vmatpush1.msra.mxu0 %v327
      %1816 = vmatprep.subr.mxu0 0.0
      %1817 = vmatpush1.msra.mxu0 %v328
      %1818 = vmatprep.subr.mxu0 0.0
      %1819 = vmatpush1.msra.mxu0 %v329
      %1820 = vmatprep.subr.mxu0 0.0
      %1821 = vmatpush1.msra.mxu0 %v330
      %1822 = vmatprep.subr.mxu0 0.0
      %1823 = vmatpush1.msra.mxu0 %v331
      %1824 = vmatprep.subr.mxu0 0.0
      %1825 = vmatpush1.msra.mxu0 %v332
      %1826 = vmatprep.subr.mxu0 0.0
      %1827 = vmatpush1.msra.mxu0 %v333
      %1828 = vmatprep.subr.mxu0 0.0
      %1829 = vmatpush1.msra.mxu0 %v334
      %1830 = vmatprep.subr.mxu0 0.0
      %1831 = vmatpush1.msra.mxu0 %v335
      %1832 = vmatprep.subr.mxu0 0.0
      %1833 = vmatpush1.msra.mxu0 %v336
      %1834 = vmatprep.subr.mxu0 0.0
      %1835 = vmatpush1.msra.mxu0 %v337
      %1836 = vmatprep.subr.mxu0 0.0
      %1837 = vmatpush1.msra.mxu0 %v338
      %1838 = vmatprep.subr.mxu0 0.0
      %1839 = vmatpush1.msra.mxu0 0.0
      %1840 = vmatprep.subr.mxu0 0.0
      %1841 = vmatpush1.msra.mxu0 0.0
      %1842 = vmatprep.subr.mxu0 0.0
      %1843 = vmatpush1.msra.mxu0 0.0
      %1844 = vmatprep.subr.mxu0 0.0
      %1845 = vmatpush1.msra.mxu0 0.0
      %1846 = vmatprep.subr.mxu0 0.0
      %1847 = vmatpush1.msra.mxu0 0.0
      %1848 = vmatprep.subr.mxu0 0.0
      %1849 = vmatpush1.msra.mxu0 0.0
      %1850 = vmatprep.subr.mxu0 0.0
      %1851 = vmatpush1.msra.mxu0 0.0
      %1852 = vmatprep.subr.mxu0 0.0
      %1853 = vmatpush1.msra.mxu0 0.0
      %1854 = vmatprep.subr.mxu0 0.0
      %1855 = vmatpush1.msra.mxu0 0.0
      %1856 = vmatprep.subr.mxu0 0.0
      %1857 = vmatpush1.msra.mxu0 0.0
      %1858 = vmatprep.subr.mxu0 0.0
      %1859 = vmatpush1.msra.mxu0 0.0
      %1860 = vmatprep.subr.mxu0 0.0
      %1861 = vmatpush1.msra.mxu0 0.0
      %1862 = vmatprep.subr.mxu0 0.0
      %1863 = vmatpush1.msra.mxu0 0.0
      %1864 = vmatprep.subr.mxu0 0.0
      %1865 = vmatpush1.msra.mxu0 0.0
      %1866 = vmatprep.subr.mxu0 0.0
      %1867 = vmatpush1.msra.mxu0 0.0
      %1868 = vmatprep.subr.mxu0 0.0
      %1869 = vmatpush1.msra.mxu0 0.0
      %1870 = vmatprep.mubr.f32.mxu0 0.0
      %1871 = vmatmul.mubr.f32.gmra.mrb[0].mxu0 %v1796
      %v1872 = vpop.f32.mrb[0].mxu0
      %v1873 = vadd.f32 0.0, %v1872
      %v1874 = vpop.f32.mrb[0].mxu0
      %1875 = vmatprep.mubr.f32.mxu0 0.0
      %1876 = vmatmul.mubr.f32.gmra.mrb[0].mxu0 %v1801
      %v1877 = vpop.f32.mrb[0].mxu0
      %v1878 = vadd.f32 0.0, %v1877
      %v1879 = vpop.f32.mrb[0].mxu0
      %1880 = vdwg.mxu0
      %1881 = vst [vmem:[#allocation3 + $0x40] sm:$0xff] %v1873
      %1882 = vst [vmem:[#allocation3 + $0x48] sm:$0xff] %v1878
      %1883 = vmatprep.subr.mxu0 0.0
      %1884 = vmatpush1.msra.mxu0 %v323
      %1885 = vmatprep.subr.mxu0 0.0
      %1886 = vmatpush1.msra.mxu0 %v324
      %1887 = vmatprep.subr.mxu0 0.0
      %1888 = vmatpush1.msra.mxu0 %v325
      %1889 = vmatprep.subr.mxu0 0.0
      %1890 = vmatpush1.msra.mxu0 %v326
      %1891 = vmatprep.subr.mxu0 0.0
      %1892 = vmatpush1.msra.mxu0 %v327
      %1893 = vmatprep.subr.mxu0 0.0
      %1894 = vmatpush1.msra.mxu0 %v328
      %1895 = vmatprep.subr.mxu0 0.0
      %1896 = vmatpush1.msra.mxu0 %v329
      %1897 = vmatprep.subr.mxu0 0.0
      %1898 = vmatpush1.msra.mxu0 %v330
      %1899 = vmatprep.subr.mxu0 0.0
      %1900 = vmatpush1.msra.mxu0 %v331
      %1901 = vmatprep.subr.mxu0 0.0
      %1902 = vmatpush1.msra.mxu0 %v332
      %1903 = vmatprep.subr.mxu0 0.0
      %1904 = vmatpush1.msra.mxu0 %v333
      %1905 = vmatprep.subr.mxu0 0.0
      %1906 = vmatpush1.msra.mxu0 %v334
      %1907 = vmatprep.subr.mxu0 0.0
      %1908 = vmatpush1.msra.mxu0 %v335
      %1909 = vmatprep.subr.mxu0 0.0
      %1910 = vmatpush1.msra.mxu0 %v336
      %1911 = vmatprep.subr.mxu0 0.0
      %1912 = vmatpush1.msra.mxu0 %v337
      %1913 = vmatprep.subr.mxu0 0.0
      %1914 = vmatpush1.msra.mxu0 %v338
      %1915 = vmatprep.subr.mxu0 0.0
      %1916 = vmatpush1.msra.mxu0 0.0
      %1917 = vmatprep.subr.mxu0 0.0
      %1918 = vmatpush1.msra.mxu0 0.0
      %1919 = vmatprep.subr.mxu0 0.0
      %1920 = vmatpush1.msra.mxu0 0.0
      %1921 = vmatprep.subr.mxu0 0.0
      %1922 = vmatpush1.msra.mxu0 0.0
      %1923 = vmatprep.subr.mxu0 0.0
      %1924 = vmatpush1.msra.mxu0 0.0
      %1925 = vmatprep.subr.mxu0 0.0
      %1926 = vmatpush1.msra.mxu0 0.0
      %1927 = vmatprep.subr.mxu0 0.0
      %1928 = vmatpush1.msra.mxu0 0.0
      %1929 = vmatprep.subr.mxu0 0.0
      %1930 = vmatpush1.msra.mxu0 0.0
      %1931 = vmatprep.subr.mxu0 0.0
      %1932 = vmatpush1.msra.mxu0 0.0
      %1933 = vmatprep.subr.mxu0 0.0
      %1934 = vmatpush1.msra.mxu0 0.0
      %1935 = vmatprep.subr.mxu0 0.0
      %1936 = vmatpush1.msra.mxu0 0.0
      %1937 = vmatprep.subr.mxu0 0.0
      %1938 = vmatpush1.msra.mxu0 0.0
      %1939 = vmatprep.subr.mxu0 0.0
      %1940 = vmatpush1.msra.mxu0 0.0
      %1941 = vmatprep.subr.mxu0 0.0
      %1942 = vmatpush1.msra.mxu0 0.0
      %1943 = vmatprep.subr.mxu0 0.0
      %1944 = vmatpush1.msra.mxu0 0.0
      %1945 = vmatprep.subr.mxu0 0.0
      %1946 = vmatpush1.msra.mxu0 0.0
      %1947 = vmatprep.mubr.f32.mxu0 0.0
      %1948 = vmatmul.mubr.f32.gmra.mrb[0].mxu0 %v1873
      %v1949 = vpop.f32.mrb[0].mxu0
      %v1950 = vadd.f32 0.0, %v1949
      %v1951 = vpop.f32.mrb[0].mxu0
      %1952 = vmatprep.mubr.f32.mxu0 0.0
      %1953 = vmatmul.mubr.f32.gmra.mrb[0].mxu0 %v1878
      %v1954 = vpop.f32.mrb[0].mxu0
      %v1955 = vadd.f32 0.0, %v1954
      %v1956 = vpop.f32.mrb[0].mxu0
      %1957 = vdwg.mxu0
      %1958 = vst [vmem:[#allocation3 + $0x50] sm:$0xff] %v1950
      %1959 = vst [vmem:[#allocation3 + $0x58] sm:$0xff] %v1955
      %1960 = vmatprep.subr.mxu0 0.0
      %1961 = vmatpush1.msra.mxu0 %v323
      %1962 = vmatprep.subr.mxu0 0.0
      %1963 = vmatpush1.msra.mxu0 %v324
      %1964 = vmatprep.subr.mxu0 0.0
      %1965 = vmatpush1.msra.mxu0 %v325
      %1966 = vmatprep.subr.mxu0 0.0
      %1967 = vmatpush1.msra.mxu0 %v326
      %1968 = vmatprep.subr.mxu0 0.0
      %1969 = vmatpush1.msra.mxu0 %v327
      %1970 = vmatprep.subr.mxu0 0.0
      %1971 = vmatpush1.msra.mxu0 %v328
      %1972 = vmatprep.subr.mxu0 0.0
      %1973 = vmatpush1.msra.mxu0 %v329
      %1974 = vmatprep.subr.mxu0 0.0
      %1975 = vmatpush1.msra.mxu0 %v330
      %1976 = vmatprep.subr.mxu0 0.0
      %1977 = vmatpush1.msra.mxu0 %v331
      %1978 = vmatprep.subr.mxu0 0.0
      %1979 = vmatpush1.msra.mxu0 %v332
      %1980 = vmatprep.subr.mxu0 0.0
      %1981 = vmatpush1.msra.mxu0 %v333
      %1982 = vmatprep.subr.mxu0 0.0
      %1983 = vmatpush1.msra.mxu0 %v334
      %1984 = vmatprep.subr.mxu0 0.0
      %1985 = vmatpush1.msra.mxu0 %v335
      %1986 = vmatprep.subr.mxu0 0.0
      %1987 = vmatpush1.msra.mxu0 %v336
      %1988 = vmatprep.subr.mxu0 0.0
      %1989 = vmatpush1.msra.mxu0 %v337
      %1990 = vmatprep.subr.mxu0 0.0
      %1991 = vmatpush1.msra.mxu0 %v338
      %1992 = vmatprep.subr.mxu0 0.0
      %1993 = vmatpush1.msra.mxu0 0.0
      %1994 = vmatprep.subr.mxu0 0.0
      %1995 = vmatpush1.msra.mxu0 0.0
      %1996 = vmatprep.subr.mxu0 0.0
      %1997 = vmatpush1.msra.mxu0 0.0
      %1998 = vmatprep.subr.mxu0 0.0
      %1999 = vmatpush1.msra.mxu0 0.0
      %2000 = vmatprep.subr.mxu0 0.0
      %2001 = vmatpush1.msra.mxu0 0.0
      %2002 = vmatprep.subr.mxu0 0.0
      %2003 = vmatpush1.msra.mxu0 0.0
      %2004 = vmatprep.subr.mxu0 0.0
      %2005 = vmatpush1.msra.mxu0 0.0
      %2006 = vmatprep.subr.mxu0 0.0
      %2007 = vmatpush1.msra.mxu0 0.0
      %2008 = vmatprep.subr.mxu0 0.0
      %2009 = vmatpush1.msra.mxu0 0.0
      %2010 = vmatprep.subr.mxu0 0.0
      %2011 = vmatpush1.msra.mxu0 0.0
      %2012 = vmatprep.subr.mxu0 0.0
      %2013 = vmatpush1.msra.mxu0 0.0
      %2014 = vmatprep.subr.mxu0 0.0
      %2015 = vmatpush1.msra.mxu0 0.0
      %2016 = vmatprep.subr.mxu0 0.0
      %2017 = vmatpush1.msra.mxu0 0.0
      %2018 = vmatprep.subr.mxu0 0.0
      %2019 = vmatpush1.msra.mxu0 0.0
      %2020 = vmatprep.subr.mxu0 0.0
      %2021 = vmatpush1.msra.mxu0 0.0
      %2022 = vmatprep.subr.mxu0 0.0
      %2023 = vmatpush1.msra.mxu0 0.0
      %2024 = vmatprep.mubr.f32.mxu0 0.0
      %2025 = vmatmul.mubr.f32.gmra.mrb[0].mxu0 %v1950
      %v2026 = vpop.f32.mrb[0].mxu0
      %v2027 = vadd.f32 0.0, %v2026
      %v2028 = vpop.f32.mrb[0].mxu0
      %2029 = vmatprep.mubr.f32.mxu0 0.0
      %2030 = vmatmul.mubr.f32.gmra.mrb[0].mxu0 %v1955
      %v2031 = vpop.f32.mrb[0].mxu0
      %v2032 = vadd.f32 0.0, %v2031
      %v2033 = vpop.f32.mrb[0].mxu0
      %2034 = vdwg.mxu0
      %2035 = vst [vmem:[#allocation3 + $0x60] sm:$0xff] %v2027
      %2036 = vst [vmem:[#allocation3 + $0x68] sm:$0xff] %v2032
      %2037 = vmatprep.subr.mxu0 0.0
      %2038 = vmatpush1.msra.mxu0 %v323
      %2039 = vmatprep.subr.mxu0 0.0
      %2040 = vmatpush1.msra.mxu0 %v324
      %2041 = vmatprep.subr.mxu0 0.0
      %2042 = vmatpush1.msra.mxu0 %v325
      %2043 = vmatprep.subr.mxu0 0.0
      %2044 = vmatpush1.msra.mxu0 %v326
      %2045 = vmatprep.subr.mxu0 0.0
      %2046 = vmatpush1.msra.mxu0 %v327
      %2047 = vmatprep.subr.mxu0 0.0
      %2048 = vmatpush1.msra.mxu0 %v328
      %2049 = vmatprep.subr.mxu0 0.0
      %2050 = vmatpush1.msra.mxu0 %v329
      %2051 = vmatprep.subr.mxu0 0.0
      %2052 = vmatpush1.msra.mxu0 %v330
      %2053 = vmatprep.subr.mxu0 0.0
      %2054 = vmatpush1.msra.mxu0 %v331
      %2055 = vmatprep.subr.mxu0 0.0
      %2056 = vmatpush1.msra.mxu0 %v332
      %2057 = vmatprep.subr.mxu0 0.0
      %2058 = vmatpush1.msra.mxu0 %v333
      %2059 = vmatprep.subr.mxu0 0.0
      %2060 = vmatpush1.msra.mxu0 %v334
      %2061 = vmatprep.subr.mxu0 0.0
      %2062 = vmatpush1.msra.mxu0 %v335
      %2063 = vmatprep.subr.mxu0 0.0
      %2064 = vmatpush1.msra.mxu0 %v336
      %2065 = vmatprep.subr.mxu0 0.0
      %2066 = vmatpush1.msra.mxu0 %v337
      %2067 = vmatprep.subr.mxu0 0.0
      %2068 = vmatpush1.msra.mxu0 %v338
      %2069 = vmatprep.subr.mxu0 0.0
      %2070 = vmatpush1.msra.mxu0 0.0
      %2071 = vmatprep.subr.mxu0 0.0
      %2072 = vmatpush1.msra.mxu0 0.0
      %2073 = vmatprep.subr.mxu0 0.0
      %2074 = vmatpush1.msra.mxu0 0.0
      %2075 = vmatprep.subr.mxu0 0.0
      %2076 = vmatpush1.msra.mxu0 0.0
      %2077 = vmatprep.subr.mxu0 0.0
      %2078 = vmatpush1.msra.mxu0 0.0
      %2079 = vmatprep.subr.mxu0 0.0
      %2080 = vmatpush1.msra.mxu0 0.0
      %2081 = vmatprep.subr.mxu0 0.0
      %2082 = vmatpush1.msra.mxu0 0.0
      %2083 = vmatprep.subr.mxu0 0.0
      %2084 = vmatpush1.msra.mxu0 0.0
      %2085 = vmatprep.subr.mxu0 0.0
      %2086 = vmatpush1.msra.mxu0 0.0
      %2087 = vmatprep.subr.mxu0 0.0
      %2088 = vmatpush1.msra.mxu0 0.0
      %2089 = vmatprep.subr.mxu0 0.0
      %2090 = vmatpush1.msra.mxu0 0.0
      %2091 = vmatprep.subr.mxu0 0.0
      %2092 = vmatpush1.msra.mxu0 0.0
      %2093 = vmatprep.subr.mxu0 0.0
      %2094 = vmatpush1.msra.mxu0 0.0
      %2095 = vmatprep.subr.mxu0 0.0
      %2096 = vmatpush1.msra.mxu0 0.0
      %2097 = vmatprep.subr.mxu0 0.0
      %2098 = vmatpush1.msra.mxu0 0.0
      %2099 = vmatprep.subr.mxu0 0.0
      %2100 = vmatpush1.msra.mxu0 0.0
      %2101 = vmatprep.mubr.f32.mxu0 0.0
      %2102 = vmatmul.mubr.f32.gmra.mrb[0].mxu0 %v2027
      %v2103 = vpop.f32.mrb[0].mxu0
      %v2104 = vadd.f32 0.0, %v2103
      %v2105 = vpop.f32.mrb[0].mxu0
      %2106 = vmatprep.mubr.f32.mxu0 0.0
      %2107 = vmatmul.mubr.f32.gmra.mrb[0].mxu0 %v2032
      %v2108 = vpop.f32.mrb[0].mxu0
      %v2109 = vadd.f32 0.0, %v2108
      %v2110 = vpop.f32.mrb[0].mxu0
      %2111 = vdwg.mxu0
      %2112 = vst [vmem:[#allocation3 + $0x70] sm:$0xff] %v2104
      %2113 = vst [vmem:[#allocation3 + $0x78] sm:$0xff] %v2109
      %2114 = vmatprep.subr.mxu0 0.0
      %2115 = vmatpush1.msra.mxu0 %v323
      %2116 = vmatprep.subr.mxu0 0.0
      %2117 = vmatpush1.msra.mxu0 %v324
      %2118 = vmatprep.subr.mxu0 0.0
      %2119 = vmatpush1.msra.mxu0 %v325
      %2120 = vmatprep.subr.mxu0 0.0
      %2121 = vmatpush1.msra.mxu0 %v326
      %2122 = vmatprep.subr.mxu0 0.0
      %2123 = vmatpush1.msra.mxu0 %v327
      %2124 = vmatprep.subr.mxu0 0.0
      %2125 = vmatpush1.msra.mxu0 %v328
      %2126 = vmatprep.subr.mxu0 0.0
      %2127 = vmatpush1.msra.mxu0 %v329
      %2128 = vmatprep.subr.mxu0 0.0
      %2129 = vmatpush1.msra.mxu0 %v330
      %2130 = vmatprep.subr.mxu0 0.0
      %2131 = vmatpush1.msra.mxu0 %v331
      %2132 = vmatprep.subr.mxu0 0.0
      %2133 = vmatpush1.msra.mxu0 %v332
      %2134 = vmatprep.subr.mxu0 0.0
      %2135 = vmatpush1.msra.mxu0 %v333
      %2136 = vmatprep.subr.mxu0 0.0
      %2137 = vmatpush1.msra.mxu0 %v334
      %2138 = vmatprep.subr.mxu0 0.0
      %2139 = vmatpush1.msra.mxu0 %v335
      %2140 = vmatprep.subr.mxu0 0.0
      %2141 = vmatpush1.msra.mxu0 %v336
      %2142 = vmatprep.subr.mxu0 0.0
      %2143 = vmatpush1.msra.mxu0 %v337
      %2144 = vmatprep.subr.mxu0 0.0
      %2145 = vmatpush1.msra.mxu0 %v338
      %2146 = vmatprep.subr.mxu0 0.0
      %2147 = vmatpush1.msra.mxu0 0.0
      %2148 = vmatprep.subr.mxu0 0.0
      %2149 = vmatpush1.msra.mxu0 0.0
      %2150 = vmatprep.subr.mxu0 0.0
      %2151 = vmatpush1.msra.mxu0 0.0
      %2152 = vmatprep.subr.mxu0 0.0
      %2153 = vmatpush1.msra.mxu0 0.0
      %2154 = vmatprep.subr.mxu0 0.0
      %2155 = vmatpush1.msra.mxu0 0.0
      %2156 = vmatprep.subr.mxu0 0.0
      %2157 = vmatpush1.msra.mxu0 0.0
      %2158 = vmatprep.subr.mxu0 0.0
      %2159 = vmatpush1.msra.mxu0 0.0
      %2160 = vmatprep.subr.mxu0 0.0
      %2161 = vmatpush1.msra.mxu0 0.0
      %2162 = vmatprep.subr.mxu0 0.0
      %2163 = vmatpush1.msra.mxu0 0.0
      %2164 = vmatprep.subr.mxu0 0.0
      %2165 = vmatpush1.msra.mxu0 0.0
      %2166 = vmatprep.subr.mxu0 0.0
      %2167 = vmatpush1.msra.mxu0 0.0
      %2168 = vmatprep.subr.mxu0 0.0
      %2169 = vmatpush1.msra.mxu0 0.0
      %2170 = vmatprep.subr.mxu0 0.0
      %2171 = vmatpush1.msra.mxu0 0.0
      %2172 = vmatprep.subr.mxu0 0.0
      %2173 = vmatpush1.msra.mxu0 0.0
      %2174 = vmatprep.subr.mxu0 0.0
      %2175 = vmatpush1.msra.mxu0 0.0
      %2176 = vmatprep.subr.mxu0 0.0
      %2177 = vmatpush1.msra.mxu0 0.0
      %2178 = vmatprep.mubr.f32.mxu0 0.0
      %2179 = vmatmul.mubr.f32.gmra.mrb[0].mxu0 %v2104
      %v2180 = vpop.f32.mrb[0].mxu0
      %v2181 = vadd.f32 0.0, %v2180
      %v2182 = vpop.f32.mrb[0].mxu0
      %2183 = vmatprep.mubr.f32.mxu0 0.0
      %2184 = vmatmul.mubr.f32.gmra.mrb[0].mxu0 %v2109
      %v2185 = vpop.f32.mrb[0].mxu0
      %v2186 = vadd.f32 0.0, %v2185
      %v2187 = vpop.f32.mrb[0].mxu0
      %2188 = vdwg.mxu0
      %2189 = vst [vmem:[#allocation3 + $0x80] sm:$0xff] %v2181
      %2190 = vst [vmem:[#allocation3 + $0x88] sm:$0xff] %v2186
      %2191 = vmatprep.subr.mxu0 0.0
      %2192 = vmatpush1.msra.mxu0 %v323
      %2193 = vmatprep.subr.mxu0 0.0
      %2194 = vmatpush1.msra.mxu0 %v324
      %2195 = vmatprep.subr.mxu0 0.0
      %2196 = vmatpush1.msra.mxu0 %v325
      %2197 = vmatprep.subr.mxu0 0.0
      %2198 = vmatpush1.msra.mxu0 %v326
      %2199 = vmatprep.subr.mxu0 0.0
      %2200 = vmatpush1.msra.mxu0 %v327
      %2201 = vmatprep.subr.mxu0 0.0
      %2202 = vmatpush1.msra.mxu0 %v328
      %2203 = vmatprep.subr.mxu0 0.0
      %2204 = vmatpush1.msra.mxu0 %v329
      %2205 = vmatprep.subr.mxu0 0.0
      %2206 = vmatpush1.msra.mxu0 %v330
      %2207 = vmatprep.subr.mxu0 0.0
      %2208 = vmatpush1.msra.mxu0 %v331
      %2209 = vmatprep.subr.mxu0 0.0
      %2210 = vmatpush1.msra.mxu0 %v332
      %2211 = vmatprep.subr.mxu0 0.0
      %2212 = vmatpush1.msra.mxu0 %v333
      %2213 = vmatprep.subr.mxu0 0.0
      %2214 = vmatpush1.msra.mxu0 %v334
      %2215 = vmatprep.subr.mxu0 0.0
      %2216 = vmatpush1.msra.mxu0 %v335
      %2217 = vmatprep.subr.mxu0 0.0
      %2218 = vmatpush1.msra.mxu0 %v336
      %2219 = vmatprep.subr.mxu0 0.0
      %2220 = vmatpush1.msra.mxu0 %v337
      %2221 = vmatprep.subr.mxu0 0.0
      %2222 = vmatpush1.msra.mxu0 %v338
      %2223 = vmatprep.subr.mxu0 0.0
      %2224 = vmatpush1.msra.mxu0 0.0
      %2225 = vmatprep.subr.mxu0 0.0
      %2226 = vmatpush1.msra.mxu0 0.0
      %2227 = vmatprep.subr.mxu0 0.0
      %2228 = vmatpush1.msra.mxu0 0.0
      %2229 = vmatprep.subr.mxu0 0.0
      %2230 = vmatpush1.msra.mxu0 0.0
      %2231 = vmatprep.subr.mxu0 0.0
      %2232 = vmatpush1.msra.mxu0 0.0
      %2233 = vmatprep.subr.mxu0 0.0
      %2234 = vmatpush1.msra.mxu0 0.0
      %2235 = vmatprep.subr.mxu0 0.0
      %2236 = vmatpush1.msra.mxu0 0.0
      %2237 = vmatprep.subr.mxu0 0.0
      %2238 = vmatpush1.msra.mxu0 0.0
      %2239 = vmatprep.subr.mxu0 0.0
      %2240 = vmatpush1.msra.mxu0 0.0
      %2241 = vmatprep.subr.mxu0 0.0
      %2242 = vmatpush1.msra.mxu0 0.0
      %2243 = vmatprep.subr.mxu0 0.0
      %2244 = vmatpush1.msra.mxu0 0.0
      %2245 = vmatprep.subr.mxu0 0.0
      %2246 = vmatpush1.msra.mxu0 0.0
      %2247 = vmatprep.subr.mxu0 0.0
      %2248 = vmatpush1.msra.mxu0 0.0
      %2249 = vmatprep.subr.mxu0 0.0
      %2250 = vmatpush1.msra.mxu0 0.0
      %2251 = vmatprep.subr.mxu0 0.0
      %2252 = vmatpush1.msra.mxu0 0.0
      %2253 = vmatprep.subr.mxu0 0.0
      %2254 = vmatpush1.msra.mxu0 0.0
      %2255 = vmatprep.mubr.f32.mxu0 0.0
      %2256 = vmatmul.mubr.f32.gmra.mrb[0].mxu0 %v2181
      %v2257 = vpop.f32.mrb[0].mxu0
      %v2258 = vadd.f32 0.0, %v2257
      %v2259 = vpop.f32.mrb[0].mxu0
      %2260 = vmatprep.mubr.f32.mxu0 0.0
      %2261 = vmatmul.mubr.f32.gmra.mrb[0].mxu0 %v2186
      %v2262 = vpop.f32.mrb[0].mxu0
      %v2263 = vadd.f32 0.0, %v2262
      %v2264 = vpop.f32.mrb[0].mxu0
      %2265 = vdwg.mxu0
      %2266 = vst [vmem:[#allocation3 + $0x90] sm:$0xff] %v2258
      %2267 = vst [vmem:[#allocation3 + $0x98] sm:$0xff] %v2263
      %2268 = vmatprep.subr.mxu0 0.0
      %2269 = vmatpush1.msra.mxu0 %v323
      %2270 = vmatprep.subr.mxu0 0.0
      %2271 = vmatpush1.msra.mxu0 %v324
      %2272 = vmatprep.subr.mxu0 0.0
      %2273 = vmatpush1.msra.mxu0 %v325
      %2274 = vmatprep.subr.mxu0 0.0
      %2275 = vmatpush1.msra.mxu0 %v326
      %2276 = vmatprep.subr.mxu0 0.0
      %2277 = vmatpush1.msra.mxu0 %v327
      %2278 = vmatprep.subr.mxu0 0.0
      %2279 = vmatpush1.msra.mxu0 %v328
      %2280 = vmatprep.subr.mxu0 0.0
      %2281 = vmatpush1.msra.mxu0 %v329
      %2282 = vmatprep.subr.mxu0 0.0
      %2283 = vmatpush1.msra.mxu0 %v330
      %2284 = vmatprep.subr.mxu0 0.0
      %2285 = vmatpush1.msra.mxu0 %v331
      %2286 = vmatprep.subr.mxu0 0.0
      %2287 = vmatpush1.msra.mxu0 %v332
      %2288 = vmatprep.subr.mxu0 0.0
      %2289 = vmatpush1.msra.mxu0 %v333
      %2290 = vmatprep.subr.mxu0 0.0
      %2291 = vmatpush1.msra.mxu0 %v334
      %2292 = vmatprep.subr.mxu0 0.0
      %2293 = vmatpush1.msra.mxu0 %v335
      %2294 = vmatprep.subr.mxu0 0.0
      %2295 = vmatpush1.msra.mxu0 %v336
      %2296 = vmatprep.subr.mxu0 0.0
      %2297 = vmatpush1.msra.mxu0 %v337
      %2298 = vmatprep.subr.mxu0 0.0
      %2299 = vmatpush1.msra.mxu0 %v338
      %2300 = vmatprep.subr.mxu0 0.0
      %2301 = vmatpush1.msra.mxu0 0.0
      %2302 = vmatprep.subr.mxu0 0.0
      %2303 = vmatpush1.msra.mxu0 0.0
      %2304 = vmatprep.subr.mxu0 0.0
      %2305 = vmatpush1.msra.mxu0 0.0
      %2306 = vmatprep.subr.mxu0 0.0
      %2307 = vmatpush1.msra.mxu0 0.0
      %2308 = vmatprep.subr.mxu0 0.0
      %2309 = vmatpush1.msra.mxu0 0.0
      %2310 = vmatprep.subr.mxu0 0.0
      %2311 = vmatpush1.msra.mxu0 0.0
      %2312 = vmatprep.subr.mxu0 0.0
      %2313 = vmatpush1.msra.mxu0 0.0
      %2314 = vmatprep.subr.mxu0 0.0
      %2315 = vmatpush1.msra.mxu0 0.0
      %2316 = vmatprep.subr.mxu0 0.0
      %2317 = vmatpush1.msra.mxu0 0.0
      %2318 = vmatprep.subr.mxu0 0.0
      %2319 = vmatpush1.msra.mxu0 0.0
      %2320 = vmatprep.subr.mxu0 0.0
      %2321 = vmatpush1.msra.mxu0 0.0
      %2322 = vmatprep.subr.mxu0 0.0
      %2323 = vmatpush1.msra.mxu0 0.0
      %2324 = vmatprep.subr.mxu0 0.0
      %2325 = vmatpush1.msra.mxu0 0.0
      %2326 = vmatprep.subr.mxu0 0.0
      %2327 = vmatpush1.msra.mxu0 0.0
      %2328 = vmatprep.subr.mxu0 0.0
      %2329 = vmatpush1.msra.mxu0 0.0
      %2330 = vmatprep.subr.mxu0 0.0
      %2331 = vmatpush1.msra.mxu0 0.0
      %2332 = vmatprep.mubr.f32.mxu0 0.0
      %2333 = vmatmul.mubr.f32.gmra.mrb[0].mxu0 %v2258
      %v2334 = vpop.f32.mrb[0].mxu0
      %v2335 = vadd.f32 0.0, %v2334
      %v2336 = vpop.f32.mrb[0].mxu0
      %2337 = vmatprep.mubr.f32.mxu0 0.0
      %2338 = vmatmul.mubr.f32.gmra.mrb[0].mxu0 %v2263
      %v2339 = vpop.f32.mrb[0].mxu0
      %v2340 = vadd.f32 0.0, %v2339
      %v2341 = vpop.f32.mrb[0].mxu0
      %2342 = vdwg.mxu0
      %2343 = vst [vmem:[#allocation3 + $0xa0] sm:$0xff] %v2335
      %2344 = vst [vmem:[#allocation3 + $0xa8] sm:$0xff] %v2340
      %2345 = vmatprep.subr.mxu0 0.0
      %2346 = vmatpush1.msra.mxu0 %v323
      %2347 = vmatprep.subr.mxu0 0.0
      %2348 = vmatpush1.msra.mxu0 %v324
      %2349 = vmatprep.subr.mxu0 0.0
      %2350 = vmatpush1.msra.mxu0 %v325
      %2351 = vmatprep.subr.mxu0 0.0
      %2352 = vmatpush1.msra.mxu0 %v326
      %2353 = vmatprep.subr.mxu0 0.0
      %2354 = vmatpush1.msra.mxu0 %v327
      %2355 = vmatprep.subr.mxu0 0.0
      %2356 = vmatpush1.msra.mxu0 %v328
      %2357 = vmatprep.subr.mxu0 0.0
      %2358 = vmatpush1.msra.mxu0 %v329
      %2359 = vmatprep.subr.mxu0 0.0
      %2360 = vmatpush1.msra.mxu0 %v330
      %2361 = vmatprep.subr.mxu0 0.0
      %2362 = vmatpush1.msra.mxu0 %v331
      %2363 = vmatprep.subr.mxu0 0.0
      %2364 = vmatpush1.msra.mxu0 %v332
      %2365 = vmatprep.subr.mxu0 0.0
      %2366 = vmatpush1.msra.mxu0 %v333
      %2367 = vmatprep.subr.mxu0 0.0
      %2368 = vmatpush1.msra.mxu0 %v334
      %2369 = vmatprep.subr.mxu0 0.0
      %2370 = vmatpush1.msra.mxu0 %v335
      %2371 = vmatprep.subr.mxu0 0.0
      %2372 = vmatpush1.msra.mxu0 %v336
      %2373 = vmatprep.subr.mxu0 0.0
      %2374 = vmatpush1.msra.mxu0 %v337
      %2375 = vmatprep.subr.mxu0 0.0
      %2376 = vmatpush1.msra.mxu0 %v338
      %2377 = vmatprep.subr.mxu0 0.0
      %2378 = vmatpush1.msra.mxu0 0.0
      %2379 = vmatprep.subr.mxu0 0.0
      %2380 = vmatpush1.msra.mxu0 0.0
      %2381 = vmatprep.subr.mxu0 0.0
      %2382 = vmatpush1.msra.mxu0 0.0
      %2383 = vmatprep.subr.mxu0 0.0
      %2384 = vmatpush1.msra.mxu0 0.0
      %2385 = vmatprep.subr.mxu0 0.0
      %2386 = vmatpush1.msra.mxu0 0.0
      %2387 = vmatprep.subr.mxu0 0.0
      %2388 = vmatpush1.msra.mxu0 0.0
      %2389 = vmatprep.subr.mxu0 0.0
      %2390 = vmatpush1.msra.mxu0 0.0
      %2391 = vmatprep.subr.mxu0 0.0
      %2392 = vmatpush1.msra.mxu0 0.0
      %2393 = vmatprep.subr.mxu0 0.0
      %2394 = vmatpush1.msra.mxu0 0.0
      %2395 = vmatprep.subr.mxu0 0.0
      %2396 = vmatpush1.msra.mxu0 0.0
      %2397 = vmatprep.subr.mxu0 0.0
      %2398 = vmatpush1.msra.mxu0 0.0
      %2399 = vmatprep.subr.mxu0 0.0
      %2400 = vmatpush1.msra.mxu0 0.0
      %2401 = vmatprep.subr.mxu0 0.0
      %2402 = vmatpush1.msra.mxu0 0.0
      %2403 = vmatprep.subr.mxu0 0.0
      %2404 = vmatpush1.msra.mxu0 0.0
      %2405 = vmatprep.subr.mxu0 0.0
      %2406 = vmatpush1.msra.mxu0 0.0
      %2407 = vmatprep.subr.mxu0 0.0
      %2408 = vmatpush1.msra.mxu0 0.0
      %2409 = vmatprep.mubr.f32.mxu0 0.0
      %2410 = vmatmul.mubr.f32.gmra.mrb[0].mxu0 %v2335
      %v2411 = vpop.f32.mrb[0].mxu0
      %v2412 = vadd.f32 0.0, %v2411
      %v2413 = vpop.f32.mrb[0].mxu0
      %2414 = vmatprep.mubr.f32.mxu0 0.0
      %2415 = vmatmul.mubr.f32.gmra.mrb[0].mxu0 %v2340
      %v2416 = vpop.f32.mrb[0].mxu0
      %v2417 = vadd.f32 0.0, %v2416
      %v2418 = vpop.f32.mrb[0].mxu0
      %2419 = vdwg.mxu0
      %2420 = vst [vmem:[#allocation3 + $0xb0] sm:$0xff] %v2412
      %2421 = vst [vmem:[#allocation3 + $0xb8] sm:$0xff] %v2417
      %2422 = vmatprep.subr.mxu0 0.0
      %2423 = vmatpush1.msra.mxu0 %v323
      %2424 = vmatprep.subr.mxu0 0.0
      %2425 = vmatpush1.msra.mxu0 %v324
      %2426 = vmatprep.subr.mxu0 0.0
      %2427 = vmatpush1.msra.mxu0 %v325
      %2428 = vmatprep.subr.mxu0 0.0
      %2429 = vmatpush1.msra.mxu0 %v326
      %2430 = vmatprep.subr.mxu0 0.0
      %2431 = vmatpush1.msra.mxu0 %v327
      %2432 = vmatprep.subr.mxu0 0.0
      %2433 = vmatpush1.msra.mxu0 %v328
      %2434 = vmatprep.subr.mxu0 0.0
      %2435 = vmatpush1.msra.mxu0 %v329
      %2436 = vmatprep.subr.mxu0 0.0
      %2437 = vmatpush1.msra.mxu0 %v330
      %2438 = vmatprep.subr.mxu0 0.0
      %2439 = vmatpush1.msra.mxu0 %v331
      %2440 = vmatprep.subr.mxu0 0.0
      %2441 = vmatpush1.msra.mxu0 %v332
      %2442 = vmatprep.subr.mxu0 0.0
      %2443 = vmatpush1.msra.mxu0 %v333
      %2444 = vmatprep.subr.mxu0 0.0
      %2445 = vmatpush1.msra.mxu0 %v334
      %2446 = vmatprep.subr.mxu0 0.0
      %2447 = vmatpush1.msra.mxu0 %v335
      %2448 = vmatprep.subr.mxu0 0.0
      %2449 = vmatpush1.msra.mxu0 %v336
      %2450 = vmatprep.subr.mxu0 0.0
      %2451 = vmatpush1.msra.mxu0 %v337
      %2452 = vmatprep.subr.mxu0 0.0
      %2453 = vmatpush1.msra.mxu0 %v338
      %2454 = vmatprep.subr.mxu0 0.0
      %2455 = vmatpush1.msra.mxu0 0.0
      %2456 = vmatprep.subr.mxu0 0.0
      %2457 = vmatpush1.msra.mxu0 0.0
      %2458 = vmatprep.subr.mxu0 0.0
      %2459 = vmatpush1.msra.mxu0 0.0
      %2460 = vmatprep.subr.mxu0 0.0
      %2461 = vmatpush1.msra.mxu0 0.0
      %2462 = vmatprep.subr.mxu0 0.0
      %2463 = vmatpush1.msra.mxu0 0.0
      %2464 = vmatprep.subr.mxu0 0.0
      %2465 = vmatpush1.msra.mxu0 0.0
      %2466 = vmatprep.subr.mxu0 0.0
      %2467 = vmatpush1.msra.mxu0 0.0
      %2468 = vmatprep.subr.mxu0 0.0
      %2469 = vmatpush1.msra.mxu0 0.0
      %2470 = vmatprep.subr.mxu0 0.0
      %2471 = vmatpush1.msra.mxu0 0.0
      %2472 = vmatprep.subr.mxu0 0.0
      %2473 = vmatpush1.msra.mxu0 0.0
      %2474 = vmatprep.subr.mxu0 0.0
      %2475 = vmatpush1.msra.mxu0 0.0
      %2476 = vmatprep.subr.mxu0 0.0
      %2477 = vmatpush1.msra.mxu0 0.0
      %2478 = vmatprep.subr.mxu0 0.0
      %2479 = vmatpush1.msra.mxu0 0.0
      %2480 = vmatprep.subr.mxu0 0.0
      %2481 = vmatpush1.msra.mxu0 0.0
      %2482 = vmatprep.subr.mxu0 0.0
      %2483 = vmatpush1.msra.mxu0 0.0
      %2484 = vmatprep.subr.mxu0 0.0
      %2485 = vmatpush1.msra.mxu0 0.0
      %2486 = vmatprep.mubr.f32.mxu0 0.0
      %2487 = vmatmul.mubr.f32.gmra.mrb[0].mxu0 %v2412
      %v2488 = vpop.f32.mrb[0].mxu0
      %v2489 = vadd.f32 0.0, %v2488
      %v2490 = vpop.f32.mrb[0].mxu0
      %2491 = vmatprep.mubr.f32.mxu0 0.0
      %2492 = vmatmul.mubr.f32.gmra.mrb[0].mxu0 %v2417
      %v2493 = vpop.f32.mrb[0].mxu0
      %v2494 = vadd.f32 0.0, %v2493
      %v2495 = vpop.f32.mrb[0].mxu0
      %2496 = vdwg.mxu0
      %2497 = vst [vmem:[#allocation3 + $0xc0] sm:$0xff] %v2489
      %2498 = vst [vmem:[#allocation3 + $0xc8] sm:$0xff] %v2494
      %2499 = vmatprep.subr.mxu0 0.0
      %2500 = vmatpush1.msra.mxu0 %v323
      %2501 = vmatprep.subr.mxu0 0.0
      %2502 = vmatpush1.msra.mxu0 %v324
      %2503 = vmatprep.subr.mxu0 0.0
      %2504 = vmatpush1.msra.mxu0 %v325
      %2505 = vmatprep.subr.mxu0 0.0
      %2506 = vmatpush1.msra.mxu0 %v326
      %2507 = vmatprep.subr.mxu0 0.0
      %2508 = vmatpush1.msra.mxu0 %v327
      %2509 = vmatprep.subr.mxu0 0.0
      %2510 = vmatpush1.msra.mxu0 %v328
      %2511 = vmatprep.subr.mxu0 0.0
      %2512 = vmatpush1.msra.mxu0 %v329
      %2513 = vmatprep.subr.mxu0 0.0
      %2514 = vmatpush1.msra.mxu0 %v330
      %2515 = vmatprep.subr.mxu0 0.0
      %2516 = vmatpush1.msra.mxu0 %v331
      %2517 = vmatprep.subr.mxu0 0.0
      %2518 = vmatpush1.msra.mxu0 %v332
      %2519 = vmatprep.subr.mxu0 0.0
      %2520 = vmatpush1.msra.mxu0 %v333
      %2521 = vmatprep.subr.mxu0 0.0
      %2522 = vmatpush1.msra.mxu0 %v334
      %2523 = vmatprep.subr.mxu0 0.0
      %2524 = vmatpush1.msra.mxu0 %v335
      %2525 = vmatprep.subr.mxu0 0.0
      %2526 = vmatpush1.msra.mxu0 %v336
      %2527 = vmatprep.subr.mxu0 0.0
      %2528 = vmatpush1.msra.mxu0 %v337
      %2529 = vmatprep.subr.mxu0 0.0
      %2530 = vmatpush1.msra.mxu0 %v338
      %2531 = vmatprep.subr.mxu0 0.0
      %2532 = vmatpush1.msra.mxu0 0.0
      %2533 = vmatprep.subr.mxu0 0.0
      %2534 = vmatpush1.msra.mxu0 0.0
      %2535 = vmatprep.subr.mxu0 0.0
      %2536 = vmatpush1.msra.mxu0 0.0
      %2537 = vmatprep.subr.mxu0 0.0
      %2538 = vmatpush1.msra.mxu0 0.0
      %2539 = vmatprep.subr.mxu0 0.0
      %2540 = vmatpush1.msra.mxu0 0.0
      %2541 = vmatprep.subr.mxu0 0.0
      %2542 = vmatpush1.msra.mxu0 0.0
      %2543 = vmatprep.subr.mxu0 0.0
      %2544 = vmatpush1.msra.mxu0 0.0
      %2545 = vmatprep.subr.mxu0 0.0
      %2546 = vmatpush1.msra.mxu0 0.0
      %2547 = vmatprep.subr.mxu0 0.0
      %2548 = vmatpush1.msra.mxu0 0.0
      %2549 = vmatprep.subr.mxu0 0.0
      %2550 = vmatpush1.msra.mxu0 0.0
      %2551 = vmatprep.subr.mxu0 0.0
      %2552 = vmatpush1.msra.mxu0 0.0
      %2553 = vmatprep.subr.mxu0 0.0
      %2554 = vmatpush1.msra.mxu0 0.0
      %2555 = vmatprep.subr.mxu0 0.0
      %2556 = vmatpush1.msra.mxu0 0.0
      %2557 = vmatprep.subr.mxu0 0.0
      %2558 = vmatpush1.msra.mxu0 0.0
      %2559 = vmatprep.subr.mxu0 0.0
      %2560 = vmatpush1.msra.mxu0 0.0
      %2561 = vmatprep.subr.mxu0 0.0
      %2562 = vmatpush1.msra.mxu0 0.0
      %2563 = vmatprep.mubr.f32.mxu0 0.0
      %2564 = vmatmul.mubr.f32.gmra.mrb[0].mxu0 %v2489
      %v2565 = vpop.f32.mrb[0].mxu0
      %v2566 = vadd.f32 0.0, %v2565
      %v2567 = vpop.f32.mrb[0].mxu0
      %2568 = vmatprep.mubr.f32.mxu0 0.0
      %2569 = vmatmul.mubr.f32.gmra.mrb[0].mxu0 %v2494
      %v2570 = vpop.f32.mrb[0].mxu0
      %v2571 = vadd.f32 0.0, %v2570
      %v2572 = vpop.f32.mrb[0].mxu0
      %2573 = vdwg.mxu0
      %2574 = vst [vmem:[#allocation3 + $0xd0] sm:$0xff] %v2566
      %2575 = vst [vmem:[#allocation3 + $0xd8] sm:$0xff] %v2571
      %2576 = vmatprep.subr.mxu0 0.0
      %2577 = vmatpush1.msra.mxu0 %v323
      %2578 = vmatprep.subr.mxu0 0.0
      %2579 = vmatpush1.msra.mxu0 %v324
      %2580 = vmatprep.subr.mxu0 0.0
      %2581 = vmatpush1.msra.mxu0 %v325
      %2582 = vmatprep.subr.mxu0 0.0
      %2583 = vmatpush1.msra.mxu0 %v326
      %2584 = vmatprep.subr.mxu0 0.0
      %2585 = vmatpush1.msra.mxu0 %v327
      %2586 = vmatprep.subr.mxu0 0.0
      %2587 = vmatpush1.msra.mxu0 %v328
      %2588 = vmatprep.subr.mxu0 0.0
      %2589 = vmatpush1.msra.mxu0 %v329
      %2590 = vmatprep.subr.mxu0 0.0
      %2591 = vmatpush1.msra.mxu0 %v330
      %2592 = vmatprep.subr.mxu0 0.0
      %2593 = vmatpush1.msra.mxu0 %v331
      %2594 = vmatprep.subr.mxu0 0.0
      %2595 = vmatpush1.msra.mxu0 %v332
      %2596 = vmatprep.subr.mxu0 0.0
      %2597 = vmatpush1.msra.mxu0 %v333
      %2598 = vmatprep.subr.mxu0 0.0
      %2599 = vmatpush1.msra.mxu0 %v334
      %2600 = vmatprep.subr.mxu0 0.0
      %2601 = vmatpush1.msra.mxu0 %v335
      %2602 = vmatprep.subr.mxu0 0.0
      %2603 = vmatpush1.msra.mxu0 %v336
      %2604 = vmatprep.subr.mxu0 0.0
      %2605 = vmatpush1.msra.mxu0 %v337
      %2606 = vmatprep.subr.mxu0 0.0
      %2607 = vmatpush1.msra.mxu0 %v338
      %2608 = vmatprep.subr.mxu0 0.0
      %2609 = vmatpush1.msra.mxu0 0.0
      %2610 = vmatprep.subr.mxu0 0.0
      %2611 = vmatpush1.msra.mxu0 0.0
      %2612 = vmatprep.subr.mxu0 0.0
      %2613 = vmatpush1.msra.mxu0 0.0
      %2614 = vmatprep.subr.mxu0 0.0
      %2615 = vmatpush1.msra.mxu0 0.0
      %2616 = vmatprep.subr.mxu0 0.0
      %2617 = vmatpush1.msra.mxu0 0.0
      %2618 = vmatprep.subr.mxu0 0.0
      %2619 = vmatpush1.msra.mxu0 0.0
      %2620 = vmatprep.subr.mxu0 0.0
      %2621 = vmatpush1.msra.mxu0 0.0
      %2622 = vmatprep.subr.mxu0 0.0
      %2623 = vmatpush1.msra.mxu0 0.0
      %2624 = vmatprep.subr.mxu0 0.0
      %2625 = vmatpush1.msra.mxu0 0.0
      %2626 = vmatprep.subr.mxu0 0.0
      %2627 = vmatpush1.msra.mxu0 0.0
      %2628 = vmatprep.subr.mxu0 0.0
      %2629 = vmatpush1.msra.mxu0 0.0
      %2630 = vmatprep.subr.mxu0 0.0
      %2631 = vmatpush1.msra.mxu0 0.0
      %2632 = vmatprep.subr.mxu0 0.0
      %2633 = vmatpush1.msra.mxu0 0.0
      %2634 = vmatprep.subr.mxu0 0.0
      %2635 = vmatpush1.msra.mxu0 0.0
      %2636 = vmatprep.subr.mxu0 0.0
      %2637 = vmatpush1.msra.mxu0 0.0
      %2638 = vmatprep.subr.mxu0 0.0
      %2639 = vmatpush1.msra.mxu0 0.0
      %2640 = vmatprep.mubr.f32.mxu0 0.0
      %2641 = vmatmul.mubr.f32.gmra.mrb[0].mxu0 %v2566
      %v2642 = vpop.f32.mrb[0].mxu0
      %v2643 = vadd.f32 0.0, %v2642
      %v2644 = vpop.f32.mrb[0].mxu0
      %2645 = vmatprep.mubr.f32.mxu0 0.0
      %2646 = vmatmul.mubr.f32.gmra.mrb[0].mxu0 %v2571
      %v2647 = vpop.f32.mrb[0].mxu0
      %v2648 = vadd.f32 0.0, %v2647
      %v2649 = vpop.f32.mrb[0].mxu0
      %2650 = vdwg.mxu0
      %2651 = vst [vmem:[#allocation3 + $0xe0] sm:$0xff] %v2643
      %2652 = vst [vmem:[#allocation3 + $0xe8] sm:$0xff] %v2648
      %2653 = vmatprep.subr.mxu0 0.0
      %2654 = vmatpush1.msra.mxu0 %v323
      %2655 = vmatprep.subr.mxu0 0.0
      %2656 = vmatpush1.msra.mxu0 %v324
      %2657 = vmatprep.subr.mxu0 0.0
      %2658 = vmatpush1.msra.mxu0 %v325
      %2659 = vmatprep.subr.mxu0 0.0
      %2660 = vmatpush1.msra.mxu0 %v326
      %2661 = vmatprep.subr.mxu0 0.0
      %2662 = vmatpush1.msra.mxu0 %v327
      %2663 = vmatprep.subr.mxu0 0.0
      %2664 = vmatpush1.msra.mxu0 %v328
      %2665 = vmatprep.subr.mxu0 0.0
      %2666 = vmatpush1.msra.mxu0 %v329
      %2667 = vmatprep.subr.mxu0 0.0
      %2668 = vmatpush1.msra.mxu0 %v330
      %2669 = vmatprep.subr.mxu0 0.0
      %2670 = vmatpush1.msra.mxu0 %v331
      %2671 = vmatprep.subr.mxu0 0.0
      %2672 = vmatpush1.msra.mxu0 %v332
      %2673 = vmatprep.subr.mxu0 0.0
      %2674 = vmatpush1.msra.mxu0 %v333
      %2675 = vmatprep.subr.mxu0 0.0
      %2676 = vmatpush1.msra.mxu0 %v334
      %2677 = vmatprep.subr.mxu0 0.0
      %2678 = vmatpush1.msra.mxu0 %v335
      %2679 = vmatprep.subr.mxu0 0.0
      %2680 = vmatpush1.msra.mxu0 %v336
      %2681 = vmatprep.subr.mxu0 0.0
      %2682 = vmatpush1.msra.mxu0 %v337
      %2683 = vmatprep.subr.mxu0 0.0
      %2684 = vmatpush1.msra.mxu0 %v338
      %2685 = vmatprep.subr.mxu0 0.0
      %2686 = vmatpush1.msra.mxu0 0.0
      %2687 = vmatprep.subr.mxu0 0.0
      %2688 = vmatpush1.msra.mxu0 0.0
      %2689 = vmatprep.subr.mxu0 0.0
      %2690 = vmatpush1.msra.mxu0 0.0
      %2691 = vmatprep.subr.mxu0 0.0
      %2692 = vmatpush1.msra.mxu0 0.0
      %2693 = vmatprep.subr.mxu0 0.0
      %2694 = vmatpush1.msra.mxu0 0.0
      %2695 = vmatprep.subr.mxu0 0.0
      %2696 = vmatpush1.msra.mxu0 0.0
      %2697 = vmatprep.subr.mxu0 0.0
      %2698 = vmatpush1.msra.mxu0 0.0
      %2699 = vmatprep.subr.mxu0 0.0
      %2700 = vmatpush1.msra.mxu0 0.0
      %2701 = vmatprep.subr.mxu0 0.0
      %2702 = vmatpush1.msra.mxu0 0.0
      %2703 = vmatprep.subr.mxu0 0.0
      %2704 = vmatpush1.msra.mxu0 0.0
      %2705 = vmatprep.subr.mxu0 0.0
      %2706 = vmatpush1.msra.mxu0 0.0
      %2707 = vmatprep.subr.mxu0 0.0
      %2708 = vmatpush1.msra.mxu0 0.0
      %2709 = vmatprep.subr.mxu0 0.0
      %2710 = vmatpush1.msra.mxu0 0.0
      %2711 = vmatprep.subr.mxu0 0.0
      %2712 = vmatpush1.msra.mxu0 0.0
      %2713 = vmatprep.subr.mxu0 0.0
      %2714 = vmatpush1.msra.mxu0 0.0
      %2715 = vmatprep.subr.mxu0 0.0
      %2716 = vmatpush1.msra.mxu0 0.0
      %2717 = vmatprep.mubr.f32.mxu0 0.0
      %2718 = vmatmul.mubr.f32.gmra.mrb[0].mxu0 %v2643
      %v2719 = vpop.f32.mrb[0].mxu0
      %v2720 = vadd.f32 0.0, %v2719
      %v2721 = vpop.f32.mrb[0].mxu0
      %2722 = vmatprep.mubr.f32.mxu0 0.0
      %2723 = vmatmul.mubr.f32.gmra.mrb[0].mxu0 %v2648
      %v2724 = vpop.f32.mrb[0].mxu0
      %v2725 = vadd.f32 0.0, %v2724
      %v2726 = vpop.f32.mrb[0].mxu0
      %2727 = vdwg.mxu0
      %2728 = vst [vmem:[#allocation3 + $0xf0] sm:$0xff] %v2720
      %2729 = vst [vmem:[#allocation3 + $0xf8] sm:$0xff] %v2725
      %2730 = vmatprep.subr.mxu0 0.0
      %2731 = vmatpush1.msra.mxu0 %v323
      %2732 = vmatprep.subr.mxu0 0.0
      %2733 = vmatpush1.msra.mxu0 %v324
      %2734 = vmatprep.subr.mxu0 0.0
      %2735 = vmatpush1.msra.mxu0 %v325
      %2736 = vmatprep.subr.mxu0 0.0
      %2737 = vmatpush1.msra.mxu0 %v326
      %2738 = vmatprep.subr.mxu0 0.0
      %2739 = vmatpush1.msra.mxu0 %v327
      %2740 = vmatprep.subr.mxu0 0.0
      %2741 = vmatpush1.msra.mxu0 %v328
      %2742 = vmatprep.subr.mxu0 0.0
      %2743 = vmatpush1.msra.mxu0 %v329
      %2744 = vmatprep.subr.mxu0 0.0
      %2745 = vmatpush1.msra.mxu0 %v330
      %2746 = vmatprep.subr.mxu0 0.0
      %2747 = vmatpush1.msra.mxu0 %v331
      %2748 = vmatprep.subr.mxu0 0.0
      %2749 = vmatpush1.msra.mxu0 %v332
      %2750 = vmatprep.subr.mxu0 0.0
      %2751 = vmatpush1.msra.mxu0 %v333
      %2752 = vmatprep.subr.mxu0 0.0
      %2753 = vmatpush1.msra.mxu0 %v334
      %2754 = vmatprep.subr.mxu0 0.0
      %2755 = vmatpush1.msra.mxu0 %v335
      %2756 = vmatprep.subr.mxu0 0.0
      %2757 = vmatpush1.msra.mxu0 %v336
      %2758 = vmatprep.subr.mxu0 0.0
      %2759 = vmatpush1.msra.mxu0 %v337
      %2760 = vmatprep.subr.mxu0 0.0
      %2761 = vmatpush1.msra.mxu0 %v338
      %2762 = vmatprep.subr.mxu0 0.0
      %2763 = vmatpush1.msra.mxu0 0.0
      %2764 = vmatprep.subr.mxu0 0.0
      %2765 = vmatpush1.msra.mxu0 0.0
      %2766 = vmatprep.subr.mxu0 0.0
      %2767 = vmatpush1.msra.mxu0 0.0
      %2768 = vmatprep.subr.mxu0 0.0
      %2769 = vmatpush1.msra.mxu0 0.0
      %2770 = vmatprep.subr.mxu0 0.0
      %2771 = vmatpush1.msra.mxu0 0.0
      %2772 = vmatprep.subr.mxu0 0.0
      %2773 = vmatpush1.msra.mxu0 0.0
      %2774 = vmatprep.subr.mxu0 0.0
      %2775 = vmatpush1.msra.mxu0 0.0
      %2776 = vmatprep.subr.mxu0 0.0
      %2777 = vmatpush1.msra.mxu0 0.0
      %2778 = vmatprep.subr.mxu0 0.0
      %2779 = vmatpush1.msra.mxu0 0.0
      %2780 = vmatprep.subr.mxu0 0.0
      %2781 = vmatpush1.msra.mxu0 0.0
      %2782 = vmatprep.subr.mxu0 0.0
      %2783 = vmatpush1.msra.mxu0 0.0
      %2784 = vmatprep.subr.mxu0 0.0
      %2785 = vmatpush1.msra.mxu0 0.0
      %2786 = vmatprep.subr.mxu0 0.0
      %2787 = vmatpush1.msra.mxu0 0.0
      %2788 = vmatprep.subr.mxu0 0.0
      %2789 = vmatpush1.msra.mxu0 0.0
      %2790 = vmatprep.subr.mxu0 0.0
      %2791 = vmatpush1.msra.mxu0 0.0
      %2792 = vmatprep.subr.mxu0 0.0
      %2793 = vmatpush1.msra.mxu0 0.0
      %2794 = vmatprep.mubr.f32.mxu0 0.0
      %2795 = vmatmul.mubr.f32.gmra.mrb[0].mxu0 %v2720
      %v2796 = vpop.f32.mrb[0].mxu0
      %v2797 = vadd.f32 0.0, %v2796
      %v2798 = vpop.f32.mrb[0].mxu0
      %2799 = vmatprep.mubr.f32.mxu0 0.0
      %2800 = vmatmul.mubr.f32.gmra.mrb[0].mxu0 %v2725
      %v2801 = vpop.f32.mrb[0].mxu0
      %v2802 = vadd.f32 0.0, %v2801
      %v2803 = vpop.f32.mrb[0].mxu0
      %2804 = vdwg.mxu0
      %2805 = vst [vmem:[#allocation3 + $0x100] sm:$0xff] %v2797
      %2806 = vst [vmem:[#allocation3 + $0x108] sm:$0xff] %v2802
      %v2807 = vld [vmem:[%s3] sm:$0xff]
      %v2808 = vld [vmem:[%s3 + $0x8] sm:$0xff]
      %v2809 = vld [vmem:[%s3 + $0x10] sm:$0xff]
      %v2810 = vld [vmem:[%s3 + $0x18] sm:$0xff]
      %v2811 = vld [vmem:[%s3 + $0x20] sm:$0xff]
      %v2812 = vld [vmem:[%s3 + $0x28] sm:$0xff]
      %v2813 = vld [vmem:[%s3 + $0x30] sm:$0xff]
      %v2814 = vld [vmem:[%s3 + $0x38] sm:$0xff]
      %v2815 = vld [vmem:[%s3 + $0x40] sm:$0xff]
      %v2816 = vld [vmem:[#allocation3] sm:$0xff]
      %v2817 = vld [vmem:[#allocation3 + $0x8] sm:$0xff]
      %v2818 = vld [vmem:[#allocation3 + $0x10] sm:$0xff]
      %v2819 = vld [vmem:[#allocation3 + $0x18] sm:$0xff]
      %v2820 = vld [vmem:[#allocation3 + $0x20] sm:$0xff]
      %v2821 = vld [vmem:[#allocation3 + $0x28] sm:$0xff]
      %v2822 = vld [vmem:[#allocation3 + $0x30] sm:$0xff]
      %v2823 = vld [vmem:[#allocation3 + $0x38] sm:$0xff]
      %v2824 = vld [vmem:[#allocation3 + $0x40] sm:$0xff]
      %v2825 = vld [vmem:[#allocation3 + $0x48] sm:$0xff]
      %v2826 = vld [vmem:[#allocation3 + $0x50] sm:$0xff]
      %v2827 = vld [vmem:[#allocation3 + $0x58] sm:$0xff]
      %v2828 = vld [vmem:[#allocation3 + $0x60] sm:$0xff]
      %v2829 = vld [vmem:[#allocation3 + $0x68] sm:$0xff]
      %v2830 = vld [vmem:[#allocation3 + $0x70] sm:$0xff]
      %v2831 = vld [vmem:[#allocation3 + $0x78] sm:$0xff]
      %v2832 = vld [vmem:[#allocation3 + $0x80] sm:$0xff]
      %v2833 = vld [vmem:[#allocation3 + $0x88] sm:$0xff]
      %v2834 = vld [vmem:[#allocation3 + $0x90] sm:$0xff]
      %v2835 = vld [vmem:[#allocation3 + $0x98] sm:$0xff]
      %v2836 = vld [vmem:[#allocation3 + $0xa0] sm:$0xff]
      %v2837 = vld [vmem:[#allocation3 + $0xa8] sm:$0xff]
      %v2838 = vld [vmem:[#allocation3 + $0xb0] sm:$0xff]
      %v2839 = vld [vmem:[#allocation3 + $0xb8] sm:$0xff]
      %v2840 = vld [vmem:[#allocation3 + $0xc0] sm:$0xff]
      %v2841 = vld [vmem:[#allocation3 + $0xc8] sm:$0xff]
      %v2842 = vld [vmem:[#allocation3 + $0xd0] sm:$0xff]
      %v2843 = vld [vmem:[#allocation3 + $0xd8] sm:$0xff]
      %v2844 = vld [vmem:[#allocation3 + $0xe0] sm:$0xff]
      %v2845 = vld [vmem:[#allocation3 + $0xe8] sm:$0xff]
      %v2846 = vld [vmem:[#allocation3 + $0xf0] sm:$0xff]
      %v2847 = vld [vmem:[#allocation3 + $0xf8] sm:$0xff]
      %v2848 = vld [vmem:[#allocation3 + $0x100] sm:$0xff]
      %v2849 = vld [vmem:[#allocation3 + $0x108] sm:$0xff]
      %vm2850 = vcmask 130048
      %v2852 = vsel %vm2850, %v2809, 0
      %v2855 = vsel %vm2850, %v2812, 0
      %v2858 = vsel %vm2850, %v2815, 0
      %2860 = vmatprep.subr.mxu0 0.0
      %2861 = vmatpush1.msra.mxu0 %v2816
      %2862 = vmatprep.subr.mxu0 0.0
      %2863 = vmatpush1.msra.mxu0 %v2817
      %2864 = vmatprep.subr.mxu0 0.0
      %2865 = vmatpush1.msra.mxu0 %v2818
      %2866 = vmatprep.subr.mxu0 0.0
      %2867 = vmatpush1.msra.mxu0 %v2819
      %2868 = vmatprep.subr.mxu0 0.0
      %2869 = vmatpush1.msra.mxu0 %v2820
      %2870 = vmatprep.subr.mxu0 0.0
      %2871 = vmatpush1.msra.mxu0 %v2821
      %2872 = vmatprep.subr.mxu0 0.0
      %2873 = vmatpush1.msra.mxu0 %v2822
      %2874 = vmatprep.subr.mxu0 0.0
      %2875 = vmatpush1.msra.mxu0 %v2823
      %2876 = vmatprep.subr.mxu0 0.0
      %2877 = vmatpush1.msra.mxu0 %v2824
      %2878 = vmatprep.subr.mxu0 0.0
      %2879 = vmatpush1.msra.mxu0 %v2825
      %2880 = vmatprep.subr.mxu0 0.0
      %2881 = vmatpush1.msra.mxu0 %v2826
      %2882 = vmatprep.subr.mxu0 0.0
      %2883 = vmatpush1.msra.mxu0 %v2827
      %2884 = vmatprep.subr.mxu0 0.0
      %2885 = vmatpush1.msra.mxu0 %v2828
      %2886 = vmatprep.subr.mxu0 0.0
      %2887 = vmatpush1.msra.mxu0 %v2829
      %2888 = vmatprep.subr.mxu0 0.0
      %2889 = vmatpush1.msra.mxu0 %v2830
      %2890 = vmatprep.subr.mxu0 0.0
      %2891 = vmatpush1.msra.mxu0 %v2831
      %2892 = vmatprep.subr.mxu0 0.0
      %2893 = vmatpush1.msra.mxu0 %v2832
      %2894 = vmatprep.subr.mxu0 0.0
      %2895 = vmatpush1.msra.mxu0 %v2833
      %2896 = vmatprep.subr.mxu0 0.0
      %2897 = vmatpush1.msra.mxu0 %v2834
      %2898 = vmatprep.subr.mxu0 0.0
      %2899 = vmatpush1.msra.mxu0 %v2835
      %2900 = vmatprep.subr.mxu0 0.0
      %2901 = vmatpush1.msra.mxu0 %v2836
      %2902 = vmatprep.subr.mxu0 0.0
      %2903 = vmatpush1.msra.mxu0 %v2837
      %2904 = vmatprep.subr.mxu0 0.0
      %2905 = vmatpush1.msra.mxu0 %v2838
      %2906 = vmatprep.subr.mxu0 0.0
      %2907 = vmatpush1.msra.mxu0 %v2839
      %2908 = vmatprep.subr.mxu0 0.0
      %2909 = vmatpush1.msra.mxu0 %v2840
      %2910 = vmatprep.subr.mxu0 0.0
      %2911 = vmatpush1.msra.mxu0 %v2841
      %2912 = vmatprep.subr.mxu0 0.0
      %2913 = vmatpush1.msra.mxu0 %v2842
      %2914 = vmatprep.subr.mxu0 0.0
      %2915 = vmatpush1.msra.mxu0 %v2843
      %2916 = vmatprep.subr.mxu0 0.0
      %2917 = vmatpush1.msra.mxu0 %v2844
      %2918 = vmatprep.subr.mxu0 0.0
      %2919 = vmatpush1.msra.mxu0 %v2845
      %2920 = vmatprep.subr.mxu0 0.0
      %2921 = vmatpush1.msra.mxu0 %v2846
      %2922 = vmatprep.subr.mxu0 0.0
      %2923 = vmatpush1.msra.mxu0 %v2847
      %2924 = vmatprep.mubr.f32.mxu0 %v2808
      %2925 = vmatmul.mubr.f32.gmra.mrb[0].mxu0 %v2807
      %v2926 = vpop.f32.mrb[0].mxu0
      %v2927 = vadd.f32 0.0, %v2926
      %v2928 = vpop.f32.mrb[0].mxu0
      %2929 = vmatprep.mubr.f32.mxu0 %v2811
      %2930 = vmatmul.mubr.f32.gmra.mrb[0].mxu0 %v2810
      %v2931 = vpop.f32.mrb[0].mxu0
      %v2932 = vadd.f32 0.0, %v2931
      %v2933 = vpop.f32.mrb[0].mxu0
      %2934 = vmatprep.mubr.f32.mxu0 %v2814
      %2935 = vmatmul.mubr.f32.gmra.mrb[0].mxu0 %v2813
      %v2936 = vpop.f32.mrb[0].mxu0
      %v2937 = vadd.f32 0.0, %v2936
      %v2938 = vpop.f32.mrb[0].mxu0
      %2939 = vdwg.mxu0
      %2940 = vmatprep.subr.mxu0 0.0
      %2941 = vmatpush1.msra.mxu0 %v2848
      %2942 = vmatprep.subr.mxu0 0.0
      %2943 = vmatpush1.msra.mxu0 %v2849
      %2944 = vmatprep.subr.mxu0 0.0
      %2945 = vmatpush1.msra.mxu0 0.0
      %2946 = vmatprep.subr.mxu0 0.0
      %2947 = vmatpush1.msra.mxu0 0.0
      %2948 = vmatprep.subr.mxu0 0.0
      %2949 = vmatpush1.msra.mxu0 0.0
      %2950 = vmatprep.subr.mxu0 0.0
      %2951 = vmatpush1.msra.mxu0 0.0
      %2952 = vmatprep.subr.mxu0 0.0
      %2953 = vmatpush1.msra.mxu0 0.0
      %2954 = vmatprep.subr.mxu0 0.0
      %2955 = vmatpush1.msra.mxu0 0.0
      %2956 = vmatprep.subr.mxu0 0.0
      %2957 = vmatpush1.msra.mxu0 0.0
      %2958 = vmatprep.subr.mxu0 0.0
      %2959 = vmatpush1.msra.mxu0 0.0
      %2960 = vmatprep.subr.mxu0 0.0
      %2961 = vmatpush1.msra.mxu0 0.0
      %2962 = vmatprep.subr.mxu0 0.0
      %2963 = vmatpush1.msra.mxu0 0.0
      %2964 = vmatprep.subr.mxu0 0.0
      %2965 = vmatpush1.msra.mxu0 0.0
      %2966 = vmatprep.subr.mxu0 0.0
      %2967 = vmatpush1.msra.mxu0 0.0
      %2968 = vmatprep.subr.mxu0 0.0
      %2969 = vmatpush1.msra.mxu0 0.0
      %2970 = vmatprep.subr.mxu0 0.0
      %2971 = vmatpush1.msra.mxu0 0.0
      %2972 = vmatprep.subr.mxu0 0.0
      %2973 = vmatpush1.msra.mxu0 0.0
      %2974 = vmatprep.subr.mxu0 0.0
      %2975 = vmatpush1.msra.mxu0 0.0
      %2976 = vmatprep.subr.mxu0 0.0
      %2977 = vmatpush1.msra.mxu0 0.0
      %2978 = vmatprep.subr.mxu0 0.0
      %2979 = vmatpush1.msra.mxu0 0.0
      %2980 = vmatprep.subr.mxu0 0.0
      %2981 = vmatpush1.msra.mxu0 0.0
      %2982 = vmatprep.subr.mxu0 0.0
      %2983 = vmatpush1.msra.mxu0 0.0
      %2984 = vmatprep.subr.mxu0 0.0
      %2985 = vmatpush1.msra.mxu0 0.0
      %2986 = vmatprep.subr.mxu0 0.0
      %2987 = vmatpush1.msra.mxu0 0.0
      %2988 = vmatprep.subr.mxu0 0.0
      %2989 = vmatpush1.msra.mxu0 0.0
      %2990 = vmatprep.subr.mxu0 0.0
      %2991 = vmatpush1.msra.mxu0 0.0
      %2992 = vmatprep.subr.mxu0 0.0
      %2993 = vmatpush1.msra.mxu0 0.0
      %2994 = vmatprep.subr.mxu0 0.0
      %2995 = vmatpush1.msra.mxu0 0.0
      %2996 = vmatprep.subr.mxu0 0.0
      %2997 = vmatpush1.msra.mxu0 0.0
      %2998 = vmatprep.subr.mxu0 0.0
      %2999 = vmatpush1.msra.mxu0 0.0
      %3000 = vmatprep.subr.mxu0 0.0
      %3001 = vmatpush1.msra.mxu0 0.0
      %3002 = vmatprep.subr.mxu0 0.0
      %3003 = vmatpush1.msra.mxu0 0.0
      %3004 = vmatprep.mubr.f32.mxu0 0.0
      %3005 = vmatmul.mubr.f32.gmra.mrb[0].mxu0 %v2852
      %v3006 = vpop.f32.mrb[0].mxu0
      %v3007 = vadd.f32 %v2927, %v3006
      %v3008 = vpop.f32.mrb[0].mxu0
      %3009 = vmatprep.mubr.f32.mxu0 0.0
      %3010 = vmatmul.mubr.f32.gmra.mrb[0].mxu0 %v2855
      %v3011 = vpop.f32.mrb[0].mxu0
      %v3012 = vadd.f32 %v2932, %v3011
      %v3013 = vpop.f32.mrb[0].mxu0
      %3014 = vmatprep.mubr.f32.mxu0 0.0
      %3015 = vmatmul.mubr.f32.gmra.mrb[0].mxu0 %v2858
      %v3016 = vpop.f32.mrb[0].mxu0
      %v3017 = vadd.f32 %v2937, %v3016
      %v3018 = vpop.f32.mrb[0].mxu0
      %3019 = vdwg.mxu0
      %v3020 = vand.u32 2147483647, %v3007
      %v3021 = vand.u32 2147483647, %v3012
      %v3022 = vand.u32 2147483647, %v3017
      %vm3025 = vcmask 1043456
      %v3026 = vrot.slane %v1571, 4
      %v3027 = vrot.slane %v1572, 4
      %v3028 = vsel %vm3025, %v3026, %v3027
      %v3035 = vrot.slane %v3020, 4
      %v3036 = vrot.slane %v3021, 4
      %v3037 = vsel %vm3025, %v3035, %v3036
      %v3038 = vrot.slane %v3022, 4
      %v3039 = vsel %vm3025, %v3036, %v3038
      %v3044 = vsel %vm3025, %v339, %v3026
      %v3045 = vsel %vm3025, %v3027, %v3035
      %v3046 = vld [vmem:[%s4] sm:$0xff]
      %v3047 = vld [vmem:[%s5] sm:$0xff]
      %v3048 = vld [vmem:[%s5 + $0x8] sm:$0xff]
      %v3049 = vld [vmem:[%s5 + $0x10] sm:$0xff]
      %v3050 = vld [vmem:[%s5 + $0x18] sm:$0xff]
      %v3051 = vld [vmem:[%s5 + $0x20] sm:$0xff]
      %v3052 = vld [vmem:[%s5 + $0x28] sm:$0xff]
      %v3053 = vld [vmem:[%s5 + $0x30] sm:$0xff]
      %v3054 = vld [vmem:[%s5 + $0x38] sm:$0xff]
      %v3055 = vld [vmem:[%s5 + $0x40] sm:$0xff]
      %v3056 = vld [vmem:[%s5 + $0x48] sm:$0xff]
      %v3057 = vld [vmem:[%s5 + $0x50] sm:$0xff]
      %v3058 = vld [vmem:[%s5 + $0x58] sm:$0xff]
      %v3059 = vld [vmem:[%s5 + $0x60] sm:$0xff]
      %v3060 = vld [vmem:[%s5 + $0x68] sm:$0xff]
      %v3061 = vld [vmem:[%s5 + $0x70] sm:$0xff]
      %v3062 = vld [vmem:[%s5 + $0x78] sm:$0xff]
      %3063 = vmatprep.subr.mxu0 0.0
      %3064 = vmatpush1.msra.mxu0 %v3047
      %3065 = vmatprep.subr.mxu0 0.0
      %3066 = vmatpush1.msra.mxu0 %v3048
      %3067 = vmatprep.subr.mxu0 0.0
      %3068 = vmatpush1.msra.mxu0 %v3049
      %3069 = vmatprep.subr.mxu0 0.0
      %3070 = vmatpush1.msra.mxu0 %v3050
      %3071 = vmatprep.subr.mxu0 0.0
      %3072 = vmatpush1.msra.mxu0 %v3051
      %3073 = vmatprep.subr.mxu0 0.0
      %3074 = vmatpush1.msra.mxu0 %v3052
      %3075 = vmatprep.subr.mxu0 0.0
      %3076 = vmatpush1.msra.mxu0 %v3053
      %3077 = vmatprep.subr.mxu0 0.0
      %3078 = vmatpush1.msra.mxu0 %v3054
      %3079 = vmatprep.subr.mxu0 0.0
      %3080 = vmatpush1.msra.mxu0 %v3055
      %3081 = vmatprep.subr.mxu0 0.0
      %3082 = vmatpush1.msra.mxu0 %v3056
      %3083 = vmatprep.subr.mxu0 0.0
      %3084 = vmatpush1.msra.mxu0 %v3057
      %3085 = vmatprep.subr.mxu0 0.0
      %3086 = vmatpush1.msra.mxu0 %v3058
      %3087 = vmatprep.subr.mxu0 0.0
      %3088 = vmatpush1.msra.mxu0 %v3059
      %3089 = vmatprep.subr.mxu0 0.0
      %3090 = vmatpush1.msra.mxu0 %v3060
      %3091 = vmatprep.subr.mxu0 0.0
      %3092 = vmatpush1.msra.mxu0 %v3061
      %3093 = vmatprep.subr.mxu0 0.0
      %3094 = vmatpush1.msra.mxu0 %v3062
      %3095 = vmatprep.subr.mxu0 0.0
      %3096 = vmatpush1.msra.mxu0 0.0
      %3097 = vmatprep.subr.mxu0 0.0
      %3098 = vmatpush1.msra.mxu0 0.0
      %3099 = vmatprep.subr.mxu0 0.0
      %3100 = vmatpush1.msra.mxu0 0.0
      %3101 = vmatprep.subr.mxu0 0.0
      %3102 = vmatpush1.msra.mxu0 0.0
      %3103 = vmatprep.subr.mxu0 0.0
      %3104 = vmatpush1.msra.mxu0 0.0
      %3105 = vmatprep.subr.mxu0 0.0
      %3106 = vmatpush1.msra.mxu0 0.0
      %3107 = vmatprep.subr.mxu0 0.0
      %3108 = vmatpush1.msra.mxu0 0.0
      %3109 = vmatprep.subr.mxu0 0.0
      %3110 = vmatpush1.msra.mxu0 0.0
      %3111 = vmatprep.subr.mxu0 0.0
      %3112 = vmatpush1.msra.mxu0 0.0
      %3113 = vmatprep.subr.mxu0 0.0
      %3114 = vmatpush1.msra.mxu0 0.0
      %3115 = vmatprep.subr.mxu0 0.0
      %3116 = vmatpush1.msra.mxu0 0.0
      %3117 = vmatprep.subr.mxu0 0.0
      %3118 = vmatpush1.msra.mxu0 0.0
      %3119 = vmatprep.subr.mxu0 0.0
      %3120 = vmatpush1.msra.mxu0 0.0
      %3121 = vmatprep.subr.mxu0 0.0
      %3122 = vmatpush1.msra.mxu0 0.0
      %3123 = vmatprep.subr.mxu0 0.0
      %3124 = vmatpush1.msra.mxu0 0.0
      %3125 = vmatprep.subr.mxu0 0.0
      %3126 = vmatpush1.msra.mxu0 0.0
      %3127 = vmatprep.mubr.f32.mxu0 0.0
      %3128 = vmatmul.mubr.f32.gmra.mrb[0].mxu0 %v3044
      %v3129 = vpop.f32.mrb[0].mxu0
      %v3130 = vadd.f32 0.0, %v3129
      %v3131 = vpop.f32.mrb[0].mxu0
      %3132 = vmatprep.mubr.f32.mxu0 0.0
      %3133 = vmatmul.mubr.f32.gmra.mrb[0].mxu0 %v3028
      %v3134 = vpop.f32.mrb[0].mxu0
      %v3135 = vadd.f32 0.0, %v3134
      %v3136 = vpop.f32.mrb[0].mxu0
      %3137 = vmatprep.mubr.f32.mxu0 0.0
      %3138 = vmatmul.mubr.f32.gmra.mrb[0].mxu0 %v3045
      %v3139 = vpop.f32.mrb[0].mxu0
      %v3140 = vadd.f32 0.0, %v3139
      %v3141 = vpop.f32.mrb[0].mxu0
      %3142 = vmatprep.mubr.f32.mxu0 0.0
      %3143 = vmatmul.mubr.f32.gmra.mrb[0].mxu0 %v3037
      %v3144 = vpop.f32.mrb[0].mxu0
      %v3145 = vadd.f32 0.0, %v3144
      %v3146 = vpop.f32.mrb[0].mxu0
      %3147 = vmatprep.mubr.f32.mxu0 0.0
      %3148 = vmatmul.mubr.f32.gmra.mrb[0].mxu0 %v3039
      %v3149 = vpop.f32.mrb[0].mxu0
      %v3150 = vadd.f32 0.0, %v3149
      %v3151 = vpop.f32.mrb[0].mxu0
      %3152 = vmatprep.mubr.f32.mxu0 0.0
      %3153 = vmatmul.mubr.f32.gmra.mrb[0].mxu0 %v3038
      %v3154 = vpop.f32.mrb[0].mxu0
      %v3155 = vadd.f32 0.0, %v3154
      %v3156 = vpop.f32.mrb[0].mxu0
      %3157 = vdwg.mxu0
      %v3158 = vmul.f32 %v3130, 0.0625
      %v3159 = vmul.f32 %v3135, 0.0625
      %v3160 = vmul.f32 %v3140, 0.0625
      %v3161 = vmul.f32 %v3145, 0.0625
      %v3162 = vmul.f32 %v3150, 0.0625
      %v3163 = vmul.f32 %v3155, 0.0625
      %vm3164 = vcmask 64512
      %v3166 = vsel %vm3164, %v3158, 0
      %v3169 = vsel %vm3164, %v3159, 0
      %v3172 = vsel %vm3164, %v3160, 0
      %v3175 = vsel %vm3164, %v3161, 0
      %v3178 = vsel %vm3164, %v3162, 0
      %v3181 = vsel %vm3164, %v3163, 0
      %3183 = vmatprep.subr.mxu0 0.0
      %3184 = vmatpush1.msra.mxu0 %v3046
      %3185 = vmatprep.subr.mxu0 0.0
      %3186 = vmatpush1.msra.mxu0 0.0
      %3187 = vmatprep.subr.mxu0 0.0
      %3188 = vmatpush1.msra.mxu0 0.0
      %3189 = vmatprep.subr.mxu0 0.0
      %3190 = vmatpush1.msra.mxu0 0.0
      %3191 = vmatprep.subr.mxu0 0.0
      %3192 = vmatpush1.msra.mxu0 0.0
      %3193 = vmatprep.subr.mxu0 0.0
      %3194 = vmatpush1.msra.mxu0 0.0
      %3195 = vmatprep.subr.mxu0 0.0
      %3196 = vmatpush1.msra.mxu0 0.0
      %3197 = vmatprep.subr.mxu0 0.0
      %3198 = vmatpush1.msra.mxu0 0.0
      %3199 = vmatprep.subr.mxu0 0.0
      %3200 = vmatpush1.msra.mxu0 0.0
      %3201 = vmatprep.subr.mxu0 0.0
      %3202 = vmatpush1.msra.mxu0 0.0
      %3203 = vmatprep.subr.mxu0 0.0
      %3204 = vmatpush1.msra.mxu0 0.0
      %3205 = vmatprep.subr.mxu0 0.0
      %3206 = vmatpush1.msra.mxu0 0.0
      %3207 = vmatprep.subr.mxu0 0.0
      %3208 = vmatpush1.msra.mxu0 0.0
      %3209 = vmatprep.subr.mxu0 0.0
      %3210 = vmatpush1.msra.mxu0 0.0
      %3211 = vmatprep.subr.mxu0 0.0
      %3212 = vmatpush1.msra.mxu0 0.0
      %3213 = vmatprep.subr.mxu0 0.0
      %3214 = vmatpush1.msra.mxu0 0.0
      %3215 = vmatprep.subr.mxu0 0.0
      %3216 = vmatpush1.msra.mxu0 0.0
      %3217 = vmatprep.subr.mxu0 0.0
      %3218 = vmatpush1.msra.mxu0 0.0
      %3219 = vmatprep.subr.mxu0 0.0
      %3220 = vmatpush1.msra.mxu0 0.0
      %3221 = vmatprep.subr.mxu0 0.0
      %3222 = vmatpush1.msra.mxu0 0.0
      %3223 = vmatprep.subr.mxu0 0.0
      %3224 = vmatpush1.msra.mxu0 0.0
      %3225 = vmatprep.subr.mxu0 0.0
      %3226 = vmatpush1.msra.mxu0 0.0
      %3227 = vmatprep.subr.mxu0 0.0
      %3228 = vmatpush1.msra.mxu0 0.0
      %3229 = vmatprep.subr.mxu0 0.0
      %3230 = vmatpush1.msra.mxu0 0.0
      %3231 = vmatprep.subr.mxu0 0.0
      %3232 = vmatpush1.msra.mxu0 0.0
      %3233 = vmatprep.subr.mxu0 0.0
      %3234 = vmatpush1.msra.mxu0 0.0
      %3235 = vmatprep.subr.mxu0 0.0
      %3236 = vmatpush1.msra.mxu0 0.0
      %3237 = vmatprep.subr.mxu0 0.0
      %3238 = vmatpush1.msra.mxu0 0.0
      %3239 = vmatprep.subr.mxu0 0.0
      %3240 = vmatpush1.msra.mxu0 0.0
      %3241 = vmatprep.subr.mxu0 0.0
      %3242 = vmatpush1.msra.mxu0 0.0
      %3243 = vmatprep.subr.mxu0 0.0
      %3244 = vmatpush1.msra.mxu0 0.0
      %3245 = vmatprep.subr.mxu0 0.0
      %3246 = vmatpush1.msra.mxu0 0.0
      %3247 = vmatprep.mubr.f32.mxu0 0.0
      %3248 = vmatmul.mubr.f32.gmra.mrb[0].mxu0 %v3166
      %v3249 = vpop.f32.mrb[0].mxu0
      %v3250 = vadd.f32 0.0, %v3249
      %v3251 = vpop.f32.mrb[0].mxu0
      %3252 = vmatprep.mubr.f32.mxu0 0.0
      %3253 = vmatmul.mubr.f32.gmra.mrb[0].mxu0 %v3169
      %v3254 = vpop.f32.mrb[0].mxu0
      %v3255 = vadd.f32 0.0, %v3254
      %v3256 = vpop.f32.mrb[0].mxu0
      %3257 = vmatprep.mubr.f32.mxu0 0.0
      %3258 = vmatmul.mubr.f32.gmra.mrb[0].mxu0 %v3172
      %v3259 = vpop.f32.mrb[0].mxu0
      %v3260 = vadd.f32 0.0, %v3259
      %v3261 = vpop.f32.mrb[0].mxu0
      %3262 = vmatprep.mubr.f32.mxu0 0.0
      %3263 = vmatmul.mubr.f32.gmra.mrb[0].mxu0 %v3175
      %v3264 = vpop.f32.mrb[0].mxu0
      %v3265 = vadd.f32 0.0, %v3264
      %v3266 = vpop.f32.mrb[0].mxu0
      %3267 = vmatprep.mubr.f32.mxu0 0.0
      %3268 = vmatmul.mubr.f32.gmra.mrb[0].mxu0 %v3178
      %v3269 = vpop.f32.mrb[0].mxu0
      %v3270 = vadd.f32 0.0, %v3269
      %v3271 = vpop.f32.mrb[0].mxu0
      %3272 = vmatprep.mubr.f32.mxu0 0.0
      %3273 = vmatmul.mubr.f32.gmra.mrb[0].mxu0 %v3181
      %v3274 = vpop.f32.mrb[0].mxu0
      %v3275 = vadd.f32 0.0, %v3274
      %v3276 = vpop.f32.mrb[0].mxu0
      %3277 = vdwg.mxu0
      %v3278 = vsub.f32 %v3044, %v3250
      %v3279 = vsub.f32 %v3028, %v3255
      %v3280 = vsub.f32 %v3045, %v3260
      %v3281 = vsub.f32 %v3037, %v3265
      %v3282 = vsub.f32 %v3039, %v3270
      %v3283 = vsub.f32 %v3038, %v3275
      %v3284 = vmul.f32 %v3278, %v3278
      %v3285 = vmul.f32 %v3279, %v3279
      %v3286 = vmul.f32 %v3280, %v3280
      %v3287 = vmul.f32 %v3281, %v3281
      %v3288 = vmul.f32 %v3282, %v3282
      %v3289 = vmul.f32 %v3283, %v3283
      %3290 = vmatprep.subr.mxu0 0.0
      %3291 = vmatpush1.msra.mxu0 %v3047
      %3292 = vmatprep.subr.mxu0 0.0
      %3293 = vmatpush1.msra.mxu0 %v3048
      %3294 = vmatprep.subr.mxu0 0.0
      %3295 = vmatpush1.msra.mxu0 %v3049
      %3296 = vmatprep.subr.mxu0 0.0
      %3297 = vmatpush1.msra.mxu0 %v3050
      %3298 = vmatprep.subr.mxu0 0.0
      %3299 = vmatpush1.msra.mxu0 %v3051
      %3300 = vmatprep.subr.mxu0 0.0
      %3301 = vmatpush1.msra.mxu0 %v3052
      %3302 = vmatprep.subr.mxu0 0.0
      %3303 = vmatpush1.msra.mxu0 %v3053
      %3304 = vmatprep.subr.mxu0 0.0
      %3305 = vmatpush1.msra.mxu0 %v3054
      %3306 = vmatprep.subr.mxu0 0.0
      %3307 = vmatpush1.msra.mxu0 %v3055
      %3308 = vmatprep.subr.mxu0 0.0
      %3309 = vmatpush1.msra.mxu0 %v3056
      %3310 = vmatprep.subr.mxu0 0.0
      %3311 = vmatpush1.msra.mxu0 %v3057
      %3312 = vmatprep.subr.mxu0 0.0
      %3313 = vmatpush1.msra.mxu0 %v3058
      %3314 = vmatprep.subr.mxu0 0.0
      %3315 = vmatpush1.msra.mxu0 %v3059
      %3316 = vmatprep.subr.mxu0 0.0
      %3317 = vmatpush1.msra.mxu0 %v3060
      %3318 = vmatprep.subr.mxu0 0.0
      %3319 = vmatpush1.msra.mxu0 %v3061
      %3320 = vmatprep.subr.mxu0 0.0
      %3321 = vmatpush1.msra.mxu0 %v3062
      %3322 = vmatprep.subr.mxu0 0.0
      %3323 = vmatpush1.msra.mxu0 0.0
      %3324 = vmatprep.subr.mxu0 0.0
      %3325 = vmatpush1.msra.mxu0 0.0
      %3326 = vmatprep.subr.mxu0 0.0
      %3327 = vmatpush1.msra.mxu0 0.0
      %3328 = vmatprep.subr.mxu0 0.0
      %3329 = vmatpush1.msra.mxu0 0.0
      %3330 = vmatprep.subr.mxu0 0.0
      %3331 = vmatpush1.msra.mxu0 0.0
      %3332 = vmatprep.subr.mxu0 0.0
      %3333 = vmatpush1.msra.mxu0 0.0
      %3334 = vmatprep.subr.mxu0 0.0
      %3335 = vmatpush1.msra.mxu0 0.0
      %3336 = vmatprep.subr.mxu0 0.0
      %3337 = vmatpush1.msra.mxu0 0.0
      %3338 = vmatprep.subr.mxu0 0.0
      %3339 = vmatpush1.msra.mxu0 0.0
      %3340 = vmatprep.subr.mxu0 0.0
      %3341 = vmatpush1.msra.mxu0 0.0
      %3342 = vmatprep.subr.mxu0 0.0
      %3343 = vmatpush1.msra.mxu0 0.0
      %3344 = vmatprep.subr.mxu0 0.0
      %3345 = vmatpush1.msra.mxu0 0.0
      %3346 = vmatprep.subr.mxu0 0.0
      %3347 = vmatpush1.msra.mxu0 0.0
      %3348 = vmatprep.subr.mxu0 0.0
      %3349 = vmatpush1.msra.mxu0 0.0
      %3350 = vmatprep.subr.mxu0 0.0
      %3351 = vmatpush1.msra.mxu0 0.0
      %3352 = vmatprep.subr.mxu0 0.0
      %3353 = vmatpush1.msra.mxu0 0.0
      %3354 = vmatprep.mubr.f32.mxu0 0.0
      %3355 = vmatmul.mubr.f32.gmra.mrb[0].mxu0 %v3284
      %v3356 = vpop.f32.mrb[0].mxu0
      %v3357 = vadd.f32 0.0, %v3356
      %v3358 = vpop.f32.mrb[0].mxu0
      %3359 = vmatprep.mubr.f32.mxu0 0.0
      %3360 = vmatmul.mubr.f32.gmra.mrb[0].mxu0 %v3285
      %v3361 = vpop.f32.mrb[0].mxu0
      %v3362 = vadd.f32 0.0, %v3361
      %v3363 = vpop.f32.mrb[0].mxu0
      %3364 = vmatprep.mubr.f32.mxu0 0.0
      %3365 = vmatmul.mubr.f32.gmra.mrb[0].mxu0 %v3286
      %v3366 = vpop.f32.mrb[0].mxu0
      %v3367 = vadd.f32 0.0, %v3366
      %v3368 = vpop.f32.mrb[0].mxu0
      %3369 = vmatprep.mubr.f32.mxu0 0.0
      %3370 = vmatmul.mubr.f32.gmra.mrb[0].mxu0 %v3287
      %v3371 = vpop.f32.mrb[0].mxu0
      %v3372 = vadd.f32 0.0, %v3371
      %v3373 = vpop.f32.mrb[0].mxu0
      %3374 = vmatprep.mubr.f32.mxu0 0.0
      %3375 = vmatmul.mubr.f32.gmra.mrb[0].mxu0 %v3288
      %v3376 = vpop.f32.mrb[0].mxu0
      %v3377 = vadd.f32 0.0, %v3376
      %v3378 = vpop.f32.mrb[0].mxu0
      %3379 = vmatprep.mubr.f32.mxu0 0.0
      %3380 = vmatmul.mubr.f32.gmra.mrb[0].mxu0 %v3289
      %v3381 = vpop.f32.mrb[0].mxu0
      %v3382 = vadd.f32 0.0, %v3381
      %v3383 = vpop.f32.mrb[0].mxu0
      %3384 = vdwg.mxu0
      %v3385 = vmul.f32 %v3357, 0.0625
      %v3386 = vmul.f32 %v3362, 0.0625
      %v3387 = vmul.f32 %v3367, 0.0625
      %v3388 = vmul.f32 %v3372, 0.0625
      %v3389 = vmul.f32 %v3377, 0.0625
      %v3390 = vmul.f32 %v3382, 0.0625
      %v3391 = vmul.f32 %v3284, %v3278
      %v3392 = vmul.f32 %v3285, %v3279
      %v3393 = vmul.f32 %v3286, %v3280
      %v3394 = vmul.f32 %v3287, %v3281
      %v3395 = vmul.f32 %v3288, %v3282
      %v3396 = vmul.f32 %v3289, %v3283
      %3397 = vmatprep.subr.mxu0 0.0
      %3398 = vmatpush1.msra.mxu0 %v3047
      %3399 = vmatprep.subr.mxu0 0.0
      %3400 = vmatpush1.msra.mxu0 %v3048
      %3401 = vmatprep.subr.mxu0 0.0
      %3402 = vmatpush1.msra.mxu0 %v3049
      %3403 = vmatprep.subr.mxu0 0.0
      %3404 = vmatpush1.msra.mxu0 %v3050
      %3405 = vmatprep.subr.mxu0 0.0
      %3406 = vmatpush1.msra.mxu0 %v3051
      %3407 = vmatprep.subr.mxu0 0.0
      %3408 = vmatpush1.msra.mxu0 %v3052
      %3409 = vmatprep.subr.mxu0 0.0
      %3410 = vmatpush1.msra.mxu0 %v3053
      %3411 = vmatprep.subr.mxu0 0.0
      %3412 = vmatpush1.msra.mxu0 %v3054
      %3413 = vmatprep.subr.mxu0 0.0
      %3414 = vmatpush1.msra.mxu0 %v3055
      %3415 = vmatprep.subr.mxu0 0.0
      %3416 = vmatpush1.msra.mxu0 %v3056
      %3417 = vmatprep.subr.mxu0 0.0
      %3418 = vmatpush1.msra.mxu0 %v3057
      %3419 = vmatprep.subr.mxu0 0.0
      %3420 = vmatpush1.msra.mxu0 %v3058
      %3421 = vmatprep.subr.mxu0 0.0
      %3422 = vmatpush1.msra.mxu0 %v3059
      %3423 = vmatprep.subr.mxu0 0.0
      %3424 = vmatpush1.msra.mxu0 %v3060
      %3425 = vmatprep.subr.mxu0 0.0
      %3426 = vmatpush1.msra.mxu0 %v3061
      %3427 = vmatprep.subr.mxu0 0.0
      %3428 = vmatpush1.msra.mxu0 %v3062
      %3429 = vmatprep.subr.mxu0 0.0
      %3430 = vmatpush1.msra.mxu0 0.0
      %3431 = vmatprep.subr.mxu0 0.0
      %3432 = vmatpush1.msra.mxu0 0.0
      %3433 = vmatprep.subr.mxu0 0.0
      %3434 = vmatpush1.msra.mxu0 0.0
      %3435 = vmatprep.subr.mxu0 0.0
      %3436 = vmatpush1.msra.mxu0 0.0
      %3437 = vmatprep.subr.mxu0 0.0
      %3438 = vmatpush1.msra.mxu0 0.0
      %3439 = vmatprep.subr.mxu0 0.0
      %3440 = vmatpush1.msra.mxu0 0.0
      %3441 = vmatprep.subr.mxu0 0.0
      %3442 = vmatpush1.msra.mxu0 0.0
      %3443 = vmatprep.subr.mxu0 0.0
      %3444 = vmatpush1.msra.mxu0 0.0
      %3445 = vmatprep.subr.mxu0 0.0
      %3446 = vmatpush1.msra.mxu0 0.0
      %3447 = vmatprep.subr.mxu0 0.0
      %3448 = vmatpush1.msra.mxu0 0.0
      %3449 = vmatprep.subr.mxu0 0.0
      %3450 = vmatpush1.msra.mxu0 0.0
      %3451 = vmatprep.subr.mxu0 0.0
      %3452 = vmatpush1.msra.mxu0 0.0
      %3453 = vmatprep.subr.mxu0 0.0
      %3454 = vmatpush1.msra.mxu0 0.0
      %3455 = vmatprep.subr.mxu0 0.0
      %3456 = vmatpush1.msra.mxu0 0.0
      %3457 = vmatprep.subr.mxu0 0.0
      %3458 = vmatpush1.msra.mxu0 0.0
      %3459 = vmatprep.subr.mxu0 0.0
      %3460 = vmatpush1.msra.mxu0 0.0
      %3461 = vmatprep.mubr.f32.mxu0 0.0
      %3462 = vmatmul.mubr.f32.gmra.mrb[0].mxu0 %v3391
      %v3463 = vpop.f32.mrb[0].mxu0
      %v3464 = vadd.f32 0.0, %v3463
      %v3465 = vpop.f32.mrb[0].mxu0
      %3466 = vmatprep.mubr.f32.mxu0 0.0
      %3467 = vmatmul.mubr.f32.gmra.mrb[0].mxu0 %v3392
      %v3468 = vpop.f32.mrb[0].mxu0
      %v3469 = vadd.f32 0.0, %v3468
      %v3470 = vpop.f32.mrb[0].mxu0
      %3471 = vmatprep.mubr.f32.mxu0 0.0
      %3472 = vmatmul.mubr.f32.gmra.mrb[0].mxu0 %v3393
      %v3473 = vpop.f32.mrb[0].mxu0
      %v3474 = vadd.f32 0.0, %v3473
      %v3475 = vpop.f32.mrb[0].mxu0
      %3476 = vmatprep.mubr.f32.mxu0 0.0
      %3477 = vmatmul.mubr.f32.gmra.mrb[0].mxu0 %v3394
      %v3478 = vpop.f32.mrb[0].mxu0
      %v3479 = vadd.f32 0.0, %v3478
      %v3480 = vpop.f32.mrb[0].mxu0
      %3481 = vmatprep.mubr.f32.mxu0 0.0
      %3482 = vmatmul.mubr.f32.gmra.mrb[0].mxu0 %v3395
      %v3483 = vpop.f32.mrb[0].mxu0
      %v3484 = vadd.f32 0.0, %v3483
      %v3485 = vpop.f32.mrb[0].mxu0
      %3486 = vmatprep.mubr.f32.mxu0 0.0
      %3487 = vmatmul.mubr.f32.gmra.mrb[0].mxu0 %v3396
      %v3488 = vpop.f32.mrb[0].mxu0
      %v3489 = vadd.f32 0.0, %v3488
      %v3490 = vpop.f32.mrb[0].mxu0
      %3491 = vdwg.mxu0
      %v3492 = vmul.f32 %v3464, 0.0625
      %v3493 = vmul.f32 %v3469, 0.0625
      %v3494 = vmul.f32 %v3474, 0.0625
      %v3495 = vmul.f32 %v3479, 0.0625
      %v3496 = vmul.f32 %v3484, 0.0625
      %v3497 = vmul.f32 %v3489, 0.0625
      %v3498 = vmul.f32 %v3284, %v3284
      %v3499 = vmul.f32 %v3285, %v3285
      %v3500 = vmul.f32 %v3286, %v3286
      %v3501 = vmul.f32 %v3287, %v3287
      %v3502 = vmul.f32 %v3288, %v3288
      %v3503 = vmul.f32 %v3289, %v3289
      %3504 = vmatprep.subr.mxu0 0.0
      %3505 = vmatpush1.msra.mxu0 %v3047
      %3506 = vmatprep.subr.mxu0 0.0
      %3507 = vmatpush1.msra.mxu0 %v3048
      %3508 = vmatprep.subr.mxu0 0.0
      %3509 = vmatpush1.msra.mxu0 %v3049
      %3510 = vmatprep.subr.mxu0 0.0
      %3511 = vmatpush1.msra.mxu0 %v3050
      %3512 = vmatprep.subr.mxu0 0.0
      %3513 = vmatpush1.msra.mxu0 %v3051
      %3514 = vmatprep.subr.mxu0 0.0
      %3515 = vmatpush1.msra.mxu0 %v3052
      %3516 = vmatprep.subr.mxu0 0.0
      %3517 = vmatpush1.msra.mxu0 %v3053
      %3518 = vmatprep.subr.mxu0 0.0
      %3519 = vmatpush1.msra.mxu0 %v3054
      %3520 = vmatprep.subr.mxu0 0.0
      %3521 = vmatpush1.msra.mxu0 %v3055
      %3522 = vmatprep.subr.mxu0 0.0
      %3523 = vmatpush1.msra.mxu0 %v3056
      %3524 = vmatprep.subr.mxu0 0.0
      %3525 = vmatpush1.msra.mxu0 %v3057
      %3526 = vmatprep.subr.mxu0 0.0
      %3527 = vmatpush1.msra.mxu0 %v3058
      %3528 = vmatprep.subr.mxu0 0.0
      %3529 = vmatpush1.msra.mxu0 %v3059
      %3530 = vmatprep.subr.mxu0 0.0
      %3531 = vmatpush1.msra.mxu0 %v3060
      %3532 = vmatprep.subr.mxu0 0.0
      %3533 = vmatpush1.msra.mxu0 %v3061
      %3534 = vmatprep.subr.mxu0 0.0
      %3535 = vmatpush1.msra.mxu0 %v3062
      %3536 = vmatprep.subr.mxu0 0.0
      %3537 = vmatpush1.msra.mxu0 0.0
      %3538 = vmatprep.subr.mxu0 0.0
      %3539 = vmatpush1.msra.mxu0 0.0
      %3540 = vmatprep.subr.mxu0 0.0
      %3541 = vmatpush1.msra.mxu0 0.0
      %3542 = vmatprep.subr.mxu0 0.0
      %3543 = vmatpush1.msra.mxu0 0.0
      %3544 = vmatprep.subr.mxu0 0.0
      %3545 = vmatpush1.msra.mxu0 0.0
      %3546 = vmatprep.subr.mxu0 0.0
      %3547 = vmatpush1.msra.mxu0 0.0
      %3548 = vmatprep.subr.mxu0 0.0
      %3549 = vmatpush1.msra.mxu0 0.0
      %3550 = vmatprep.subr.mxu0 0.0
      %3551 = vmatpush1.msra.mxu0 0.0
      %3552 = vmatprep.subr.mxu0 0.0
      %3553 = vmatpush1.msra.mxu0 0.0
      %3554 = vmatprep.subr.mxu0 0.0
      %3555 = vmatpush1.msra.mxu0 0.0
      %3556 = vmatprep.subr.mxu0 0.0
      %3557 = vmatpush1.msra.mxu0 0.0
      %3558 = vmatprep.subr.mxu0 0.0
      %3559 = vmatpush1.msra.mxu0 0.0
      %3560 = vmatprep.subr.mxu0 0.0
      %3561 = vmatpush1.msra.mxu0 0.0
      %3562 = vmatprep.subr.mxu0 0.0
      %3563 = vmatpush1.msra.mxu0 0.0
      %3564 = vmatprep.subr.mxu0 0.0
      %3565 = vmatpush1.msra.mxu0 0.0
      %3566 = vmatprep.subr.mxu0 0.0
      %3567 = vmatpush1.msra.mxu0 0.0
      %3568 = vmatprep.mubr.f32.mxu0 0.0
      %3569 = vmatmul.mubr.f32.gmra.mrb[0].mxu0 %v3498
      %v3570 = vpop.f32.mrb[0].mxu0
      %v3571 = vadd.f32 0.0, %v3570
      %v3572 = vpop.f32.mrb[0].mxu0
      %3573 = vmatprep.mubr.f32.mxu0 0.0
      %3574 = vmatmul.mubr.f32.gmra.mrb[0].mxu0 %v3499
      %v3575 = vpop.f32.mrb[0].mxu0
      %v3576 = vadd.f32 0.0, %v3575
      %v3577 = vpop.f32.mrb[0].mxu0
      %3578 = vmatprep.mubr.f32.mxu0 0.0
      %3579 = vmatmul.mubr.f32.gmra.mrb[0].mxu0 %v3500
      %v3580 = vpop.f32.mrb[0].mxu0
      %v3581 = vadd.f32 0.0, %v3580
      %v3582 = vpop.f32.mrb[0].mxu0
      %3583 = vmatprep.mubr.f32.mxu0 0.0
      %3584 = vmatmul.mubr.f32.gmra.mrb[0].mxu0 %v3501
      %v3585 = vpop.f32.mrb[0].mxu0
      %v3586 = vadd.f32 0.0, %v3585
      %v3587 = vpop.f32.mrb[0].mxu0
      %3588 = vmatprep.mubr.f32.mxu0 0.0
      %3589 = vmatmul.mubr.f32.gmra.mrb[0].mxu0 %v3502
      %v3590 = vpop.f32.mrb[0].mxu0
      %v3591 = vadd.f32 0.0, %v3590
      %v3592 = vpop.f32.mrb[0].mxu0
      %3593 = vmatprep.mubr.f32.mxu0 0.0
      %3594 = vmatmul.mubr.f32.gmra.mrb[0].mxu0 %v3503
      %v3595 = vpop.f32.mrb[0].mxu0
      %v3596 = vadd.f32 0.0, %v3595
      %v3597 = vpop.f32.mrb[0].mxu0
      %3598 = vdwg.mxu0
      %v3599 = vmul.f32 %v3571, 0.0625
      %v3600 = vmul.f32 %v3576, 0.0625
      %v3601 = vmul.f32 %v3581, 0.0625
      %v3602 = vmul.f32 %v3586, 0.0625
      %v3603 = vmul.f32 %v3591, 0.0625
      %v3604 = vmul.f32 %v3596, 0.0625
      %v3605 = vrsqrt.pop %v3385
      %v3606 = vmul.f32 %v3385, %v3605
      %vm3607 = vcmp.eq.f32.partialorder %v3385, inf
      %v3608 = vsel %vm3607, %v3385, %v3606
      %vm3609 = vcmp.eq.f32.partialorder %v3385, 0.0
      %v3610 = vand.u32 %v3385, 2147483648
      %v3611 = vsel %vm3609, %v3610, %v3608
      %v3612 = vrsqrt.pop %v3386
      %v3613 = vmul.f32 %v3386, %v3612
      %vm3614 = vcmp.eq.f32.partialorder %v3386, inf
      %v3615 = vsel %vm3614, %v3386, %v3613
      %vm3616 = vcmp.eq.f32.partialorder %v3386, 0.0
      %v3617 = vand.u32 %v3386, 2147483648
      %v3618 = vsel %vm3616, %v3617, %v3615
      %v3619 = vrsqrt.pop %v3387
      %v3620 = vmul.f32 %v3387, %v3619
      %vm3621 = vcmp.eq.f32.partialorder %v3387, inf
      %v3622 = vsel %vm3621, %v3387, %v3620
      %vm3623 = vcmp.eq.f32.partialorder %v3387, 0.0
      %v3624 = vand.u32 %v3387, 2147483648
      %v3625 = vsel %vm3623, %v3624, %v3622
      %v3626 = vrsqrt.pop %v3388
      %v3627 = vmul.f32 %v3388, %v3626
      %vm3628 = vcmp.eq.f32.partialorder %v3388, inf
      %v3629 = vsel %vm3628, %v3388, %v3627
      %vm3630 = vcmp.eq.f32.partialorder %v3388, 0.0
      %v3631 = vand.u32 %v3388, 2147483648
      %v3632 = vsel %vm3630, %v3631, %v3629
      %v3633 = vrsqrt.pop %v3389
      %v3634 = vmul.f32 %v3389, %v3633
      %vm3635 = vcmp.eq.f32.partialorder %v3389, inf
      %v3636 = vsel %vm3635, %v3389, %v3634
      %vm3637 = vcmp.eq.f32.partialorder %v3389, 0.0
      %v3638 = vand.u32 %v3389, 2147483648
      %v3639 = vsel %vm3637, %v3638, %v3636
      %v3640 = vrsqrt.pop %v3390
      %v3641 = vmul.f32 %v3390, %v3640
      %vm3642 = vcmp.eq.f32.partialorder %v3390, inf
      %v3643 = vsel %vm3642, %v3390, %v3641
      %vm3644 = vcmp.eq.f32.partialorder %v3390, 0.0
      %v3645 = vand.u32 %v3390, 2147483648
      %v3646 = vsel %vm3644, %v3645, %v3643
      %v3647 = vmul.f32 %v3385, %v3611
      %v3648 = vmul.f32 %v3386, %v3618
      %v3649 = vmul.f32 %v3387, %v3625
      %v3650 = vmul.f32 %v3388, %v3632
      %v3651 = vmul.f32 %v3389, %v3639
      %v3652 = vmul.f32 %v3390, %v3646
      %v3653 = vrcp.pop %v3647
      %v3654 = vmul.f32 %v3492, %v3653
      %v3655 = vrcp.pop %v3648
      %v3656 = vmul.f32 %v3493, %v3655
      %v3657 = vrcp.pop %v3649
      %v3658 = vmul.f32 %v3494, %v3657
      %v3659 = vrcp.pop %v3650
      %v3660 = vmul.f32 %v3495, %v3659
      %v3661 = vrcp.pop %v3651
      %v3662 = vmul.f32 %v3496, %v3661
      %v3663 = vrcp.pop %v3652
      %v3664 = vmul.f32 %v3497, %v3663
      %vm3665 = vcmp.gt.f32.partialorder %v3654, 1e+15
      %vm3666 = vcmp.gt.f32.partialorder %v3656, 1e+15
      %vm3667 = vcmp.gt.f32.partialorder %v3658, 1e+15
      %vm3668 = vcmp.gt.f32.partialorder %v3660, 1e+15
      %vm3669 = vcmp.gt.f32.partialorder %v3662, 1e+15
      %vm3670 = vcmp.gt.f32.partialorder %v3664, 1e+15
      %v3671 = vsel %vm3665, 0.0, %v3654
      %v3672 = vsel %vm3666, 0.0, %v3656
      %v3673 = vsel %vm3667, 0.0, %v3658
      %v3674 = vsel %vm3668, 0.0, %v3660
      %v3675 = vsel %vm3669, 0.0, %v3662
      %v3676 = vsel %vm3670, 0.0, %v3664
      %vm3677 = vcmp.ne.f32.partialorder %v3671, %v3671
      %vm3678 = vcmp.ne.f32.partialorder %v3672, %v3672
      %vm3679 = vcmp.ne.f32.partialorder %v3673, %v3673
      %vm3680 = vcmp.ne.f32.partialorder %v3674, %v3674
      %vm3681 = vcmp.ne.f32.partialorder %v3675, %v3675
      %vm3682 = vcmp.ne.f32.partialorder %v3676, %v3676
      %v3683 = vsel %vm3677, 0.0, %v3671
      %v3684 = vsel %vm3678, 0.0, %v3672
      %v3685 = vsel %vm3679, 0.0, %v3673
      %v3686 = vsel %vm3680, 0.0, %v3674
      %v3687 = vsel %vm3681, 0.0, %v3675
      %v3688 = vsel %vm3682, 0.0, %v3676
      %v3689 = vmul.f32 %v3385, %v3385
      %v3690 = vmul.f32 %v3386, %v3386
      %v3691 = vmul.f32 %v3387, %v3387
      %v3692 = vmul.f32 %v3388, %v3388
      %v3693 = vmul.f32 %v3389, %v3389
      %v3694 = vmul.f32 %v3390, %v3390
      %v3695 = vrcp.pop %v3689
      %v3696 = vmul.f32 %v3599, %v3695
      %v3697 = vrcp.pop %v3690
      %v3698 = vmul.f32 %v3600, %v3697
      %v3699 = vrcp.pop %v3691
      %v3700 = vmul.f32 %v3601, %v3699
      %v3701 = vrcp.pop %v3692
      %v3702 = vmul.f32 %v3602, %v3701
      %v3703 = vrcp.pop %v3693
      %v3704 = vmul.f32 %v3603, %v3703
      %v3705 = vrcp.pop %v3694
      %v3706 = vmul.f32 %v3604, %v3705
      %v3707 = vsub.f32 %v3696, 3.0
      %v3708 = vsub.f32 %v3698, 3.0
      %v3709 = vsub.f32 %v3700, 3.0
      %v3710 = vsub.f32 %v3702, 3.0
      %v3711 = vsub.f32 %v3704, 3.0
      %v3712 = vsub.f32 %v3706, 3.0
      %vm3713 = vcmp.gt.f32.partialorder %v3707, 1e+15
      %vm3714 = vcmp.gt.f32.partialorder %v3708, 1e+15
      %vm3715 = vcmp.gt.f32.partialorder %v3709, 1e+15
      %vm3716 = vcmp.gt.f32.partialorder %v3710, 1e+15
      %vm3717 = vcmp.gt.f32.partialorder %v3711, 1e+15
      %vm3718 = vcmp.gt.f32.partialorder %v3712, 1e+15
      %v3719 = vsel %vm3713, -3.0, %v3707
      %v3720 = vsel %vm3714, -3.0, %v3708
      %v3721 = vsel %vm3715, -3.0, %v3709
      %v3722 = vsel %vm3716, -3.0, %v3710
      %v3723 = vsel %vm3717, -3.0, %v3711
      %v3724 = vsel %vm3718, -3.0, %v3712
      %vm3725 = vcmp.ne.f32.partialorder %v3719, %v3719
      %vm3726 = vcmp.ne.f32.partialorder %v3720, %v3720
      %vm3727 = vcmp.ne.f32.partialorder %v3721, %v3721
      %vm3728 = vcmp.ne.f32.partialorder %v3722, %v3722
      %vm3729 = vcmp.ne.f32.partialorder %v3723, %v3723
      %vm3730 = vcmp.ne.f32.partialorder %v3724, %v3724
      %v3731 = vsel %vm3725, -3.0, %v3719
      %v3732 = vsel %vm3726, -3.0, %v3720
      %v3733 = vsel %vm3727, -3.0, %v3721
      %v3734 = vsel %vm3728, -3.0, %v3722
      %v3735 = vsel %vm3729, -3.0, %v3723
      %v3736 = vsel %vm3730, -3.0, %v3724
      %v3743 = vrot.slane %v3385, 4
      %v3744 = vrot.slane %v3386, 4
      %v3745 = vsel %vm3025, %v3743, %v3744
      %v3746 = vrot.slane %v3387, 4
      %v3747 = vsel %vm3025, %v3744, %v3746
      %v3748 = vrot.slane %v3388, 4
      %v3749 = vsel %vm3025, %v3746, %v3748
      %v3750 = vrot.slane %v3389, 4
      %v3751 = vsel %vm3025, %v3748, %v3750
      %v3752 = vrot.slane %v3390, 4
      %v3753 = vsel %vm3025, %v3750, %v3752
      %v3766 = vrot.slane %v3731, 4
      %v3767 = vrot.slane %v3732, 4
      %v3768 = vsel %vm3025, %v3766, %v3767
      %v3769 = vrot.slane %v3733, 4
      %v3770 = vsel %vm3025, %v3767, %v3769
      %v3771 = vrot.slane %v3734, 4
      %v3772 = vsel %vm3025, %v3769, %v3771
      %v3773 = vrot.slane %v3735, 4
      %v3774 = vsel %vm3025, %v3771, %v3773
      %v3775 = vrot.slane %v3736, 4
      %v3776 = vsel %vm3025, %v3773, %v3775
      %v3783 = vsel %vm3025, %v3163, %v3743
      %v3784 = vsel %vm3025, %v3688, %v3766
      %vm3785 = vcmp.ge.f32.partialorder %v3158, 0.0
      %vm3786 = vcmp.ge.f32.partialorder %v3159, 0.0
      %vm3787 = vcmp.ge.f32.partialorder %v3160, 0.0
      %vm3788 = vcmp.ge.f32.partialorder %v3161, 0.0
      %vm3789 = vcmp.ge.f32.partialorder %v3162, 0.0
      %vm3790 = vcmp.ge.f32.partialorder %v3783, 0.0
      %vm3791 = vcmp.ge.f32.partialorder %v3745, 0.0
      %vm3792 = vcmp.ge.f32.partialorder %v3747, 0.0
      %vm3793 = vcmp.ge.f32.partialorder %v3749, 0.0
      %vm3794 = vcmp.ge.f32.partialorder %v3751, 0.0
      %vm3795 = vcmp.ge.f32.partialorder %v3753, 0.0
      %vm3796 = vcmp.ge.f32.partialorder %v3683, 0.0
      %vm3797 = vcmp.ge.f32.partialorder %v3684, 0.0
      %vm3798 = vcmp.ge.f32.partialorder %v3685, 0.0
      %vm3799 = vcmp.ge.f32.partialorder %v3686, 0.0
      %vm3800 = vcmp.ge.f32.partialorder %v3687, 0.0
      %vm3801 = vcmp.ge.f32.partialorder %v3784, 0.0
      %vm3802 = vcmp.ge.f32.partialorder %v3768, 0.0
      %vm3803 = vcmp.ge.f32.partialorder %v3770, 0.0
      %vm3804 = vcmp.ge.f32.partialorder %v3772, 0.0
      %vm3805 = vcmp.ge.f32.partialorder %v3774, 0.0
      %vm3806 = vcmp.ge.f32.partialorder %v3776, 0.0
      %v3807 = vmul.f32 %v3158, 0.01
      %v3808 = vmul.f32 %v3159, 0.01
      %v3809 = vmul.f32 %v3160, 0.01
      %v3810 = vmul.f32 %v3161, 0.01
      %v3811 = vmul.f32 %v3162, 0.01
      %v3812 = vmul.f32 %v3783, 0.01
      %v3813 = vmul.f32 %v3745, 0.01
      %v3814 = vmul.f32 %v3747, 0.01
      %v3815 = vmul.f32 %v3749, 0.01
      %v3816 = vmul.f32 %v3751, 0.01
      %v3817 = vmul.f32 %v3753, 0.01
      %v3818 = vmul.f32 %v3683, 0.01
      %v3819 = vmul.f32 %v3684, 0.01
      %v3820 = vmul.f32 %v3685, 0.01
      %v3821 = vmul.f32 %v3686, 0.01
      %v3822 = vmul.f32 %v3687, 0.01
      %v3823 = vmul.f32 %v3784, 0.01
      %v3824 = vmul.f32 %v3768, 0.01
      %v3825 = vmul.f32 %v3770, 0.01
      %v3826 = vmul.f32 %v3772, 0.01
      %v3827 = vmul.f32 %v3774, 0.01
      %v3828 = vmul.f32 %v3776, 0.01
      %v3829 = vsel %vm3785, %v3158, %v3807
      %v3830 = vsel %vm3786, %v3159, %v3808
      %v3831 = vsel %vm3787, %v3160, %v3809
      %v3832 = vsel %vm3788, %v3161, %v3810
      %v3833 = vsel %vm3789, %v3162, %v3811
      %v3834 = vsel %vm3790, %v3783, %v3812
      %v3835 = vsel %vm3791, %v3745, %v3813
      %v3836 = vsel %vm3792, %v3747, %v3814
      %v3837 = vsel %vm3793, %v3749, %v3815
      %v3838 = vsel %vm3794, %v3751, %v3816
      %v3839 = vsel %vm3795, %v3753, %v3817
      %v3840 = vsel %vm3796, %v3683, %v3818
      %v3841 = vsel %vm3797, %v3684, %v3819
      %v3842 = vsel %vm3798, %v3685, %v3820
      %v3843 = vsel %vm3799, %v3686, %v3821
      %v3844 = vsel %vm3800, %v3687, %v3822
      %v3845 = vsel %vm3801, %v3784, %v3823
      %v3846 = vsel %vm3802, %v3768, %v3824
      %v3847 = vsel %vm3803, %v3770, %v3825
      %v3848 = vsel %vm3804, %v3772, %v3826
      %v3849 = vsel %vm3805, %v3774, %v3827
      %v3850 = vsel %vm3806, %v3776, %v3828
      %v3851 = vld [vmem:[%s6] sm:$0xff]
      %v3852 = vld [vmem:[%s6 + $0x8] sm:$0xff]
      %v3853 = vld [vmem:[%s6 + $0x10] sm:$0xff]
      %v3854 = vld [vmem:[%s6 + $0x18] sm:$0xff]
      %v3855 = vld [vmem:[%s6 + $0x20] sm:$0xff]
      %v3856 = vld [vmem:[%s6 + $0x28] sm:$0xff]
      %v3857 = vld [vmem:[%s6 + $0x30] sm:$0xff]
      %v3858 = vld [vmem:[%s6 + $0x38] sm:$0xff]
      %v3859 = vld [vmem:[%s7] sm:$0xff]
      %v3860 = vld [vmem:[%s7 + $0x8] sm:$0xff]
      %v3861 = vld [vmem:[%s7 + $0x10] sm:$0xff]
      %v3862 = vld [vmem:[%s7 + $0x18] sm:$0xff]
      %3864 = vset.pattern.permute.xlu0 0
      %3865 = vperm.xlu0 %3864, %v3859
      %v3866 = vpop.permute.xlu0 %3865
      %3869 = vset.pattern.permute.xlu0 0
      %3870 = vperm.xlu0 %3869, %v3860
      %v3871 = vpop.permute.xlu0 %3870
      %3874 = vset.pattern.permute.xlu0 0
      %3875 = vperm.xlu0 %3874, %v3861
      %v3876 = vpop.permute.xlu0 %3875
      %3879 = vset.pattern.permute.xlu0 0
      %3880 = vperm.xlu0 %3879, %v3862
      %v3881 = vpop.permute.xlu0 %3880
      %vm3883 = vcmask 392192
      %v3885 = vsel %vm3883, %v3852, 0
      %v3888 = vsel %vm3883, %v3854, 0
      %v3891 = vsel %vm3883, %v3856, 0
      %v3894 = vsel %vm3883, %v3858, 0
      %3896 = vmatprep.subr.mxu0 0.0
      %3897 = vmatpush1.msra.mxu0 %v3829
      %3898 = vmatprep.subr.mxu0 0.0
      %3899 = vmatpush1.msra.mxu0 %v3830
      %3900 = vmatprep.subr.mxu0 0.0
      %3901 = vmatpush1.msra.mxu0 %v3831
      %3902 = vmatprep.subr.mxu0 0.0
      %3903 = vmatpush1.msra.mxu0 %v3832
      %3904 = vmatprep.subr.mxu0 0.0
      %3905 = vmatpush1.msra.mxu0 %v3833
      %3906 = vmatprep.subr.mxu0 0.0
      %3907 = vmatpush1.msra.mxu0 %v3834
      %3908 = vmatprep.subr.mxu0 0.0
      %3909 = vmatpush1.msra.mxu0 %v3835
      %3910 = vmatprep.subr.mxu0 0.0
      %3911 = vmatpush1.msra.mxu0 %v3836
      %3912 = vmatprep.subr.mxu0 0.0
      %3913 = vmatpush1.msra.mxu0 %v3837
      %3914 = vmatprep.subr.mxu0 0.0
      %3915 = vmatpush1.msra.mxu0 %v3838
      %3916 = vmatprep.subr.mxu0 0.0
      %3917 = vmatpush1.msra.mxu0 %v3839
      %3918 = vmatprep.subr.mxu0 0.0
      %3919 = vmatpush1.msra.mxu0 %v3840
      %3920 = vmatprep.subr.mxu0 0.0
      %3921 = vmatpush1.msra.mxu0 %v3841
      %3922 = vmatprep.subr.mxu0 0.0
      %3923 = vmatpush1.msra.mxu0 %v3842
      %3924 = vmatprep.subr.mxu0 0.0
      %3925 = vmatpush1.msra.mxu0 %v3843
      %3926 = vmatprep.subr.mxu0 0.0
      %3927 = vmatpush1.msra.mxu0 %v3844
      %3928 = vmatprep.subr.mxu0 0.0
      %3929 = vmatpush1.msra.mxu0 %v3845
      %3930 = vmatprep.subr.mxu0 0.0
      %3931 = vmatpush1.msra.mxu0 %v3846
      %3932 = vmatprep.subr.mxu0 0.0
      %3933 = vmatpush1.msra.mxu0 %v3847
      %3934 = vmatprep.subr.mxu0 0.0
      %3935 = vmatpush1.msra.mxu0 %v3848
      %3936 = vmatprep.subr.mxu0 0.0
      %3937 = vmatpush1.msra.mxu0 %v3849
      %3938 = vmatprep.subr.mxu0 0.0
      %3939 = vmatpush1.msra.mxu0 %v3850
      %3940 = vmatprep.subr.mxu0 0.0
      %3941 = vmatpush1.msra.mxu0 0.0
      %3942 = vmatprep.subr.mxu0 0.0
      %3943 = vmatpush1.msra.mxu0 0.0
      %3944 = vmatprep.subr.mxu0 0.0
      %3945 = vmatpush1.msra.mxu0 0.0
      %3946 = vmatprep.subr.mxu0 0.0
      %3947 = vmatpush1.msra.mxu0 0.0
      %3948 = vmatprep.subr.mxu0 0.0
      %3949 = vmatpush1.msra.mxu0 0.0
      %3950 = vmatprep.subr.mxu0 0.0
      %3951 = vmatpush1.msra.mxu0 0.0
      %3952 = vmatprep.subr.mxu0 0.0
      %3953 = vmatpush1.msra.mxu0 0.0
      %3954 = vmatprep.subr.mxu0 0.0
      %3955 = vmatpush1.msra.mxu0 0.0
      %3956 = vmatprep.subr.mxu0 0.0
      %3957 = vmatpush1.msra.mxu0 0.0
      %3958 = vmatprep.subr.mxu0 0.0
      %3959 = vmatpush1.msra.mxu0 0.0
      %3960 = vmatprep.mubr.f32.mxu0 %v3885
      %3961 = vmatmul.mubr.f32.gmra.mrb[0].mxu0 %v3851
      %v3962 = vpop.f32.mrb[0].mxu0
      %v3963 = vadd.f32 %v3866, %v3962
      %v3964 = vpop.f32.mrb[0].mxu0
      %3965 = vmatprep.mubr.f32.mxu0 %v3888
      %3966 = vmatmul.mubr.f32.gmra.mrb[0].mxu0 %v3853
      %v3967 = vpop.f32.mrb[0].mxu0
      %v3968 = vadd.f32 %v3871, %v3967
      %v3969 = vpop.f32.mrb[0].mxu0
      %3970 = vmatprep.mubr.f32.mxu0 %v3891
      %3971 = vmatmul.mubr.f32.gmra.mrb[0].mxu0 %v3855
      %v3972 = vpop.f32.mrb[0].mxu0
      %v3973 = vadd.f32 %v3876, %v3972
      %v3974 = vpop.f32.mrb[0].mxu0
      %3975 = vmatprep.mubr.f32.mxu0 %v3894
      %3976 = vmatmul.mubr.f32.gmra.mrb[0].mxu0 %v3857
      %v3977 = vpop.f32.mrb[0].mxu0
      %v3978 = vadd.f32 %v3881, %v3977
      %v3979 = vpop.f32.mrb[0].mxu0
      %3980 = vdwg.mxu0
      %3981 = vst.msk [vmem:[%s322] sm:$0xff] %vm3164, %v3963
      %3982 = vst.msk [vmem:[%s322 + $0x8] sm:$0xff] %vm3164, %v3968
      %3983 = vst.msk [vmem:[%s322 + $0x10] sm:$0xff] %vm3164, %v3973
      %3984 = vst.msk [vmem:[%s322 + $0x18] sm:$0xff] %vm3164, %v3978
      %p3985 = scmp.lt.s32.totalorder %s19, 1
      %s3986 = scalar_select %p3985, %s19, 1
      %s3987 = smul.addr %s3986, 4
      %s3988 = smul.addr %s3987, 8
      %s3989 = scalar_lea.vmem %s8, %s3988
      // Predicated region
      $region53: #{tsnet_forward.1} parent=51 // pred_check
        %p3990 = pneg %p215
      $region54: #{tsnet_forward.1} parent=51 // pred_check_branch
        %3992 = sbr.rel (%p3990) target = $region56
      $region55: #{tsnet_forward.1} parent=51 // pred_region
        _
      $region56: #{tsnet_forward.1} parent=51 // pred_fallthru
        _
    $region52: #{tsnet_forward.1} parent=5 // pred_fallthru
      _
    %p3993 = scmp.le.s32.totalorder 2, %s14
    // Predicated region
    $region57: #{tsnet_forward.1} parent=5 // pred_check
      %p3994 = pneg %p3993
    $region58: #{tsnet_forward.1} parent=5 // pred_check_branch
      %3996 = sbr.rel (%p3994) target = $region60
    $region59: #{tsnet_forward.1} parent=5 // pred_region
      %s3997 = ssub.s32 %s14, 2
      // Predicated region
      $region61: #{tsnet_forward.1} parent=59 // pred_check
        %p3998 = pneg %p221
      $region62: #{tsnet_forward.1} parent=59 // pred_check_branch
        %4000 = sbr.rel (%p3998) target = $region64
      $region63: #{tsnet_forward.1} parent=59 // pred_region
        %p4001 = scmp.lt.s32.totalorder %s20, 1
        %s4002 = scalar_select %p4001, %s20, 1
        %s4003 = smul.addr %s4002, 4
        %s4004 = smul.addr %s4003, 8
        %s4005 = scalar_lea.vmem %s8, %s4004
      $region64: #{tsnet_forward.1} parent=59 // pred_fallthru
        _
    $region60: #{tsnet_forward.1} parent=5 // pred_fallthru
      _
  $region6: #{tsnet_forward.1} parent=0 // loop_footer
    %s18 = sadd.s32 1, %s14
  $region7: #{tsnet_forward.1} parent=0 // loop_footer_branch
    %13 = sbr.rel target = $region3
  $region8: #{tsnet_forward.1} parent=0 // loop_exit
    _

</llo_original>
